<compile_context>
chip_gen: v7x
topology: tpu7x:2x2x1
jax: 0.10.0
libtpu: 0.0.40
codegen_flags: <defaults>
</compile_context>

<pallas_src>
import jax
import jax.numpy as jnp
from jax import lax
from jax.experimental import pallas as pl
from jax.experimental.pallas import tpu as pltpu


def _round_up(x, m):
    return (x + m - 1) // m * m


# ----------------------------------------------------------------------------- kernel
def make_runcsp_kernel(rel_meta, steps, hidden_dim, out_dim, num_vars):
    """rel_meta: list of (is_symmetric, padded_edge_count) per relation."""
    H = hidden_dim
    N = num_vars
    eps = 1e-5
    f32 = jnp.float32
    bf16 = jnp.bfloat16

    def kernel(*refs):
        it = iter(refs)
        h0_ref = next(it)
        vr_ref = next(it)

        rel_refs = []
        for _sym, _ep in rel_meta:
            rel_refs.append(tuple(next(it) for _ in range(4)))

        bn_g = next(it)[...]          # (1, H)      f32
        bn_b = next(it)[...]          # (1, H)      f32
        wih_t = next(it)[...]         # (H, 4H)     f32
        whh_t = next(it)[...]         # (H, 4H)     f32
        b_gate = next(it)[...]        # (1, 4H)     f32  (b_ih + b_hh)
        w_soft_t = next(it)[...]      # (H, out)    f32
        y_out = next(it)

        # ---- loop-invariant values: load once, broadcast once (hoisted) ----
        var_reg_full = jnp.broadcast_to(vr_ref[...], (N, H))        # (N, H)  f32
        b_gate_full = jnp.broadcast_to(b_gate, (N, 4 * H))          # (N, 4H) f32
        rel_vals = [tuple(x[...] for x in r) for r in rel_refs]

        def step(carry):
            h, c = carry
            hb = h.astype(bf16)

            # ---- message passing: gather -> linear -> scatter as wide bf16 matmuls
            rec = jnp.zeros((N, H), f32)
            for (sym, ep), vals in zip(rel_meta, rel_vals):
                if sym:
                    # Symmetric_Message_Network, W: (H, 2H)
                    gcat, srev_t, wt_a, wt_b = vals   # (2E,N) (N,2E) (H,H) (H,H)
                    x = jnp.dot(gcat, hb,
                                preferred_element_type=f32)          # [h[e0]; h[e1]]  (2E,H)
                    xswap = jnp.concatenate([x[ep:], x[:ep]], axis=0)  # [h[e1]; h[e0]]
                    z = (jnp.dot(x.astype(bf16), wt_a, preferred_element_type=f32)
                         + jnp.dot(xswap.astype(bf16), wt_b,
                                   preferred_element_type=f32))      # (2E,H)
                    rec = rec + jnp.dot(srev_t, z.astype(bf16),
                                        preferred_element_type=f32)
                else:
                    # Message_Network, W: (2H, 2H)
                    gcat, gcat_t, wt_lo, wt_hi = vals
                    x = jnp.dot(gcat, hb, preferred_element_type=f32)        # (2E,H)
                    xcat = jnp.concatenate([x[:ep], x[ep:]],
                                           axis=1).astype(bf16)              # (E,2H)
                    z_lo = jnp.dot(xcat, wt_lo, preferred_element_type=f32)  # -> e0
                    z_hi = jnp.dot(xcat, wt_hi, preferred_element_type=f32)  # -> e1
                    z = jnp.concatenate([z_lo, z_hi], axis=0).astype(bf16)   # (2E,H)
                    rec = rec + jnp.dot(gcat_t, z, preferred_element_type=f32)

            rec = rec * var_reg_full

            # ---- BatchNorm1d (training-mode batch stats), folded scale/shift ----
            mean = jnp.mean(rec, axis=0, keepdims=True)
            var = jnp.mean((rec - mean) ** 2, axis=0, keepdims=True)
            scale = bn_g * lax.rsqrt(var + eps)                      # rsqrt -> EUP
            rec = rec * scale + (bn_b - mean * scale)

            # ---- LSTMCell: 4 gates fused into one lane-dense (N, 4H) matmul ----
            gates = (jnp.dot(rec, wih_t, preferred_element_type=f32)
                     + jnp.dot(h, whh_t, preferred_element_type=f32)
                     + b_gate_full)
            i_g = jax.nn.sigmoid(gates[:, 0 * H:1 * H])
            f_g = jax.nn.sigmoid(gates[:, 1 * H:2 * H])
            g_g = jnp.tanh(gates[:, 2 * H:3 * H])
            o_g = jax.nn.sigmoid(gates[:, 3 * H:4 * H])
            c_new = f_g * c + i_g * g_g
            h_new = o_g * jnp.tanh(c_new)
            return (h_new, c_new)

        h0 = h0_ref[...]
        c0 = jnp.zeros_like(h0)
        if steps <= 8:
            # Full trace-time unroll: LLO scheduler sees the whole recurrence.
            carry = (h0, c0)
            for _ in range(steps):
                carry = step(carry)
            h_fin = carry[0]
        else:
            h_fin, _ = lax.fori_loop(0, steps, lambda _, ca: step(ca), (h0, c0))

        # ---- soft-assignment head (only the final step's y is ever used) ----
        logits = jnp.dot(h_fin, w_soft_t, preferred_element_type=f32)
        if out_dim == 1:
            y = jax.nn.sigmoid(logits)
        else:
            y = jax.nn.softmax(logits, axis=1)
        y_out[...] = y

    return kernel


# ----------------------------------------------------------------------------- wrapper
def runcsp_forward(params, edges, rel_syms, var_reg, steps, key, hidden_dim, out_dim):
    rel_names = list(edges.keys())
    num_vars = var_reg.shape[0]
    H = hidden_dim
    f32 = jnp.float32
    bf16 = jnp.bfloat16

    # ---- glue: padded one-hot gather/scatter matrices (bf16, exact) + pre-transposed weights
    rel_meta = []
    rel_inputs = []
    for name in rel_names:
        e = edges[name]
        E = e.shape[1]
        Ep = _round_up(E, 16)                      # pad edges -> aligned sublane slices
        g0 = jnp.pad(jax.nn.one_hot(e[0], num_vars, dtype=f32), ((0, Ep - E), (0, 0)))
        g1 = jnp.pad(jax.nn.one_hot(e[1], num_vars, dtype=f32), ((0, Ep - E), (0, 0)))
        gcat = jnp.concatenate([g0, g1], axis=0)   # (2Ep, N): gathers [h[e0]; h[e1]]
        W = params["msg"][name]
        wt = W.T                                   # feature/output axis last
        if rel_syms[name]:                         # Symmetric_Message_Network, W: (H, 2H)
            srev_t = jnp.concatenate([g1, g0], axis=0).T    # (N, 2Ep): scatter to [e1; e0]
            rel_inputs += [gcat.astype(bf16), srev_t.astype(bf16),
                           wt[:H].astype(bf16), wt[H:].astype(bf16)]   # (H,H) each
            rel_meta.append((True, Ep))
        else:                                      # Message_Network, W: (2H, 2H)
            rel_inputs += [gcat.astype(bf16), gcat.T.astype(bf16),
                           wt[:, :H].astype(bf16), wt[:, H:].astype(bf16)]
            rel_meta.append((False, Ep))

    wih_t = params["w_ih"].T                                 # (H, 4H)
    whh_t = params["w_hh"].T                                 # (H, 4H)
    b_gate = (params["b_ih"] + params["b_hh"])[None, :]      # (1, 4H)
    w_soft_t = params["w_soft"].T                            # (H, out_dim)

    fixed = ([var_reg] + rel_inputs
             + [params["bn_gamma"][None, :], params["bn_beta"][None, :],
                wih_t, whh_t, b_gate, w_soft_t])

    kernel = make_runcsp_kernel(rel_meta, steps, H, out_dim, num_vars)
    vmem = pl.BlockSpec(memory_space=pltpu.MemorySpace.VMEM)
    run = pl.pallas_call(
        kernel,
        out_shape=jax.ShapeDtypeStruct((num_vars, out_dim), jnp.float32),
        in_specs=[vmem] * (1 + len(fixed)),
        out_specs=vmem,
        compiler_params=pltpu.CompilerParams(vmem_limit_bytes=32 * 1024 * 1024),
    )

    h0 = jax.random.normal(key, (num_vars, H), dtype=f32)
    y = run(h0, *fixed)
    # TODO(synk): csp_data.count_unsat(...) early stopping is constraint-language specific
    # (host-side CSP evaluation); we always run the full `steps` iterations.

    assignments = y[:, None, :]                              # (N, 1, out_dim)
    if out_dim == 1:
        assignments = jnp.concatenate([1.0 - assignments, assignments], axis=2)
    return assignments


# ----------------------------------------------------------------------------- reference (pure JAX)
def runcsp_reference(params, edges, rel_syms, var_reg, steps, key, hidden_dim, out_dim):
    num_vars = var_reg.shape[0]
    H = hidden_dim
    hi = jax.lax.Precision.HIGHEST
    h = jax.random.normal(key, (num_vars, H), dtype=jnp.float32)
    c = jnp.zeros((num_vars, H), jnp.float32)
    y = None
    for _ in range(steps):
        rec = jnp.zeros((num_vars, H), jnp.float32)
        for name, e in edges.items():
            W = params["msg"][name]
            if rel_syms[name]:
                e_all = jnp.concatenate([e, jnp.stack([e[1], e[0]])], axis=1)
                xcat = jnp.concatenate([h[e_all[0]], h[e_all[1]]], axis=1)
                z = jnp.dot(xcat, W.T, precision=hi)
                rec = rec + jax.ops.segment_sum(z, e_all[1], num_segments=num_vars)
            else:
                xcat = jnp.concatenate([h[e[0]], h[e[1]]], axis=1)
                z = jnp.dot(xcat, W.T, precision=hi)
                rec = rec + jax.ops.segment_sum(z[:, :H], e[0], num_segments=num_vars)
                rec = rec + jax.ops.segment_sum(z[:, H:], e[1], num_segments=num_vars)
        rec = rec * var_reg
        mean = rec.mean(0, keepdims=True)
        var = ((rec - mean) ** 2).mean(0, keepdims=True)
        rec = (rec - mean) / jnp.sqrt(var + 1e-5) * params["bn_gamma"] + params["bn_beta"]
        gates = (jnp.dot(rec, params["w_ih"].T, precision=hi) + params["b_ih"]
                 + jnp.dot(h, params["w_hh"].T, precision=hi) + params["b_hh"])
        i = jax.nn.sigmoid(gates[:, :H])
        f = jax.nn.sigmoid(gates[:, H:2 * H])
        g = jnp.tanh(gates[:, 2 * H:3 * H])
        o = jax.nn.sigmoid(gates[:, 3 * H:])
        c = f * c + i * g
        h = o * jnp.tanh(c)
        logits = jnp.dot(h, params["w_soft"].T, precision=hi)
        y = jax.nn.sigmoid(logits) if out_dim == 1 else jax.nn.softmax(logits, axis=1)
    a = y[:, None, :]
    if out_dim == 1:
        a = jnp.concatenate([1.0 - a, a], axis=2)
    return a


# ----------------------------------------------------------------------------- main
if __name__ == "__main__":
    key = jax.random.PRNGKey(0)
    k_edges0, k_edges1, k_h, *k_params = jax.random.split(key, 12)

    num_vars = 16
    hidden_dim = 32
    domain_size = 2                      # const_lang.domain_size
    out_dim = domain_size if domain_size > 2 else 1
    steps = 4
    H = hidden_dim

    # constraint language: one symmetric relation ("NEQ"), one non-symmetric ("LEQ")
    rel_syms = {"NEQ": True, "LEQ": False}
    e_neq = jax.random.randint(k_edges0, (2, 24), 0, num_vars, dtype=jnp.int32)
    e_leq = jax.random.randint(k_edges1, (2, 20), 0, num_vars, dtype=jnp.int32)
    edges = {"NEQ": e_neq, "LEQ": e_leq}

    # var_reg = 1 / degree (typical RUN-CSP regularizer), shape (num_vars, 1)
    all_endpoints = jnp.concatenate([e_neq.reshape(-1), e_leq.reshape(-1)])
    deg = jax.ops.segment_sum(jnp.ones_like(all_endpoints, dtype=jnp.float32),
                              all_endpoints, num_segments=num_vars)
    var_reg = (1.0 / jnp.maximum(deg, 1.0))[:, None]

    # deterministic synthetic parameters (shapes per RUNCSP.__init__)
    params = {
        "msg": {
            "NEQ": 0.15 * jax.random.normal(k_params[0], (H, 2 * H), jnp.float32),      # Symmetric_Message_Network
            "LEQ": 0.15 * jax.random.normal(k_params[1], (2 * H, 2 * H), jnp.float32),  # Message_Network
        },
        "bn_gamma": jnp.ones((H,), jnp.float32),      # BatchNorm1d default weight
        "bn_beta": jnp.zeros((H,), jnp.float32),      # BatchNorm1d default bias
        "w_ih": 0.15 * jax.random.normal(k_params[2], (4 * H, H), jnp.float32),
        "w_hh": 0.15 * jax.random.normal(k_params[3], (4 * H, H), jnp.float32),
        "b_ih": 0.1 * jax.random.normal(k_params[4], (4 * H,), jnp.float32),
        "b_hh": 0.1 * jax.random.normal(k_params[5], (4 * H,), jnp.float32),
        "w_soft": 0.2 * jax.random.normal(k_params[6], (out_dim, H), jnp.float32),
    }

    out = runcsp_forward(params, edges, rel_syms, var_reg, steps, k_h, hidden_dim, out_dim)
    out = jax.block_until_ready(out)

    ref = runcsp_reference(params, edges, rel_syms, var_reg, steps, k_h, hidden_dim, out_dim)
    ref = jax.block_until_ready(ref)

    assert out.shape == (num_vars, 1, 2), out.shape
    assert bool(jnp.all(jnp.isfinite(out)))
    # bf16 message-path matmuls (f32 accumulation) vs HIGHEST-precision f32 reference
    # over `steps` recurrent iterations -> 2e-2 tolerance on the output probabilities.
    assert bool(jnp.allclose(out, ref, rtol=2e-2, atol=2e-2)), (
        f"max abs diff {float(jnp.max(jnp.abs(out - ref)))}")

    print("KERNEL_OK")
</pallas_src>

<mosaic_0001>
module attributes {stable_mosaic.version = 11 : i64} {
  func.func @kernel(%arg0: memref<16x32xf32, #tpu.memory_space<vmem>>, %arg1: memref<16x1xf32, #tpu.memory_space<vmem>>, %arg2: memref<64x16xbf16, #tpu.memory_space<vmem>>, %arg3: memref<16x64xbf16, #tpu.memory_space<vmem>>, %arg4: memref<32x32xbf16, #tpu.memory_space<vmem>>, %arg5: memref<32x32xbf16, #tpu.memory_space<vmem>>, %arg6: memref<64x16xbf16, #tpu.memory_space<vmem>>, %arg7: memref<16x64xbf16, #tpu.memory_space<vmem>>, %arg8: memref<64x32xbf16, #tpu.memory_space<vmem>>, %arg9: memref<64x32xbf16, #tpu.memory_space<vmem>>, %arg10: memref<1x32xf32, #tpu.memory_space<vmem>>, %arg11: memref<1x32xf32, #tpu.memory_space<vmem>>, %arg12: memref<32x128xf32, #tpu.memory_space<vmem>>, %arg13: memref<32x128xf32, #tpu.memory_space<vmem>>, %arg14: memref<1x128xf32, #tpu.memory_space<vmem>>, %arg15: memref<32x1xf32, #tpu.memory_space<vmem>>, %arg16: memref<16x1xf32, #tpu.memory_space<vmem>>) attributes {dimension_semantics = [], scalar_prefetch = 0 : i64, scratch_operands = 0 : i64, tpu.core_type = #tpu.core_type<tc>} {
    %c0 = arith.constant 0 : index
    %c0_0 = arith.constant 0 : index
    %0 = vector.load %arg10[%c0, %c0_0] : memref<1x32xf32, #tpu.memory_space<vmem>>, vector<1x32xf32>
    %c0_1 = arith.constant 0 : index
    %c0_2 = arith.constant 0 : index
    %1 = vector.load %arg11[%c0_1, %c0_2] : memref<1x32xf32, #tpu.memory_space<vmem>>, vector<1x32xf32>
    %c0_3 = arith.constant 0 : index
    %c0_4 = arith.constant 0 : index
    %2 = vector.load %arg12[%c0_3, %c0_4] : memref<32x128xf32, #tpu.memory_space<vmem>>, vector<32x128xf32>
    %c0_5 = arith.constant 0 : index
    %c0_6 = arith.constant 0 : index
    %3 = vector.load %arg13[%c0_5, %c0_6] : memref<32x128xf32, #tpu.memory_space<vmem>>, vector<32x128xf32>
    %c0_7 = arith.constant 0 : index
    %c0_8 = arith.constant 0 : index
    %4 = vector.load %arg14[%c0_7, %c0_8] : memref<1x128xf32, #tpu.memory_space<vmem>>, vector<1x128xf32>
    %c0_9 = arith.constant 0 : index
    %c0_10 = arith.constant 0 : index
    %5 = vector.load %arg15[%c0_9, %c0_10] : memref<32x1xf32, #tpu.memory_space<vmem>>, vector<32x1xf32>
    %c0_11 = arith.constant 0 : index
    %c0_12 = arith.constant 0 : index
    %6 = vector.load %arg1[%c0_11, %c0_12] : memref<16x1xf32, #tpu.memory_space<vmem>>, vector<16x1xf32>
    %7 = vector.shape_cast %6 : vector<16x1xf32> to vector<16x1xf32>
    %8 = vector.broadcast %7 : vector<16x1xf32> to vector<16x32xf32>
    %9 = vector.shape_cast %4 : vector<1x128xf32> to vector<1x128xf32>
    %10 = vector.broadcast %9 : vector<1x128xf32> to vector<16x128xf32>
    %c0_13 = arith.constant 0 : index
    %c0_14 = arith.constant 0 : index
    %11 = vector.load %arg2[%c0_13, %c0_14] : memref<64x16xbf16, #tpu.memory_space<vmem>>, vector<64x16xbf16>
    %c0_15 = arith.constant 0 : index
    %c0_16 = arith.constant 0 : index
    %12 = vector.load %arg3[%c0_15, %c0_16] : memref<16x64xbf16, #tpu.memory_space<vmem>>, vector<16x64xbf16>
    %c0_17 = arith.constant 0 : index
    %c0_18 = arith.constant 0 : index
    %13 = vector.load %arg4[%c0_17, %c0_18] : memref<32x32xbf16, #tpu.memory_space<vmem>>, vector<32x32xbf16>
    %c0_19 = arith.constant 0 : index
    %c0_20 = arith.constant 0 : index
    %14 = vector.load %arg5[%c0_19, %c0_20] : memref<32x32xbf16, #tpu.memory_space<vmem>>, vector<32x32xbf16>
    %c0_21 = arith.constant 0 : index
    %c0_22 = arith.constant 0 : index
    %15 = vector.load %arg6[%c0_21, %c0_22] : memref<64x16xbf16, #tpu.memory_space<vmem>>, vector<64x16xbf16>
    %c0_23 = arith.constant 0 : index
    %c0_24 = arith.constant 0 : index
    %16 = vector.load %arg7[%c0_23, %c0_24] : memref<16x64xbf16, #tpu.memory_space<vmem>>, vector<16x64xbf16>
    %c0_25 = arith.constant 0 : index
    %c0_26 = arith.constant 0 : index
    %17 = vector.load %arg8[%c0_25, %c0_26] : memref<64x32xbf16, #tpu.memory_space<vmem>>, vector<64x32xbf16>
    %c0_27 = arith.constant 0 : index
    %c0_28 = arith.constant 0 : index
    %18 = vector.load %arg9[%c0_27, %c0_28] : memref<64x32xbf16, #tpu.memory_space<vmem>>, vector<64x32xbf16>
    %c0_29 = arith.constant 0 : index
    %c0_30 = arith.constant 0 : index
    %19 = vector.load %arg0[%c0_29, %c0_30] : memref<16x32xf32, #tpu.memory_space<vmem>>, vector<16x32xf32>
    %cst = arith.constant 0.000000e+00 : f32
    %20 = vector.broadcast %cst : f32 to vector<16x32xf32>
    %21 = arith.truncf %19 : vector<16x32xf32> to vector<16x32xbf16>
    %cst_31 = arith.constant 0.000000e+00 : f32
    %22 = vector.broadcast %cst_31 : f32 to vector<16x32xf32>
    %cst_32 = arith.constant dense<0.000000e+00> : vector<64x32xf32>
    %23 = tpu.matmul %11, %21, %cst_32 {dimension_numbers = #tpu.dot_dimension_numbers<[1], [0], [0], [1], [0, 0, 1, 1], [], []>} : vector<64x16xbf16>, vector<16x32xbf16>, vector<64x32xf32> -> vector<64x32xf32>
    %24 = vector.extract_strided_slice %23 {offsets = [32, 0], sizes = [32, 32], strides = [1, 1]} : vector<64x32xf32> to vector<32x32xf32>
    %25 = vector.extract_strided_slice %23 {offsets = [0, 0], sizes = [32, 32], strides = [1, 1]} : vector<64x32xf32> to vector<32x32xf32>
    %26 = tpu.concatenate %24, %25 in 0 : vector<32x32xf32>, vector<32x32xf32> -> vector<64x32xf32>
    %27 = arith.truncf %23 : vector<64x32xf32> to vector<64x32xbf16>
    %cst_33 = arith.constant dense<0.000000e+00> : vector<64x32xf32>
    %28 = tpu.matmul %27, %13, %cst_33 {dimension_numbers = #tpu.dot_dimension_numbers<[1], [0], [0], [1], [0, 0, 1, 1], [], []>} : vector<64x32xbf16>, vector<32x32xbf16>, vector<64x32xf32> -> vector<64x32xf32>
    %29 = arith.truncf %26 : vector<64x32xf32> to vector<64x32xbf16>
    %cst_34 = arith.constant dense<0.000000e+00> : vector<64x32xf32>
    %30 = tpu.matmul %29, %14, %cst_34 {dimension_numbers = #tpu.dot_dimension_numbers<[1], [0], [0], [1], [0, 0, 1, 1], [], []>} : vector<64x32xbf16>, vector<32x32xbf16>, vector<64x32xf32> -> vector<64x32xf32>
    %31 = arith.addf %28, %30 : vector<64x32xf32>
    %32 = arith.truncf %31 : vector<64x32xf32> to vector<64x32xbf16>
    %cst_35 = arith.constant dense<0.000000e+00> : vector<16x32xf32>
    %33 = tpu.matmul %12, %32, %cst_35 {dimension_numbers = #tpu.dot_dimension_numbers<[1], [0], [0], [1], [0, 0, 1, 1], [], []>} : vector<16x64xbf16>, vector<64x32xbf16>, vector<16x32xf32> -> vector<16x32xf32>
    %34 = arith.addf %22, %33 : vector<16x32xf32>
    %cst_36 = arith.constant dense<0.000000e+00> : vector<64x32xf32>
    %35 = tpu.matmul %15, %21, %cst_36 {dimension_numbers = #tpu.dot_dimension_numbers<[1], [0], [0], [1], [0, 0, 1, 1], [], []>} : vector<64x16xbf16>, vector<16x32xbf16>, vector<64x32xf32> -> vector<64x32xf32>
    %36 = vector.extract_strided_slice %35 {offsets = [0, 0], sizes = [32, 32], strides = [1, 1]} : vector<64x32xf32> to vector<32x32xf32>
    %37 = vector.extract_strided_slice %35 {offsets = [32, 0], sizes = [32, 32], strides = [1, 1]} : vector<64x32xf32> to vector<32x32xf32>
    %38 = tpu.concatenate %36, %37 in 1 : vector<32x32xf32>, vector<32x32xf32> -> vector<32x64xf32>
    %39 = arith.truncf %38 : vector<32x64xf32> to vector<32x64xbf16>
    %cst_37 = arith.constant dense<0.000000e+00> : vector<32x32xf32>
    %40 = tpu.matmul %39, %17, %cst_37 {dimension_numbers = #tpu.dot_dimension_numbers<[1], [0], [0], [1], [0, 0, 1, 1], [], []>} : vector<32x64xbf16>, vector<64x32xbf16>, vector<32x32xf32> -> vector<32x32xf32>
    %cst_38 = arith.constant dense<0.000000e+00> : vector<32x32xf32>
    %41 = tpu.matmul %39, %18, %cst_38 {dimension_numbers = #tpu.dot_dimension_numbers<[1], [0], [0], [1], [0, 0, 1, 1], [], []>} : vector<32x64xbf16>, vector<64x32xbf16>, vector<32x32xf32> -> vector<32x32xf32>
    %42 = tpu.concatenate %40, %41 in 0 : vector<32x32xf32>, vector<32x32xf32> -> vector<64x32xf32>
    %43 = arith.truncf %42 : vector<64x32xf32> to vector<64x32xbf16>
    %cst_39 = arith.constant dense<0.000000e+00> : vector<16x32xf32>
    %44 = tpu.matmul %16, %43, %cst_39 {dimension_numbers = #tpu.dot_dimension_numbers<[1], [0], [0], [1], [0, 0, 1, 1], [], []>} : vector<16x64xbf16>, vector<64x32xbf16>, vector<16x32xf32> -> vector<16x32xf32>
    %45 = arith.addf %34, %44 : vector<16x32xf32>
    %46 = arith.mulf %45, %8 : vector<16x32xf32>
    %cst_40 = arith.constant dense<0.000000e+00> : vector<32xf32>
    %47 = vector.multi_reduction <add>, %46, %cst_40 [0] : vector<16x32xf32> to vector<32xf32>
    %48 = vector.shape_cast %47 : vector<32xf32> to vector<1x32xf32>
    %cst_41 = arith.constant 1.600000e+01 : f32
    %49 = vector.broadcast %cst_41 : f32 to vector<1x32xf32>
    %50 = arith.divf %48, %49 : vector<1x32xf32>
    %51 = vector.broadcast %50 : vector<1x32xf32> to vector<16x32xf32>
    %52 = arith.subf %46, %51 : vector<16x32xf32>
    %53 = arith.mulf %52, %52 : vector<16x32xf32>
    %cst_42 = arith.constant dense<0.000000e+00> : vector<32xf32>
    %54 = vector.multi_reduction <add>, %53, %cst_42 [0] : vector<16x32xf32> to vector<32xf32>
    %55 = vector.shape_cast %54 : vector<32xf32> to vector<1x32xf32>
    %cst_43 = arith.constant 1.600000e+01 : f32
    %56 = vector.broadcast %cst_43 : f32 to vector<1x32xf32>
    %57 = arith.divf %55, %56 : vector<1x32xf32>
    %cst_44 = arith.constant 9.99999974E-6 : f32
    %58 = vector.broadcast %cst_44 : f32 to vector<1x32xf32>
    %59 = arith.addf %57, %58 : vector<1x32xf32>
    %60 = math.rsqrt %59 : vector<1x32xf32>
    %61 = arith.mulf %0, %60 : vector<1x32xf32>
    %62 = vector.broadcast %61 : vector<1x32xf32> to vector<16x32xf32>
    %63 = arith.mulf %46, %62 : vector<16x32xf32>
    %64 = arith.mulf %50, %61 : vector<1x32xf32>
    %65 = arith.subf %1, %64 : vector<1x32xf32>
    %66 = vector.broadcast %65 : vector<1x32xf32> to vector<16x32xf32>
    %67 = arith.addf %63, %66 : vector<16x32xf32>
    %cst_45 = arith.constant dense<0.000000e+00> : vector<16x128xf32>
    %68 = tpu.matmul %67, %2, %cst_45 {dimension_numbers = #tpu.dot_dimension_numbers<[1], [0], [0], [1], [0, 0, 1, 1], [], []>} : vector<16x32xf32>, vector<32x128xf32>, vector<16x128xf32> -> vector<16x128xf32>
    %cst_46 = arith.constant dense<0.000000e+00> : vector<16x128xf32>
    %69 = tpu.matmul %19, %3, %cst_46 {dimension_numbers = #tpu.dot_dimension_numbers<[1], [0], [0], [1], [0, 0, 1, 1], [], []>} : vector<16x32xf32>, vector<32x128xf32>, vector<16x128xf32> -> vector<16x128xf32>
    %70 = arith.addf %68, %69 : vector<16x128xf32>
    %71 = arith.addf %70, %10 : vector<16x128xf32>
    %72 = vector.extract_strided_slice %71 {offsets = [0, 0], sizes = [16, 32], strides = [1, 1]} : vector<16x128xf32> to vector<16x32xf32>
    %73 = arith.negf %72 : vector<16x32xf32>
    %74 = math.exp %73 : vector<16x32xf32>
    %cst_47 = arith.constant 1.000000e+00 : f32
    %75 = vector.broadcast %cst_47 : f32 to vector<16x32xf32>
    %76 = arith.addf %75, %74 : vector<16x32xf32>
    %77 = arith.divf %75, %76 : vector<16x32xf32>
    %78 = vector.extract_strided_slice %71 {offsets = [0, 32], sizes = [16, 32], strides = [1, 1]} : vector<16x128xf32> to vector<16x32xf32>
    %79 = arith.negf %78 : vector<16x32xf32>
    %80 = math.exp %79 : vector<16x32xf32>
    %cst_48 = arith.constant 1.000000e+00 : f32
    %81 = vector.broadcast %cst_48 : f32 to vector<16x32xf32>
    %82 = arith.addf %81, %80 : vector<16x32xf32>
    %83 = arith.divf %81, %82 : vector<16x32xf32>
    %84 = vector.extract_strided_slice %71 {offsets = [0, 64], sizes = [16, 32], strides = [1, 1]} : vector<16x128xf32> to vector<16x32xf32>
    %85 = math.tanh %84 : vector<16x32xf32>
    %86 = vector.extract_strided_slice %71 {offsets = [0, 96], sizes = [16, 32], strides = [1, 1]} : vector<16x128xf32> to vector<16x32xf32>
    %87 = arith.negf %86 : vector<16x32xf32>
    %88 = math.exp %87 : vector<16x32xf32>
    %cst_49 = arith.constant 1.000000e+00 : f32
    %89 = vector.broadcast %cst_49 : f32 to vector<16x32xf32>
    %90 = arith.addf %89, %88 : vector<16x32xf32>
    %91 = arith.divf %89, %90 : vector<16x32xf32>
    %92 = arith.mulf %83, %20 : vector<16x32xf32>
    %93 = arith.mulf %77, %85 : vector<16x32xf32>
    %94 = arith.addf %92, %93 : vector<16x32xf32>
    %95 = math.tanh %94 : vector<16x32xf32>
    %96 = arith.mulf %91, %95 : vector<16x32xf32>
    %97 = arith.truncf %96 : vector<16x32xf32> to vector<16x32xbf16>
    %cst_50 = arith.constant 0.000000e+00 : f32
    %98 = vector.broadcast %cst_50 : f32 to vector<16x32xf32>
    %cst_51 = arith.constant dense<0.000000e+00> : vector<64x32xf32>
    %99 = tpu.matmul %11, %97, %cst_51 {dimension_numbers = #tpu.dot_dimension_numbers<[1], [0], [0], [1], [0, 0, 1, 1], [], []>} : vector<64x16xbf16>, vector<16x32xbf16>, vector<64x32xf32> -> vector<64x32xf32>
    %100 = vector.extract_strided_slice %99 {offsets = [32, 0], sizes = [32, 32], strides = [1, 1]} : vector<64x32xf32> to vector<32x32xf32>
    %101 = vector.extract_strided_slice %99 {offsets = [0, 0], sizes = [32, 32], strides = [1, 1]} : vector<64x32xf32> to vector<32x32xf32>
    %102 = tpu.concatenate %100, %101 in 0 : vector<32x32xf32>, vector<32x32xf32> -> vector<64x32xf32>
    %103 = arith.truncf %99 : vector<64x32xf32> to vector<64x32xbf16>
    %cst_52 = arith.constant dense<0.000000e+00> : vector<64x32xf32>
    %104 = tpu.matmul %103, %13, %cst_52 {dimension_numbers = #tpu.dot_dimension_numbers<[1], [0], [0], [1], [0, 0, 1, 1], [], []>} : vector<64x32xbf16>, vector<32x32xbf16>, vector<64x32xf32> -> vector<64x32xf32>
    %105 = arith.truncf %102 : vector<64x32xf32> to vector<64x32xbf16>
    %cst_53 = arith.constant dense<0.000000e+00> : vector<64x32xf32>
    %106 = tpu.matmul %105, %14, %cst_53 {dimension_numbers = #tpu.dot_dimension_numbers<[1], [0], [0], [1], [0, 0, 1, 1], [], []>} : vector<64x32xbf16>, vector<32x32xbf16>, vector<64x32xf32> -> vector<64x32xf32>
    %107 = arith.addf %104, %106 : vector<64x32xf32>
    %108 = arith.truncf %107 : vector<64x32xf32> to vector<64x32xbf16>
    %cst_54 = arith.constant dense<0.000000e+00> : vector<16x32xf32>
    %109 = tpu.matmul %12, %108, %cst_54 {dimension_numbers = #tpu.dot_dimension_numbers<[1], [0], [0], [1], [0, 0, 1, 1], [], []>} : vector<16x64xbf16>, vector<64x32xbf16>, vector<16x32xf32> -> vector<16x32xf32>
    %110 = arith.addf %98, %109 : vector<16x32xf32>
    %cst_55 = arith.constant dense<0.000000e+00> : vector<64x32xf32>
    %111 = tpu.matmul %15, %97, %cst_55 {dimension_numbers = #tpu.dot_dimension_numbers<[1], [0], [0], [1], [0, 0, 1, 1], [], []>} : vector<64x16xbf16>, vector<16x32xbf16>, vector<64x32xf32> -> vector<64x32xf32>
    %112 = vector.extract_strided_slice %111 {offsets = [0, 0], sizes = [32, 32], strides = [1, 1]} : vector<64x32xf32> to vector<32x32xf32>
    %113 = vector.extract_strided_slice %111 {offsets = [32, 0], sizes = [32, 32], strides = [1, 1]} : vector<64x32xf32> to vector<32x32xf32>
    %114 = tpu.concatenate %112, %113 in 1 : vector<32x32xf32>, vector<32x32xf32> -> vector<32x64xf32>
    %115 = arith.truncf %114 : vector<32x64xf32> to vector<32x64xbf16>
    %cst_56 = arith.constant dense<0.000000e+00> : vector<32x32xf32>
    %116 = tpu.matmul %115, %17, %cst_56 {dimension_numbers = #tpu.dot_dimension_numbers<[1], [0], [0], [1], [0, 0, 1, 1], [], []>} : vector<32x64xbf16>, vector<64x32xbf16>, vector<32x32xf32> -> vector<32x32xf32>
    %cst_57 = arith.constant dense<0.000000e+00> : vector<32x32xf32>
    %117 = tpu.matmul %115, %18, %cst_57 {dimension_numbers = #tpu.dot_dimension_numbers<[1], [0], [0], [1], [0, 0, 1, 1], [], []>} : vector<32x64xbf16>, vector<64x32xbf16>, vector<32x32xf32> -> vector<32x32xf32>
    %118 = tpu.concatenate %116, %117 in 0 : vector<32x32xf32>, vector<32x32xf32> -> vector<64x32xf32>
    %119 = arith.truncf %118 : vector<64x32xf32> to vector<64x32xbf16>
    %cst_58 = arith.constant dense<0.000000e+00> : vector<16x32xf32>
    %120 = tpu.matmul %16, %119, %cst_58 {dimension_numbers = #tpu.dot_dimension_numbers<[1], [0], [0], [1], [0, 0, 1, 1], [], []>} : vector<16x64xbf16>, vector<64x32xbf16>, vector<16x32xf32> -> vector<16x32xf32>
    %121 = arith.addf %110, %120 : vector<16x32xf32>
    %122 = arith.mulf %121, %8 : vector<16x32xf32>
    %cst_59 = arith.constant dense<0.000000e+00> : vector<32xf32>
    %123 = vector.multi_reduction <add>, %122, %cst_59 [0] : vector<16x32xf32> to vector<32xf32>
    %124 = vector.shape_cast %123 : vector<32xf32> to vector<1x32xf32>
    %cst_60 = arith.constant 1.600000e+01 : f32
    %125 = vector.broadcast %cst_60 : f32 to vector<1x32xf32>
    %126 = arith.divf %124, %125 : vector<1x32xf32>
    %127 = vector.broadcast %126 : vector<1x32xf32> to vector<16x32xf32>
    %128 = arith.subf %122, %127 : vector<16x32xf32>
    %129 = arith.mulf %128, %128 : vector<16x32xf32>
    %cst_61 = arith.constant dense<0.000000e+00> : vector<32xf32>
    %130 = vector.multi_reduction <add>, %129, %cst_61 [0] : vector<16x32xf32> to vector<32xf32>
    %131 = vector.shape_cast %130 : vector<32xf32> to vector<1x32xf32>
    %cst_62 = arith.constant 1.600000e+01 : f32
    %132 = vector.broadcast %cst_62 : f32 to vector<1x32xf32>
    %133 = arith.divf %131, %132 : vector<1x32xf32>
    %cst_63 = arith.constant 9.99999974E-6 : f32
    %134 = vector.broadcast %cst_63 : f32 to vector<1x32xf32>
    %135 = arith.addf %133, %134 : vector<1x32xf32>
    %136 = math.rsqrt %135 : vector<1x32xf32>
    %137 = arith.mulf %0, %136 : vector<1x32xf32>
    %138 = vector.broadcast %137 : vector<1x32xf32> to vector<16x32xf32>
    %139 = arith.mulf %122, %138 : vector<16x32xf32>
    %140 = arith.mulf %126, %137 : vector<1x32xf32>
    %141 = arith.subf %1, %140 : vector<1x32xf32>
    %142 = vector.broadcast %141 : vector<1x32xf32> to vector<16x32xf32>
    %143 = arith.addf %139, %142 : vector<16x32xf32>
    %cst_64 = arith.constant dense<0.000000e+00> : vector<16x128xf32>
    %144 = tpu.matmul %143, %2, %cst_64 {dimension_numbers = #tpu.dot_dimension_numbers<[1], [0], [0], [1], [0, 0, 1, 1], [], []>} : vector<16x32xf32>, vector<32x128xf32>, vector<16x128xf32> -> vector<16x128xf32>
    %cst_65 = arith.constant dense<0.000000e+00> : vector<16x128xf32>
    %145 = tpu.matmul %96, %3, %cst_65 {dimension_numbers = #tpu.dot_dimension_numbers<[1], [0], [0], [1], [0, 0, 1, 1], [], []>} : vector<16x32xf32>, vector<32x128xf32>, vector<16x128xf32> -> vector<16x128xf32>
    %146 = arith.addf %144, %145 : vector<16x128xf32>
    %147 = arith.addf %146, %10 : vector<16x128xf32>
    %148 = vector.extract_strided_slice %147 {offsets = [0, 0], sizes = [16, 32], strides = [1, 1]} : vector<16x128xf32> to vector<16x32xf32>
    %149 = arith.negf %148 : vector<16x32xf32>
    %150 = math.exp %149 : vector<16x32xf32>
    %cst_66 = arith.constant 1.000000e+00 : f32
    %151 = vector.broadcast %cst_66 : f32 to vector<16x32xf32>
    %152 = arith.addf %151, %150 : vector<16x32xf32>
    %153 = arith.divf %151, %152 : vector<16x32xf32>
    %154 = vector.extract_strided_slice %147 {offsets = [0, 32], sizes = [16, 32], strides = [1, 1]} : vector<16x128xf32> to vector<16x32xf32>
    %155 = arith.negf %154 : vector<16x32xf32>
    %156 = math.exp %155 : vector<16x32xf32>
    %cst_67 = arith.constant 1.000000e+00 : f32
    %157 = vector.broadcast %cst_67 : f32 to vector<16x32xf32>
    %158 = arith.addf %157, %156 : vector<16x32xf32>
    %159 = arith.divf %157, %158 : vector<16x32xf32>
    %160 = vector.extract_strided_slice %147 {offsets = [0, 64], sizes = [16, 32], strides = [1, 1]} : vector<16x128xf32> to vector<16x32xf32>
    %161 = math.tanh %160 : vector<16x32xf32>
    %162 = vector.extract_strided_slice %147 {offsets = [0, 96], sizes = [16, 32], strides = [1, 1]} : vector<16x128xf32> to vector<16x32xf32>
    %163 = arith.negf %162 : vector<16x32xf32>
    %164 = math.exp %163 : vector<16x32xf32>
    %cst_68 = arith.constant 1.000000e+00 : f32
    %165 = vector.broadcast %cst_68 : f32 to vector<16x32xf32>
    %166 = arith.addf %165, %164 : vector<16x32xf32>
    %167 = arith.divf %165, %166 : vector<16x32xf32>
    %168 = arith.mulf %159, %94 : vector<16x32xf32>
    %169 = arith.mulf %153, %161 : vector<16x32xf32>
    %170 = arith.addf %168, %169 : vector<16x32xf32>
    %171 = math.tanh %170 : vector<16x32xf32>
    %172 = arith.mulf %167, %171 : vector<16x32xf32>
    %173 = arith.truncf %172 : vector<16x32xf32> to vector<16x32xbf16>
    %cst_69 = arith.constant 0.000000e+00 : f32
    %174 = vector.broadcast %cst_69 : f32 to vector<16x32xf32>
    %cst_70 = arith.constant dense<0.000000e+00> : vector<64x32xf32>
    %175 = tpu.matmul %11, %173, %cst_70 {dimension_numbers = #tpu.dot_dimension_numbers<[1], [0], [0], [1], [0, 0, 1, 1], [], []>} : vector<64x16xbf16>, vector<16x32xbf16>, vector<64x32xf32> -> vector<64x32xf32>
    %176 = vector.extract_strided_slice %175 {offsets = [32, 0], sizes = [32, 32], strides = [1, 1]} : vector<64x32xf32> to vector<32x32xf32>
    %177 = vector.extract_strided_slice %175 {offsets = [0, 0], sizes = [32, 32], strides = [1, 1]} : vector<64x32xf32> to vector<32x32xf32>
    %178 = tpu.concatenate %176, %177 in 0 : vector<32x32xf32>, vector<32x32xf32> -> vector<64x32xf32>
    %179 = arith.truncf %175 : vector<64x32xf32> to vector<64x32xbf16>
    %cst_71 = arith.constant dense<0.000000e+00> : vector<64x32xf32>
    %180 = tpu.matmul %179, %13, %cst_71 {dimension_numbers = #tpu.dot_dimension_numbers<[1], [0], [0], [1], [0, 0, 1, 1], [], []>} : vector<64x32xbf16>, vector<32x32xbf16>, vector<64x32xf32> -> vector<64x32xf32>
    %181 = arith.truncf %178 : vector<64x32xf32> to vector<64x32xbf16>
    %cst_72 = arith.constant dense<0.000000e+00> : vector<64x32xf32>
    %182 = tpu.matmul %181, %14, %cst_72 {dimension_numbers = #tpu.dot_dimension_numbers<[1], [0], [0], [1], [0, 0, 1, 1], [], []>} : vector<64x32xbf16>, vector<32x32xbf16>, vector<64x32xf32> -> vector<64x32xf32>
    %183 = arith.addf %180, %182 : vector<64x32xf32>
    %184 = arith.truncf %183 : vector<64x32xf32> to vector<64x32xbf16>
    %cst_73 = arith.constant dense<0.000000e+00> : vector<16x32xf32>
    %185 = tpu.matmul %12, %184, %cst_73 {dimension_numbers = #tpu.dot_dimension_numbers<[1], [0], [0], [1], [0, 0, 1, 1], [], []>} : vector<16x64xbf16>, vector<64x32xbf16>, vector<16x32xf32> -> vector<16x32xf32>
    %186 = arith.addf %174, %185 : vector<16x32xf32>
    %cst_74 = arith.constant dense<0.000000e+00> : vector<64x32xf32>
    %187 = tpu.matmul %15, %173, %cst_74 {dimension_numbers = #tpu.dot_dimension_numbers<[1], [0], [0], [1], [0, 0, 1, 1], [], []>} : vector<64x16xbf16>, vector<16x32xbf16>, vector<64x32xf32> -> vector<64x32xf32>
    %188 = vector.extract_strided_slice %187 {offsets = [0, 0], sizes = [32, 32], strides = [1, 1]} : vector<64x32xf32> to vector<32x32xf32>
    %189 = vector.extract_strided_slice %187 {offsets = [32, 0], sizes = [32, 32], strides = [1, 1]} : vector<64x32xf32> to vector<32x32xf32>
    %190 = tpu.concatenate %188, %189 in 1 : vector<32x32xf32>, vector<32x32xf32> -> vector<32x64xf32>
    %191 = arith.truncf %190 : vector<32x64xf32> to vector<32x64xbf16>
    %cst_75 = arith.constant dense<0.000000e+00> : vector<32x32xf32>
    %192 = tpu.matmul %191, %17, %cst_75 {dimension_numbers = #tpu.dot_dimension_numbers<[1], [0], [0], [1], [0, 0, 1, 1], [], []>} : vector<32x64xbf16>, vector<64x32xbf16>, vector<32x32xf32> -> vector<32x32xf32>
    %cst_76 = arith.constant dense<0.000000e+00> : vector<32x32xf32>
    %193 = tpu.matmul %191, %18, %cst_76 {dimension_numbers = #tpu.dot_dimension_numbers<[1], [0], [0], [1], [0, 0, 1, 1], [], []>} : vector<32x64xbf16>, vector<64x32xbf16>, vector<32x32xf32> -> vector<32x32xf32>
    %194 = tpu.concatenate %192, %193 in 0 : vector<32x32xf32>, vector<32x32xf32> -> vector<64x32xf32>
    %195 = arith.truncf %194 : vector<64x32xf32> to vector<64x32xbf16>
    %cst_77 = arith.constant dense<0.000000e+00> : vector<16x32xf32>
    %196 = tpu.matmul %16, %195, %cst_77 {dimension_numbers = #tpu.dot_dimension_numbers<[1], [0], [0], [1], [0, 0, 1, 1], [], []>} : vector<16x64xbf16>, vector<64x32xbf16>, vector<16x32xf32> -> vector<16x32xf32>
    %197 = arith.addf %186, %196 : vector<16x32xf32>
    %198 = arith.mulf %197, %8 : vector<16x32xf32>
    %cst_78 = arith.constant dense<0.000000e+00> : vector<32xf32>
    %199 = vector.multi_reduction <add>, %198, %cst_78 [0] : vector<16x32xf32> to vector<32xf32>
    %200 = vector.shape_cast %199 : vector<32xf32> to vector<1x32xf32>
    %cst_79 = arith.constant 1.600000e+01 : f32
    %201 = vector.broadcast %cst_79 : f32 to vector<1x32xf32>
    %202 = arith.divf %200, %201 : vector<1x32xf32>
    %203 = vector.broadcast %202 : vector<1x32xf32> to vector<16x32xf32>
    %204 = arith.subf %198, %203 : vector<16x32xf32>
    %205 = arith.mulf %204, %204 : vector<16x32xf32>
    %cst_80 = arith.constant dense<0.000000e+00> : vector<32xf32>
    %206 = vector.multi_reduction <add>, %205, %cst_80 [0] : vector<16x32xf32> to vector<32xf32>
    %207 = vector.shape_cast %206 : vector<32xf32> to vector<1x32xf32>
    %cst_81 = arith.constant 1.600000e+01 : f32
    %208 = vector.broadcast %cst_81 : f32 to vector<1x32xf32>
    %209 = arith.divf %207, %208 : vector<1x32xf32>
    %cst_82 = arith.constant 9.99999974E-6 : f32
    %210 = vector.broadcast %cst_82 : f32 to vector<1x32xf32>
    %211 = arith.addf %209, %210 : vector<1x32xf32>
    %212 = math.rsqrt %211 : vector<1x32xf32>
    %213 = arith.mulf %0, %212 : vector<1x32xf32>
    %214 = vector.broadcast %213 : vector<1x32xf32> to vector<16x32xf32>
    %215 = arith.mulf %198, %214 : vector<16x32xf32>
    %216 = arith.mulf %202, %213 : vector<1x32xf32>
    %217 = arith.subf %1, %216 : vector<1x32xf32>
    %218 = vector.broadcast %217 : vector<1x32xf32> to vector<16x32xf32>
    %219 = arith.addf %215, %218 : vector<16x32xf32>
    %cst_83 = arith.constant dense<0.000000e+00> : vector<16x128xf32>
    %220 = tpu.matmul %219, %2, %cst_83 {dimension_numbers = #tpu.dot_dimension_numbers<[1], [0], [0], [1], [0, 0, 1, 1], [], []>} : vector<16x32xf32>, vector<32x128xf32>, vector<16x128xf32> -> vector<16x128xf32>
    %cst_84 = arith.constant dense<0.000000e+00> : vector<16x128xf32>
    %221 = tpu.matmul %172, %3, %cst_84 {dimension_numbers = #tpu.dot_dimension_numbers<[1], [0], [0], [1], [0, 0, 1, 1], [], []>} : vector<16x32xf32>, vector<32x128xf32>, vector<16x128xf32> -> vector<16x128xf32>
    %222 = arith.addf %220, %221 : vector<16x128xf32>
    %223 = arith.addf %222, %10 : vector<16x128xf32>
    %224 = vector.extract_strided_slice %223 {offsets = [0, 0], sizes = [16, 32], strides = [1, 1]} : vector<16x128xf32> to vector<16x32xf32>
    %225 = arith.negf %224 : vector<16x32xf32>
    %226 = math.exp %225 : vector<16x32xf32>
    %cst_85 = arith.constant 1.000000e+00 : f32
    %227 = vector.broadcast %cst_85 : f32 to vector<16x32xf32>
    %228 = arith.addf %227, %226 : vector<16x32xf32>
    %229 = arith.divf %227, %228 : vector<16x32xf32>
    %230 = vector.extract_strided_slice %223 {offsets = [0, 32], sizes = [16, 32], strides = [1, 1]} : vector<16x128xf32> to vector<16x32xf32>
    %231 = arith.negf %230 : vector<16x32xf32>
    %232 = math.exp %231 : vector<16x32xf32>
    %cst_86 = arith.constant 1.000000e+00 : f32
    %233 = vector.broadcast %cst_86 : f32 to vector<16x32xf32>
    %234 = arith.addf %233, %232 : vector<16x32xf32>
    %235 = arith.divf %233, %234 : vector<16x32xf32>
    %236 = vector.extract_strided_slice %223 {offsets = [0, 64], sizes = [16, 32], strides = [1, 1]} : vector<16x128xf32> to vector<16x32xf32>
    %237 = math.tanh %236 : vector<16x32xf32>
    %238 = vector.extract_strided_slice %223 {offsets = [0, 96], sizes = [16, 32], strides = [1, 1]} : vector<16x128xf32> to vector<16x32xf32>
    %239 = arith.negf %238 : vector<16x32xf32>
    %240 = math.exp %239 : vector<16x32xf32>
    %cst_87 = arith.constant 1.000000e+00 : f32
    %241 = vector.broadcast %cst_87 : f32 to vector<16x32xf32>
    %242 = arith.addf %241, %240 : vector<16x32xf32>
    %243 = arith.divf %241, %242 : vector<16x32xf32>
    %244 = arith.mulf %235, %170 : vector<16x32xf32>
    %245 = arith.mulf %229, %237 : vector<16x32xf32>
    %246 = arith.addf %244, %245 : vector<16x32xf32>
    %247 = math.tanh %246 : vector<16x32xf32>
    %248 = arith.mulf %243, %247 : vector<16x32xf32>
    %249 = arith.truncf %248 : vector<16x32xf32> to vector<16x32xbf16>
    %cst_88 = arith.constant 0.000000e+00 : f32
    %250 = vector.broadcast %cst_88 : f32 to vector<16x32xf32>
    %cst_89 = arith.constant dense<0.000000e+00> : vector<64x32xf32>
    %251 = tpu.matmul %11, %249, %cst_89 {dimension_numbers = #tpu.dot_dimension_numbers<[1], [0], [0], [1], [0, 0, 1, 1], [], []>} : vector<64x16xbf16>, vector<16x32xbf16>, vector<64x32xf32> -> vector<64x32xf32>
    %252 = vector.extract_strided_slice %251 {offsets = [32, 0], sizes = [32, 32], strides = [1, 1]} : vector<64x32xf32> to vector<32x32xf32>
    %253 = vector.extract_strided_slice %251 {offsets = [0, 0], sizes = [32, 32], strides = [1, 1]} : vector<64x32xf32> to vector<32x32xf32>
    %254 = tpu.concatenate %252, %253 in 0 : vector<32x32xf32>, vector<32x32xf32> -> vector<64x32xf32>
    %255 = arith.truncf %251 : vector<64x32xf32> to vector<64x32xbf16>
    %cst_90 = arith.constant dense<0.000000e+00> : vector<64x32xf32>
    %256 = tpu.matmul %255, %13, %cst_90 {dimension_numbers = #tpu.dot_dimension_numbers<[1], [0], [0], [1], [0, 0, 1, 1], [], []>} : vector<64x32xbf16>, vector<32x32xbf16>, vector<64x32xf32> -> vector<64x32xf32>
    %257 = arith.truncf %254 : vector<64x32xf32> to vector<64x32xbf16>
    %cst_91 = arith.constant dense<0.000000e+00> : vector<64x32xf32>
    %258 = tpu.matmul %257, %14, %cst_91 {dimension_numbers = #tpu.dot_dimension_numbers<[1], [0], [0], [1], [0, 0, 1, 1], [], []>} : vector<64x32xbf16>, vector<32x32xbf16>, vector<64x32xf32> -> vector<64x32xf32>
    %259 = arith.addf %256, %258 : vector<64x32xf32>
    %260 = arith.truncf %259 : vector<64x32xf32> to vector<64x32xbf16>
    %cst_92 = arith.constant dense<0.000000e+00> : vector<16x32xf32>
    %261 = tpu.matmul %12, %260, %cst_92 {dimension_numbers = #tpu.dot_dimension_numbers<[1], [0], [0], [1], [0, 0, 1, 1], [], []>} : vector<16x64xbf16>, vector<64x32xbf16>, vector<16x32xf32> -> vector<16x32xf32>
    %262 = arith.addf %250, %261 : vector<16x32xf32>
    %cst_93 = arith.constant dense<0.000000e+00> : vector<64x32xf32>
    %263 = tpu.matmul %15, %249, %cst_93 {dimension_numbers = #tpu.dot_dimension_numbers<[1], [0], [0], [1], [0, 0, 1, 1], [], []>} : vector<64x16xbf16>, vector<16x32xbf16>, vector<64x32xf32> -> vector<64x32xf32>
    %264 = vector.extract_strided_slice %263 {offsets = [0, 0], sizes = [32, 32], strides = [1, 1]} : vector<64x32xf32> to vector<32x32xf32>
    %265 = vector.extract_strided_slice %263 {offsets = [32, 0], sizes = [32, 32], strides = [1, 1]} : vector<64x32xf32> to vector<32x32xf32>
    %266 = tpu.concatenate %264, %265 in 1 : vector<32x32xf32>, vector<32x32xf32> -> vector<32x64xf32>
    %267 = arith.truncf %266 : vector<32x64xf32> to vector<32x64xbf16>
    %cst_94 = arith.constant dense<0.000000e+00> : vector<32x32xf32>
    %268 = tpu.matmul %267, %17, %cst_94 {dimension_numbers = #tpu.dot_dimension_numbers<[1], [0], [0], [1], [0, 0, 1, 1], [], []>} : vector<32x64xbf16>, vector<64x32xbf16>, vector<32x32xf32> -> vector<32x32xf32>
    %cst_95 = arith.constant dense<0.000000e+00> : vector<32x32xf32>
    %269 = tpu.matmul %267, %18, %cst_95 {dimension_numbers = #tpu.dot_dimension_numbers<[1], [0], [0], [1], [0, 0, 1, 1], [], []>} : vector<32x64xbf16>, vector<64x32xbf16>, vector<32x32xf32> -> vector<32x32xf32>
    %270 = tpu.concatenate %268, %269 in 0 : vector<32x32xf32>, vector<32x32xf32> -> vector<64x32xf32>
    %271 = arith.truncf %270 : vector<64x32xf32> to vector<64x32xbf16>
    %cst_96 = arith.constant dense<0.000000e+00> : vector<16x32xf32>
    %272 = tpu.matmul %16, %271, %cst_96 {dimension_numbers = #tpu.dot_dimension_numbers<[1], [0], [0], [1], [0, 0, 1, 1], [], []>} : vector<16x64xbf16>, vector<64x32xbf16>, vector<16x32xf32> -> vector<16x32xf32>
    %273 = arith.addf %262, %272 : vector<16x32xf32>
    %274 = arith.mulf %273, %8 : vector<16x32xf32>
    %cst_97 = arith.constant dense<0.000000e+00> : vector<32xf32>
    %275 = vector.multi_reduction <add>, %274, %cst_97 [0] : vector<16x32xf32> to vector<32xf32>
    %276 = vector.shape_cast %275 : vector<32xf32> to vector<1x32xf32>
    %cst_98 = arith.constant 1.600000e+01 : f32
    %277 = vector.broadcast %cst_98 : f32 to vector<1x32xf32>
    %278 = arith.divf %276, %277 : vector<1x32xf32>
    %279 = vector.broadcast %278 : vector<1x32xf32> to vector<16x32xf32>
    %280 = arith.subf %274, %279 : vector<16x32xf32>
    %281 = arith.mulf %280, %280 : vector<16x32xf32>
    %cst_99 = arith.constant dense<0.000000e+00> : vector<32xf32>
    %282 = vector.multi_reduction <add>, %281, %cst_99 [0] : vector<16x32xf32> to vector<32xf32>
    %283 = vector.shape_cast %282 : vector<32xf32> to vector<1x32xf32>
    %cst_100 = arith.constant 1.600000e+01 : f32
    %284 = vector.broadcast %cst_100 : f32 to vector<1x32xf32>
    %285 = arith.divf %283, %284 : vector<1x32xf32>
    %cst_101 = arith.constant 9.99999974E-6 : f32
    %286 = vector.broadcast %cst_101 : f32 to vector<1x32xf32>
    %287 = arith.addf %285, %286 : vector<1x32xf32>
    %288 = math.rsqrt %287 : vector<1x32xf32>
    %289 = arith.mulf %0, %288 : vector<1x32xf32>
    %290 = vector.broadcast %289 : vector<1x32xf32> to vector<16x32xf32>
    %291 = arith.mulf %274, %290 : vector<16x32xf32>
    %292 = arith.mulf %278, %289 : vector<1x32xf32>
    %293 = arith.subf %1, %292 : vector<1x32xf32>
    %294 = vector.broadcast %293 : vector<1x32xf32> to vector<16x32xf32>
    %295 = arith.addf %291, %294 : vector<16x32xf32>
    %cst_102 = arith.constant dense<0.000000e+00> : vector<16x128xf32>
    %296 = tpu.matmul %295, %2, %cst_102 {dimension_numbers = #tpu.dot_dimension_numbers<[1], [0], [0], [1], [0, 0, 1, 1], [], []>} : vector<16x32xf32>, vector<32x128xf32>, vector<16x128xf32> -> vector<16x128xf32>
    %cst_103 = arith.constant dense<0.000000e+00> : vector<16x128xf32>
    %297 = tpu.matmul %248, %3, %cst_103 {dimension_numbers = #tpu.dot_dimension_numbers<[1], [0], [0], [1], [0, 0, 1, 1], [], []>} : vector<16x32xf32>, vector<32x128xf32>, vector<16x128xf32> -> vector<16x128xf32>
    %298 = arith.addf %296, %297 : vector<16x128xf32>
    %299 = arith.addf %298, %10 : vector<16x128xf32>
    %300 = vector.extract_strided_slice %299 {offsets = [0, 0], sizes = [16, 32], strides = [1, 1]} : vector<16x128xf32> to vector<16x32xf32>
    %301 = arith.negf %300 : vector<16x32xf32>
    %302 = math.exp %301 : vector<16x32xf32>
    %cst_104 = arith.constant 1.000000e+00 : f32
    %303 = vector.broadcast %cst_104 : f32 to vector<16x32xf32>
    %304 = arith.addf %303, %302 : vector<16x32xf32>
    %305 = arith.divf %303, %304 : vector<16x32xf32>
    %306 = vector.extract_strided_slice %299 {offsets = [0, 32], sizes = [16, 32], strides = [1, 1]} : vector<16x128xf32> to vector<16x32xf32>
    %307 = arith.negf %306 : vector<16x32xf32>
    %308 = math.exp %307 : vector<16x32xf32>
    %cst_105 = arith.constant 1.000000e+00 : f32
    %309 = vector.broadcast %cst_105 : f32 to vector<16x32xf32>
    %310 = arith.addf %309, %308 : vector<16x32xf32>
    %311 = arith.divf %309, %310 : vector<16x32xf32>
    %312 = vector.extract_strided_slice %299 {offsets = [0, 64], sizes = [16, 32], strides = [1, 1]} : vector<16x128xf32> to vector<16x32xf32>
    %313 = math.tanh %312 : vector<16x32xf32>
    %314 = vector.extract_strided_slice %299 {offsets = [0, 96], sizes = [16, 32], strides = [1, 1]} : vector<16x128xf32> to vector<16x32xf32>
    %315 = arith.negf %314 : vector<16x32xf32>
    %316 = math.exp %315 : vector<16x32xf32>
    %cst_106 = arith.constant 1.000000e+00 : f32
    %317 = vector.broadcast %cst_106 : f32 to vector<16x32xf32>
    %318 = arith.addf %317, %316 : vector<16x32xf32>
    %319 = arith.divf %317, %318 : vector<16x32xf32>
    %320 = arith.mulf %311, %246 : vector<16x32xf32>
    %321 = arith.mulf %305, %313 : vector<16x32xf32>
    %322 = arith.addf %320, %321 : vector<16x32xf32>
    %323 = math.tanh %322 : vector<16x32xf32>
    %324 = arith.mulf %319, %323 : vector<16x32xf32>
    %cst_107 = arith.constant dense<0.000000e+00> : vector<16x1xf32>
    %325 = tpu.matmul %324, %5, %cst_107 {dimension_numbers = #tpu.dot_dimension_numbers<[1], [0], [0], [1], [0, 0, 1, 1], [], []>} : vector<16x32xf32>, vector<32x1xf32>, vector<16x1xf32> -> vector<16x1xf32>
    %326 = arith.negf %325 : vector<16x1xf32>
    %327 = math.exp %326 : vector<16x1xf32>
    %cst_108 = arith.constant 1.000000e+00 : f32
    %328 = vector.broadcast %cst_108 : f32 to vector<16x1xf32>
    %329 = arith.addf %328, %327 : vector<16x1xf32>
    %330 = arith.divf %328, %329 : vector<16x1xf32>
    %c0_109 = arith.constant 0 : index
    %c0_110 = arith.constant 0 : index
    %331 = vector.load %arg16[%c0_109, %c0_110] : memref<16x1xf32, #tpu.memory_space<vmem>>, vector<16x1xf32>
    tpu.vector_store %arg16[%c0_109, %c0_110], %330 {strides = array<i32>} : memref<16x1xf32, #tpu.memory_space<vmem>>, vector<16x1xf32>,
    return
  }
}

</mosaic_0001>

<llo_original>
// kernel: tpu_custom_call.1
$region0: #{tpu_custom_call.1}
  #allocation0 [shape = 'u32[]', space=smem, size = 0x4, offset = 0x4, fixed_abs, tag = 'smem constant byte address 0x4 - core index']
  #allocation1 [shape = 'u32[144,128]{1,0:T(1,128)}', space=vmem, size = 0x12000, scoped, tag = 'internal scratch']
  %s0 = inlined_call_operand.vmem [shape: f32[16,32], index: 0, kind: input, shape index: {}]
  %s1 = inlined_call_operand.vmem [shape: f32[16,1], index: 1, kind: input, shape index: {}]
  %s2 = inlined_call_operand.vmem [shape: bf16[64,16], index: 2, kind: input, shape index: {}]
  %s3 = inlined_call_operand.vmem [shape: bf16[16,64], index: 3, kind: input, shape index: {}]
  %s4 = inlined_call_operand.vmem [shape: bf16[32,32], index: 4, kind: input, shape index: {}]
  %s5 = inlined_call_operand.vmem [shape: bf16[32,32], index: 5, kind: input, shape index: {}]
  %s6 = inlined_call_operand.vmem [shape: bf16[64,16], index: 6, kind: input, shape index: {}]
  %s7 = inlined_call_operand.vmem [shape: bf16[16,64], index: 7, kind: input, shape index: {}]
  %s8 = inlined_call_operand.vmem [shape: bf16[64,32], index: 8, kind: input, shape index: {}]
  %s9 = inlined_call_operand.vmem [shape: bf16[64,32], index: 9, kind: input, shape index: {}]
  %s10 = inlined_call_operand.vmem [shape: f32[1,32], index: 10, kind: input, shape index: {}]
  %s11 = inlined_call_operand.vmem [shape: f32[1,32], index: 11, kind: input, shape index: {}]
  %s12 = inlined_call_operand.vmem [shape: f32[32,128], index: 12, kind: input, shape index: {}]
  %s13 = inlined_call_operand.vmem [shape: f32[32,128], index: 13, kind: input, shape index: {}]
  %s14 = inlined_call_operand.vmem [shape: f32[1,128], index: 14, kind: input, shape index: {}]
  %s15 = inlined_call_operand.vmem [shape: f32[32,1], index: 15, kind: input, shape index: {}]
  %s16 = inlined_call_operand.vmem [shape: f32[16,1], index: 16, kind: output, shape index: {}]
  %s17 = sld [smem:[#allocation0]]
  $region74: #{tpu_custom_call.1} parent=0
    _
  %s19 = ssub.s32 1, %s17
  %s20 = scalar_select 0, %s19, %s17
  // Predicated region
  $region2: #{tpu_custom_call.1} parent=0 // pred_check
    _
  $region3: #{tpu_custom_call.1} parent=0 // pred_check_branch
    %22 = sbr.rel (0) target = $region5
  $region4: #{tpu_custom_call.1} parent=0 // pred_region
    _
  $region5: #{tpu_custom_call.1} parent=0 // pred_fallthru
    _
  // Predicated region
  $region6: #{tpu_custom_call.1} parent=0 // pred_check
    _
  $region7: #{tpu_custom_call.1} parent=0 // pred_check_branch
    %24 = sbr.rel (0) target = $region9
  $region8: #{tpu_custom_call.1} parent=0 // pred_region
    _
  $region9: #{tpu_custom_call.1} parent=0 // pred_fallthru
    _
  // Predicated region
  $region10: #{tpu_custom_call.1} parent=0 // pred_check
    _
  $region11: #{tpu_custom_call.1} parent=0 // pred_check_branch
    %26 = sbr.rel (0) target = $region13
  $region12: #{tpu_custom_call.1} parent=0 // pred_region
    _
  $region13: #{tpu_custom_call.1} parent=0 // pred_fallthru
    _
  // Predicated region
  $region14: #{tpu_custom_call.1} parent=0 // pred_check
    _
  $region15: #{tpu_custom_call.1} parent=0 // pred_check_branch
    %28 = sbr.rel (0) target = $region17
  $region16: #{tpu_custom_call.1} parent=0 // pred_region
    _
  $region17: #{tpu_custom_call.1} parent=0 // pred_fallthru
    _
  // Predicated region
  $region18: #{tpu_custom_call.1} parent=0 // pred_check
    _
  $region19: #{tpu_custom_call.1} parent=0 // pred_check_branch
    %30 = sbr.rel (0) target = $region21
  $region20: #{tpu_custom_call.1} parent=0 // pred_region
    _
  $region21: #{tpu_custom_call.1} parent=0 // pred_fallthru
    _
  // Predicated region
  $region22: #{tpu_custom_call.1} parent=0 // pred_check
    _
  $region23: #{tpu_custom_call.1} parent=0 // pred_check_branch
    %32 = sbr.rel (0) target = $region25
  $region24: #{tpu_custom_call.1} parent=0 // pred_region
    _
  $region25: #{tpu_custom_call.1} parent=0 // pred_fallthru
    _
  // Predicated region
  $region26: #{tpu_custom_call.1} parent=0 // pred_check
    _
  $region27: #{tpu_custom_call.1} parent=0 // pred_check_branch
    %34 = sbr.rel (0) target = $region29
  $region28: #{tpu_custom_call.1} parent=0 // pred_region
    _
  $region29: #{tpu_custom_call.1} parent=0 // pred_fallthru
    _
  // Predicated region
  $region30: #{tpu_custom_call.1} parent=0 // pred_check
    _
  $region31: #{tpu_custom_call.1} parent=0 // pred_check_branch
    %36 = sbr.rel (0) target = $region33
  $region32: #{tpu_custom_call.1} parent=0 // pred_region
    _
  $region33: #{tpu_custom_call.1} parent=0 // pred_fallthru
    _
  // Predicated region
  $region34: #{tpu_custom_call.1} parent=0 // pred_check
    _
  $region35: #{tpu_custom_call.1} parent=0 // pred_check_branch
    %38 = sbr.rel (0) target = $region37
  $region36: #{tpu_custom_call.1} parent=0 // pred_region
    _
  $region37: #{tpu_custom_call.1} parent=0 // pred_fallthru
    _
  // Predicated region
  $region38: #{tpu_custom_call.1} parent=0 // pred_check
    _
  $region39: #{tpu_custom_call.1} parent=0 // pred_check_branch
    %40 = sbr.rel (0) target = $region41
  $region40: #{tpu_custom_call.1} parent=0 // pred_region
    _
  $region41: #{tpu_custom_call.1} parent=0 // pred_fallthru
    _
  // Predicated region
  $region42: #{tpu_custom_call.1} parent=0 // pred_check
    _
  $region43: #{tpu_custom_call.1} parent=0 // pred_check_branch
    %42 = sbr.rel (0) target = $region45
  $region44: #{tpu_custom_call.1} parent=0 // pred_region
    _
  $region45: #{tpu_custom_call.1} parent=0 // pred_fallthru
    _
  // Predicated region
  $region46: #{tpu_custom_call.1} parent=0 // pred_check
    _
  $region47: #{tpu_custom_call.1} parent=0 // pred_check_branch
    %44 = sbr.rel (0) target = $region49
  $region48: #{tpu_custom_call.1} parent=0 // pred_region
    _
  $region49: #{tpu_custom_call.1} parent=0 // pred_fallthru
    _
  // Predicated region
  $region50: #{tpu_custom_call.1} parent=0 // pred_check
    _
  $region51: #{tpu_custom_call.1} parent=0 // pred_check_branch
    %46 = sbr.rel (0) target = $region53
  $region52: #{tpu_custom_call.1} parent=0 // pred_region
    _
  $region53: #{tpu_custom_call.1} parent=0 // pred_fallthru
    _
  // Predicated region
  $region54: #{tpu_custom_call.1} parent=0 // pred_check
    _
  $region55: #{tpu_custom_call.1} parent=0 // pred_check_branch
    %48 = sbr.rel (0) target = $region57
  $region56: #{tpu_custom_call.1} parent=0 // pred_region
    _
  $region57: #{tpu_custom_call.1} parent=0 // pred_fallthru
    _
  // Predicated region
  $region58: #{tpu_custom_call.1} parent=0 // pred_check
    _
  $region59: #{tpu_custom_call.1} parent=0 // pred_check_branch
    %50 = sbr.rel (0) target = $region61
  $region60: #{tpu_custom_call.1} parent=0 // pred_region
    _
  $region61: #{tpu_custom_call.1} parent=0 // pred_fallthru
    _
  // Predicated region
  $region62: #{tpu_custom_call.1} parent=0 // pred_check
    _
  $region63: #{tpu_custom_call.1} parent=0 // pred_check_branch
    %52 = sbr.rel (0) target = $region65
  $region64: #{tpu_custom_call.1} parent=0 // pred_region
    _
  $region65: #{tpu_custom_call.1} parent=0 // pred_fallthru
    _
  %v54 = vld [vmem:[%s10] sm:$0x1]
  %v55 = vld [vmem:[%s11] sm:$0x1]
  %v56 = vld [vmem:[%s12] sm:$0xff]
  %v57 = vld [vmem:[%s12 + $0x8] sm:$0xff]
  %v58 = vld [vmem:[%s12 + $0x10] sm:$0xff]
  %v59 = vld [vmem:[%s12 + $0x18] sm:$0xff]
  %v60 = vld [vmem:[%s13] sm:$0xff]
  %v61 = vld [vmem:[%s13 + $0x8] sm:$0xff]
  %v62 = vld [vmem:[%s13 + $0x10] sm:$0xff]
  %v63 = vld [vmem:[%s13 + $0x18] sm:$0xff]
  %v64 = vld [vmem:[%s14] sm:$0x1]
  %v65 = vld [vmem:[%s15] sm:$0xff]
  %v66 = vld [vmem:[%s15 + $0x8] sm:$0xff]
  %v67 = vld [vmem:[%s15 + $0x10] sm:$0xff]
  %v68 = vld [vmem:[%s15 + $0x18] sm:$0xff]
  %v69 = vld [vmem:[%s1] sm:$0xff]
  %v70 = vld [vmem:[%s1 + $0x8] sm:$0xff]
  %72 = vset.pattern.permute.xlu0 0
  %73 = vperm.xlu0 %72, %v69
  %v74 = vpop.permute.xlu0 %73
  %77 = vset.pattern.permute.xlu0 0
  %78 = vperm.xlu0 %77, %v70
  %v79 = vpop.permute.xlu0 %78
  %v82 = vlaneseq
  %v83 = vshrl.u32 %v82, 7
  %v84 = vsub.s32 0, %v83
  %v85 = vrot.slane %v64, %v84
  %v87 = vld [vmem:[%s2] sm:$0xf]
  %v88 = vld [vmem:[%s2 + $0x4] sm:$0xf]
  %v89 = vld [vmem:[%s2 + $0x8] sm:$0xf]
  %v90 = vld [vmem:[%s2 + $0xc] sm:$0xf]
  %v91 = vld [vmem:[%s2 + $0x10] sm:$0xf]
  %v92 = vld [vmem:[%s2 + $0x14] sm:$0xf]
  %v93 = vld [vmem:[%s2 + $0x18] sm:$0xf]
  %v94 = vld [vmem:[%s2 + $0x1c] sm:$0xf]
  %v95 = vld [vmem:[%s3] sm:$0xf]
  %v96 = vld [vmem:[%s3 + $0x4] sm:$0xf]
  %v97 = vld [vmem:[%s4] sm:$0xf]
  %v98 = vld [vmem:[%s4 + $0x4] sm:$0xf]
  %v99 = vld [vmem:[%s4 + $0x8] sm:$0xf]
  %v100 = vld [vmem:[%s4 + $0xc] sm:$0xf]
  %v101 = vld [vmem:[%s5] sm:$0xf]
  %v102 = vld [vmem:[%s5 + $0x4] sm:$0xf]
  %v103 = vld [vmem:[%s5 + $0x8] sm:$0xf]
  %v104 = vld [vmem:[%s5 + $0xc] sm:$0xf]
  %v105 = vld [vmem:[%s6] sm:$0xf]
  %v106 = vld [vmem:[%s6 + $0x4] sm:$0xf]
  %v107 = vld [vmem:[%s6 + $0x8] sm:$0xf]
  %v108 = vld [vmem:[%s6 + $0xc] sm:$0xf]
  %v109 = vld [vmem:[%s6 + $0x10] sm:$0xf]
  %v110 = vld [vmem:[%s6 + $0x14] sm:$0xf]
  %v111 = vld [vmem:[%s6 + $0x18] sm:$0xf]
  %v112 = vld [vmem:[%s6 + $0x1c] sm:$0xf]
  %v113 = vld [vmem:[%s7] sm:$0xf]
  %v114 = vld [vmem:[%s7 + $0x4] sm:$0xf]
  %v115 = vld [vmem:[%s8] sm:$0xf]
  %v116 = vld [vmem:[%s8 + $0x4] sm:$0xf]
  %v117 = vld [vmem:[%s8 + $0x8] sm:$0xf]
  %v118 = vld [vmem:[%s8 + $0xc] sm:$0xf]
  %v119 = vld [vmem:[%s8 + $0x10] sm:$0xf]
  %v120 = vld [vmem:[%s8 + $0x14] sm:$0xf]
  %v121 = vld [vmem:[%s8 + $0x18] sm:$0xf]
  %v122 = vld [vmem:[%s8 + $0x1c] sm:$0xf]
  %v123 = vld [vmem:[%s9] sm:$0xf]
  %v124 = vld [vmem:[%s9 + $0x4] sm:$0xf]
  %v125 = vld [vmem:[%s9 + $0x8] sm:$0xf]
  %v126 = vld [vmem:[%s9 + $0xc] sm:$0xf]
  %v127 = vld [vmem:[%s9 + $0x10] sm:$0xf]
  %v128 = vld [vmem:[%s9 + $0x14] sm:$0xf]
  %v129 = vld [vmem:[%s9 + $0x18] sm:$0xf]
  %v130 = vld [vmem:[%s9 + $0x1c] sm:$0xf]
  %v131 = vld [vmem:[%s0] sm:$0xff]
  %v132 = vld [vmem:[%s0 + $0x8] sm:$0xff]
  %v133 = vpack.c.bf16 %v132, %v131
  %v142 = vunpack.c.l.b16 %v87
  %v143 = vunpack.c.l.b16 %v88
  %v144 = vunpack.c.l.b16 %v89
  %v145 = vunpack.c.l.b16 %v90
  %v146 = vunpack.c.l.b16 %v91
  %v147 = vunpack.c.l.b16 %v92
  %v148 = vunpack.c.l.b16 %v93
  %v149 = vunpack.c.l.b16 %v94
  %v150 = vpack.c.b16 %v143, %v142
  %v151 = vpack.c.b16 %v145, %v144
  %v152 = vpack.c.b16 %v147, %v146
  %v153 = vpack.c.b16 %v149, %v148
  %vm154 = vcmask 130048
  %v156 = vsel %vm154, %v150, 0
  %v159 = vsel %vm154, %v151, 0
  %v162 = vsel %vm154, %v152, 0
  %v165 = vsel %vm154, %v153, 0
  %167 = vmatprep.subr.bf16.mxu0 0
  %168 = vmatpush1.bf16.msra.mxu0 %v133
  %169 = vmatprep.subr.bf16.mxu0 0
  %170 = vmatpush1.bf16.msra.mxu0 0
  %171 = vmatprep.subr.bf16.mxu0 0
  %172 = vmatpush1.bf16.msra.mxu0 0
  %173 = vmatprep.subr.bf16.mxu0 0
  %174 = vmatpush1.bf16.msra.mxu0 0
  %175 = vmatprep.subr.bf16.mxu0 0
  %176 = vmatpush1.bf16.msra.mxu0 0
  %177 = vmatprep.subr.bf16.mxu0 0
  %178 = vmatpush1.bf16.msra.mxu0 0
  %179 = vmatprep.subr.bf16.mxu0 0
  %180 = vmatpush1.bf16.msra.mxu0 0
  %181 = vmatprep.subr.bf16.mxu0 0
  %182 = vmatpush1.bf16.msra.mxu0 0
  %183 = vmatprep.subr.bf16.mxu0 0
  %184 = vmatpush1.bf16.msra.mxu0 0
  %185 = vmatprep.subr.bf16.mxu0 0
  %186 = vmatpush1.bf16.msra.mxu0 0
  %187 = vmatprep.subr.bf16.mxu0 0
  %188 = vmatpush1.bf16.msra.mxu0 0
  %189 = vmatprep.subr.bf16.mxu0 0
  %190 = vmatpush1.bf16.msra.mxu0 0
  %191 = vmatprep.subr.bf16.mxu0 0
  %192 = vmatpush1.bf16.msra.mxu0 0
  %193 = vmatprep.subr.bf16.mxu0 0
  %194 = vmatpush1.bf16.msra.mxu0 0
  %195 = vmatprep.subr.bf16.mxu0 0
  %196 = vmatpush1.bf16.msra.mxu0 0
  %197 = vmatprep.subr.bf16.mxu0 0
  %198 = vmatpush1.bf16.msra.mxu0 0
  %199 = vmatprep.mubr.bf16.mxu0 0
  %200 = vmatmul.mubr.bf16.gmra.mrb[0].mxu0 %v156
  %v201 = vpop.f32.mrb[0].mxu0
  %v202 = vadd.f32 0.0, %v201
  %v203 = vpop.f32.mrb[0].mxu0
  %v204 = vpop.f32.mrb[0].mxu0
  %v205 = vadd.f32 0.0, %v204
  %v206 = vpop.f32.mrb[0].mxu0
  %207 = vmatprep.mubr.bf16.mxu0 0
  %208 = vmatmul.mubr.bf16.gmra.mrb[0].mxu0 %v159
  %v209 = vpop.f32.mrb[0].mxu0
  %v210 = vadd.f32 0.0, %v209
  %v211 = vpop.f32.mrb[0].mxu0
  %v212 = vpop.f32.mrb[0].mxu0
  %v213 = vadd.f32 0.0, %v212
  %v214 = vpop.f32.mrb[0].mxu0
  %215 = vmatprep.mubr.bf16.mxu0 0
  %216 = vmatmul.mubr.bf16.gmra.mrb[0].mxu0 %v162
  %v217 = vpop.f32.mrb[0].mxu0
  %v218 = vadd.f32 0.0, %v217
  %v219 = vpop.f32.mrb[0].mxu0
  %v220 = vpop.f32.mrb[0].mxu0
  %v221 = vadd.f32 0.0, %v220
  %v222 = vpop.f32.mrb[0].mxu0
  %223 = vmatprep.mubr.bf16.mxu0 0
  %224 = vmatmul.mubr.bf16.gmra.mrb[0].mxu0 %v165
  %v225 = vpop.f32.mrb[0].mxu0
  %v226 = vadd.f32 0.0, %v225
  %v227 = vpop.f32.mrb[0].mxu0
  %v228 = vpop.f32.mrb[0].mxu0
  %v229 = vadd.f32 0.0, %v228
  %v230 = vpop.f32.mrb[0].mxu0
  %231 = vdwg.mxu0
  %v232 = vpack.c.bf16 %v205, %v202
  %v233 = vpack.c.bf16 %v213, %v210
  %v234 = vpack.c.bf16 %v221, %v218
  %v235 = vpack.c.bf16 %v229, %v226
  %v240 = vunpack.c.l.b16 %v101
  %v241 = vunpack.c.l.b16 %v102
  %v242 = vunpack.c.l.b16 %v103
  %v243 = vunpack.c.l.b16 %v104
  %v244 = vpack.c.b16 %v241, %v240
  %v245 = vpack.c.b16 %v243, %v242
  %vm248 = vcmask 261120
  %v250 = vsel %vm248, %v234, 0
  %v253 = vsel %vm248, %v235, 0
  %v256 = vsel %vm248, %v232, 0
  %v259 = vsel %vm248, %v233, 0
  %261 = vmatprep.subr.bf16.mxu0 0
  %262 = vmatpush1.bf16.msra.mxu0 %v244
  %263 = vmatprep.subr.bf16.mxu0 0
  %264 = vmatpush1.bf16.msra.mxu0 %v245
  %265 = vmatprep.subr.bf16.mxu0 0
  %266 = vmatpush1.bf16.msra.mxu0 0
  %267 = vmatprep.subr.bf16.mxu0 0
  %268 = vmatpush1.bf16.msra.mxu0 0
  %269 = vmatprep.subr.bf16.mxu0 0
  %270 = vmatpush1.bf16.msra.mxu0 0
  %271 = vmatprep.subr.bf16.mxu0 0
  %272 = vmatpush1.bf16.msra.mxu0 0
  %273 = vmatprep.subr.bf16.mxu0 0
  %274 = vmatpush1.bf16.msra.mxu0 0
  %275 = vmatprep.subr.bf16.mxu0 0
  %276 = vmatpush1.bf16.msra.mxu0 0
  %277 = vmatprep.subr.bf16.mxu0 0
  %278 = vmatpush1.bf16.msra.mxu0 0
  %279 = vmatprep.subr.bf16.mxu0 0
  %280 = vmatpush1.bf16.msra.mxu0 0
  %281 = vmatprep.subr.bf16.mxu0 0
  %282 = vmatpush1.bf16.msra.mxu0 0
  %283 = vmatprep.subr.bf16.mxu0 0
  %284 = vmatpush1.bf16.msra.mxu0 0
  %285 = vmatprep.subr.bf16.mxu0 0
  %286 = vmatpush1.bf16.msra.mxu0 0
  %287 = vmatprep.subr.bf16.mxu0 0
  %288 = vmatpush1.bf16.msra.mxu0 0
  %289 = vmatprep.subr.bf16.mxu0 0
  %290 = vmatpush1.bf16.msra.mxu0 0
  %291 = vmatprep.subr.bf16.mxu0 0
  %292 = vmatpush1.bf16.msra.mxu0 0
  %293 = vmatprep.mubr.bf16.mxu0 0
  %294 = vmatmul.mubr.bf16.gmra.mrb[0].mxu0 %v250
  %v295 = vpop.f32.mrb[0].mxu0
  %v296 = vadd.f32 0.0, %v295
  %v297 = vpop.f32.mrb[0].mxu0
  %v298 = vpop.f32.mrb[0].mxu0
  %v299 = vadd.f32 0.0, %v298
  %v300 = vpop.f32.mrb[0].mxu0
  %301 = vmatprep.mubr.bf16.mxu0 0
  %302 = vmatmul.mubr.bf16.gmra.mrb[0].mxu0 %v253
  %v303 = vpop.f32.mrb[0].mxu0
  %v304 = vadd.f32 0.0, %v303
  %v305 = vpop.f32.mrb[0].mxu0
  %v306 = vpop.f32.mrb[0].mxu0
  %v307 = vadd.f32 0.0, %v306
  %v308 = vpop.f32.mrb[0].mxu0
  %309 = vmatprep.mubr.bf16.mxu0 0
  %310 = vmatmul.mubr.bf16.gmra.mrb[0].mxu0 %v256
  %v311 = vpop.f32.mrb[0].mxu0
  %v312 = vadd.f32 0.0, %v311
  %v313 = vpop.f32.mrb[0].mxu0
  %v314 = vpop.f32.mrb[0].mxu0
  %v315 = vadd.f32 0.0, %v314
  %v316 = vpop.f32.mrb[0].mxu0
  %317 = vmatprep.mubr.bf16.mxu0 0
  %318 = vmatmul.mubr.bf16.gmra.mrb[0].mxu0 %v259
  %v319 = vpop.f32.mrb[0].mxu0
  %v320 = vadd.f32 0.0, %v319
  %v321 = vpop.f32.mrb[0].mxu0
  %v322 = vpop.f32.mrb[0].mxu0
  %v323 = vadd.f32 0.0, %v322
  %v324 = vpop.f32.mrb[0].mxu0
  %325 = vdwg.mxu0
  %v330 = vunpack.c.l.b16 %v97
  %v331 = vunpack.c.l.b16 %v98
  %v332 = vunpack.c.l.b16 %v99
  %v333 = vunpack.c.l.b16 %v100
  %v334 = vpack.c.b16 %v331, %v330
  %v335 = vpack.c.b16 %v333, %v332
  %338 = vmatprep.subr.bf16.mxu0 0
  %339 = vmatpush1.bf16.msra.mxu0 %v334
  %340 = vmatprep.subr.bf16.mxu0 0
  %341 = vmatpush1.bf16.msra.mxu0 %v335
  %342 = vmatprep.subr.bf16.mxu0 0
  %343 = vmatpush1.bf16.msra.mxu0 0
  %344 = vmatprep.subr.bf16.mxu0 0
  %345 = vmatpush1.bf16.msra.mxu0 0
  %346 = vmatprep.subr.bf16.mxu0 0
  %347 = vmatpush1.bf16.msra.mxu0 0
  %348 = vmatprep.subr.bf16.mxu0 0
  %349 = vmatpush1.bf16.msra.mxu0 0
  %350 = vmatprep.subr.bf16.mxu0 0
  %351 = vmatpush1.bf16.msra.mxu0 0
  %352 = vmatprep.subr.bf16.mxu0 0
  %353 = vmatpush1.bf16.msra.mxu0 0
  %354 = vmatprep.subr.bf16.mxu0 0
  %355 = vmatpush1.bf16.msra.mxu0 0
  %356 = vmatprep.subr.bf16.mxu0 0
  %357 = vmatpush1.bf16.msra.mxu0 0
  %358 = vmatprep.subr.bf16.mxu0 0
  %359 = vmatpush1.bf16.msra.mxu0 0
  %360 = vmatprep.subr.bf16.mxu0 0
  %361 = vmatpush1.bf16.msra.mxu0 0
  %362 = vmatprep.subr.bf16.mxu0 0
  %363 = vmatpush1.bf16.msra.mxu0 0
  %364 = vmatprep.subr.bf16.mxu0 0
  %365 = vmatpush1.bf16.msra.mxu0 0
  %366 = vmatprep.subr.bf16.mxu0 0
  %367 = vmatpush1.bf16.msra.mxu0 0
  %368 = vmatprep.subr.bf16.mxu0 0
  %369 = vmatpush1.bf16.msra.mxu0 0
  %370 = vmatprep.mubr.bf16.mxu0 0
  %371 = vmatmul.mubr.bf16.gmra.mrb[0].mxu0 %v256
  %v372 = vpop.f32.mrb[0].mxu0
  %v373 = vadd.f32 %v296, %v372
  %v374 = vpop.f32.mrb[0].mxu0
  %v375 = vpop.f32.mrb[0].mxu0
  %v376 = vadd.f32 %v299, %v375
  %v377 = vpop.f32.mrb[0].mxu0
  %378 = vmatprep.mubr.bf16.mxu0 0
  %379 = vmatmul.mubr.bf16.gmra.mrb[0].mxu0 %v259
  %v380 = vpop.f32.mrb[0].mxu0
  %v381 = vadd.f32 %v304, %v380
  %v382 = vpop.f32.mrb[0].mxu0
  %v383 = vpop.f32.mrb[0].mxu0
  %v384 = vadd.f32 %v307, %v383
  %v385 = vpop.f32.mrb[0].mxu0
  %386 = vmatprep.mubr.bf16.mxu0 0
  %387 = vmatmul.mubr.bf16.gmra.mrb[0].mxu0 %v250
  %v388 = vpop.f32.mrb[0].mxu0
  %v389 = vadd.f32 %v312, %v388
  %v390 = vpop.f32.mrb[0].mxu0
  %v391 = vpop.f32.mrb[0].mxu0
  %v392 = vadd.f32 %v315, %v391
  %v393 = vpop.f32.mrb[0].mxu0
  %394 = vmatprep.mubr.bf16.mxu0 0
  %395 = vmatmul.mubr.bf16.gmra.mrb[0].mxu0 %v253
  %v396 = vpop.f32.mrb[0].mxu0
  %v397 = vadd.f32 %v320, %v396
  %v398 = vpop.f32.mrb[0].mxu0
  %v399 = vpop.f32.mrb[0].mxu0
  %v400 = vadd.f32 %v323, %v399
  %v401 = vpop.f32.mrb[0].mxu0
  %402 = vdwg.mxu0
  %v403 = vpack.c.bf16 %v376, %v373
  %v404 = vpack.c.bf16 %v384, %v381
  %v405 = vpack.c.bf16 %v392, %v389
  %v406 = vpack.c.bf16 %v400, %v397
  %v415 = vunpack.c.l.b16 %v105
  %v416 = vunpack.c.l.b16 %v106
  %v417 = vunpack.c.l.b16 %v107
  %v418 = vunpack.c.l.b16 %v108
  %v419 = vunpack.c.l.b16 %v109
  %v420 = vunpack.c.l.b16 %v110
  %v421 = vunpack.c.l.b16 %v111
  %v422 = vunpack.c.l.b16 %v112
  %v423 = vpack.c.b16 %v416, %v415
  %v424 = vpack.c.b16 %v418, %v417
  %v425 = vpack.c.b16 %v420, %v419
  %v426 = vpack.c.b16 %v422, %v421
  %v428 = vsel %vm154, %v423, 0
  %v431 = vsel %vm154, %v424, 0
  %v434 = vsel %vm154, %v425, 0
  %v437 = vsel %vm154, %v426, 0
  %439 = vmatprep.subr.bf16.mxu0 0
  %440 = vmatpush1.bf16.msra.mxu0 %v133
  %441 = vmatprep.subr.bf16.mxu0 0
  %442 = vmatpush1.bf16.msra.mxu0 0
  %443 = vmatprep.subr.bf16.mxu0 0
  %444 = vmatpush1.bf16.msra.mxu0 0
  %445 = vmatprep.subr.bf16.mxu0 0
  %446 = vmatpush1.bf16.msra.mxu0 0
  %447 = vmatprep.subr.bf16.mxu0 0
  %448 = vmatpush1.bf16.msra.mxu0 0
  %449 = vmatprep.subr.bf16.mxu0 0
  %450 = vmatpush1.bf16.msra.mxu0 0
  %451 = vmatprep.subr.bf16.mxu0 0
  %452 = vmatpush1.bf16.msra.mxu0 0
  %453 = vmatprep.subr.bf16.mxu0 0
  %454 = vmatpush1.bf16.msra.mxu0 0
  %455 = vmatprep.subr.bf16.mxu0 0
  %456 = vmatpush1.bf16.msra.mxu0 0
  %457 = vmatprep.subr.bf16.mxu0 0
  %458 = vmatpush1.bf16.msra.mxu0 0
  %459 = vmatprep.subr.bf16.mxu0 0
  %460 = vmatpush1.bf16.msra.mxu0 0
  %461 = vmatprep.subr.bf16.mxu0 0
  %462 = vmatpush1.bf16.msra.mxu0 0
  %463 = vmatprep.subr.bf16.mxu0 0
  %464 = vmatpush1.bf16.msra.mxu0 0
  %465 = vmatprep.subr.bf16.mxu0 0
  %466 = vmatpush1.bf16.msra.mxu0 0
  %467 = vmatprep.subr.bf16.mxu0 0
  %468 = vmatpush1.bf16.msra.mxu0 0
  %469 = vmatprep.subr.bf16.mxu0 0
  %470 = vmatpush1.bf16.msra.mxu0 0
  %471 = vmatprep.mubr.bf16.mxu0 0
  %472 = vmatmul.mubr.bf16.gmra.mrb[0].mxu0 %v428
  %v473 = vpop.f32.mrb[0].mxu0
  %v474 = vadd.f32 0.0, %v473
  %v475 = vpop.f32.mrb[0].mxu0
  %v476 = vpop.f32.mrb[0].mxu0
  %v477 = vadd.f32 0.0, %v476
  %v478 = vpop.f32.mrb[0].mxu0
  %479 = vmatprep.mubr.bf16.mxu0 0
  %480 = vmatmul.mubr.bf16.gmra.mrb[0].mxu0 %v431
  %v481 = vpop.f32.mrb[0].mxu0
  %v482 = vadd.f32 0.0, %v481
  %v483 = vpop.f32.mrb[0].mxu0
  %v484 = vpop.f32.mrb[0].mxu0
  %v485 = vadd.f32 0.0, %v484
  %v486 = vpop.f32.mrb[0].mxu0
  %487 = vmatprep.mubr.bf16.mxu0 0
  %488 = vmatmul.mubr.bf16.gmra.mrb[0].mxu0 %v434
  %v489 = vpop.f32.mrb[0].mxu0
  %v490 = vadd.f32 0.0, %v489
  %v491 = vpop.f32.mrb[0].mxu0
  %v492 = vpop.f32.mrb[0].mxu0
  %v493 = vadd.f32 0.0, %v492
  %v494 = vpop.f32.mrb[0].mxu0
  %495 = vmatprep.mubr.bf16.mxu0 0
  %496 = vmatmul.mubr.bf16.gmra.mrb[0].mxu0 %v437
  %v497 = vpop.f32.mrb[0].mxu0
  %v498 = vadd.f32 0.0, %v497
  %v499 = vpop.f32.mrb[0].mxu0
  %v500 = vpop.f32.mrb[0].mxu0
  %v501 = vadd.f32 0.0, %v500
  %v502 = vpop.f32.mrb[0].mxu0
  %503 = vdwg.mxu0
  %508 = vrot.lane.b32.xlu0 %v490, 32
  %v509 = vpop.permute.xlu0 %508
  %510 = vrot.lane.b32.xlu0 %v493, 32
  %v511 = vpop.permute.xlu0 %510
  %512 = vrot.lane.b32.xlu0 %v498, 32
  %v513 = vpop.permute.xlu0 %512
  %514 = vrot.lane.b32.xlu0 %v501, 32
  %v515 = vpop.permute.xlu0 %514
  %v520 = vsel %vm248, %v474, %v509
  %v521 = vsel %vm248, %v477, %v511
  %v522 = vsel %vm248, %v482, %v513
  %v523 = vsel %vm248, %v485, %v515
  %v524 = vpack.c.bf16 %v521, %v520
  %v525 = vpack.c.bf16 %v523, %v522
  %v534 = vunpack.c.l.b16 %v115
  %v535 = vunpack.c.l.b16 %v116
  %v536 = vunpack.c.l.b16 %v117
  %v537 = vunpack.c.l.b16 %v118
  %v538 = vunpack.c.l.b16 %v119
  %v539 = vunpack.c.l.b16 %v120
  %v540 = vunpack.c.l.b16 %v121
  %v541 = vunpack.c.l.b16 %v122
  %v542 = vpack.c.b16 %v535, %v534
  %v543 = vpack.c.b16 %v537, %v536
  %v544 = vpack.c.b16 %v539, %v538
  %v545 = vpack.c.b16 %v541, %v540
  %vm550 = vcmask 523264
  %v552 = vsel %vm550, %v524, 0
  %v555 = vsel %vm550, %v525, 0
  %557 = vmatprep.subr.bf16.mxu0 0
  %558 = vmatpush1.bf16.msra.mxu0 %v542
  %559 = vmatprep.subr.bf16.mxu0 0
  %560 = vmatpush1.bf16.msra.mxu0 %v543
  %561 = vmatprep.subr.bf16.mxu0 0
  %562 = vmatpush1.bf16.msra.mxu0 %v544
  %563 = vmatprep.subr.bf16.mxu0 0
  %564 = vmatpush1.bf16.msra.mxu0 %v545
  %565 = vmatprep.subr.bf16.mxu0 0
  %566 = vmatpush1.bf16.msra.mxu0 0
  %567 = vmatprep.subr.bf16.mxu0 0
  %568 = vmatpush1.bf16.msra.mxu0 0
  %569 = vmatprep.subr.bf16.mxu0 0
  %570 = vmatpush1.bf16.msra.mxu0 0
  %571 = vmatprep.subr.bf16.mxu0 0
  %572 = vmatpush1.bf16.msra.mxu0 0
  %573 = vmatprep.subr.bf16.mxu0 0
  %574 = vmatpush1.bf16.msra.mxu0 0
  %575 = vmatprep.subr.bf16.mxu0 0
  %576 = vmatpush1.bf16.msra.mxu0 0
  %577 = vmatprep.subr.bf16.mxu0 0
  %578 = vmatpush1.bf16.msra.mxu0 0
  %579 = vmatprep.subr.bf16.mxu0 0
  %580 = vmatpush1.bf16.msra.mxu0 0
  %581 = vmatprep.subr.bf16.mxu0 0
  %582 = vmatpush1.bf16.msra.mxu0 0
  %583 = vmatprep.subr.bf16.mxu0 0
  %584 = vmatpush1.bf16.msra.mxu0 0
  %585 = vmatprep.subr.bf16.mxu0 0
  %586 = vmatpush1.bf16.msra.mxu0 0
  %587 = vmatprep.subr.bf16.mxu0 0
  %588 = vmatpush1.bf16.msra.mxu0 0
  %589 = vmatprep.mubr.bf16.mxu0 0
  %590 = vmatmul.mubr.bf16.gmra.mrb[0].mxu0 %v552
  %v591 = vpop.f32.mrb[0].mxu0
  %v592 = vadd.f32 0.0, %v591
  %v593 = vpop.f32.mrb[0].mxu0
  %v594 = vpop.f32.mrb[0].mxu0
  %v595 = vadd.f32 0.0, %v594
  %v596 = vpop.f32.mrb[0].mxu0
  %597 = vmatprep.mubr.bf16.mxu0 0
  %598 = vmatmul.mubr.bf16.gmra.mrb[0].mxu0 %v555
  %v599 = vpop.f32.mrb[0].mxu0
  %v600 = vadd.f32 0.0, %v599
  %v601 = vpop.f32.mrb[0].mxu0
  %v602 = vpop.f32.mrb[0].mxu0
  %v603 = vadd.f32 0.0, %v602
  %v604 = vpop.f32.mrb[0].mxu0
  %605 = vdwg.mxu0
  %v614 = vunpack.c.l.b16 %v123
  %v615 = vunpack.c.l.b16 %v124
  %v616 = vunpack.c.l.b16 %v125
  %v617 = vunpack.c.l.b16 %v126
  %v618 = vunpack.c.l.b16 %v127
  %v619 = vunpack.c.l.b16 %v128
  %v620 = vunpack.c.l.b16 %v129
  %v621 = vunpack.c.l.b16 %v130
  %v622 = vpack.c.b16 %v615, %v614
  %v623 = vpack.c.b16 %v617, %v616
  %v624 = vpack.c.b16 %v619, %v618
  %v625 = vpack.c.b16 %v621, %v620
  %630 = vmatprep.subr.bf16.mxu0 0
  %631 = vmatpush1.bf16.msra.mxu0 %v622
  %632 = vmatprep.subr.bf16.mxu0 0
  %633 = vmatpush1.bf16.msra.mxu0 %v623
  %634 = vmatprep.subr.bf16.mxu0 0
  %635 = vmatpush1.bf16.msra.mxu0 %v624
  %636 = vmatprep.subr.bf16.mxu0 0
  %637 = vmatpush1.bf16.msra.mxu0 %v625
  %638 = vmatprep.subr.bf16.mxu0 0
  %639 = vmatpush1.bf16.msra.mxu0 0
  %640 = vmatprep.subr.bf16.mxu0 0
  %641 = vmatpush1.bf16.msra.mxu0 0
  %642 = vmatprep.subr.bf16.mxu0 0
  %643 = vmatpush1.bf16.msra.mxu0 0
  %644 = vmatprep.subr.bf16.mxu0 0
  %645 = vmatpush1.bf16.msra.mxu0 0
  %646 = vmatprep.subr.bf16.mxu0 0
  %647 = vmatpush1.bf16.msra.mxu0 0
  %648 = vmatprep.subr.bf16.mxu0 0
  %649 = vmatpush1.bf16.msra.mxu0 0
  %650 = vmatprep.subr.bf16.mxu0 0
  %651 = vmatpush1.bf16.msra.mxu0 0
  %652 = vmatprep.subr.bf16.mxu0 0
  %653 = vmatpush1.bf16.msra.mxu0 0
  %654 = vmatprep.subr.bf16.mxu0 0
  %655 = vmatpush1.bf16.msra.mxu0 0
  %656 = vmatprep.subr.bf16.mxu0 0
  %657 = vmatpush1.bf16.msra.mxu0 0
  %658 = vmatprep.subr.bf16.mxu0 0
  %659 = vmatpush1.bf16.msra.mxu0 0
  %660 = vmatprep.subr.bf16.mxu0 0
  %661 = vmatpush1.bf16.msra.mxu0 0
  %662 = vmatprep.mubr.bf16.mxu0 0
  %663 = vmatmul.mubr.bf16.gmra.mrb[0].mxu0 %v552
  %v664 = vpop.f32.mrb[0].mxu0
  %v665 = vadd.f32 0.0, %v664
  %v666 = vpop.f32.mrb[0].mxu0
  %v667 = vpop.f32.mrb[0].mxu0
  %v668 = vadd.f32 0.0, %v667
  %v669 = vpop.f32.mrb[0].mxu0
  %670 = vmatprep.mubr.bf16.mxu0 0
  %671 = vmatmul.mubr.bf16.gmra.mrb[0].mxu0 %v555
  %v672 = vpop.f32.mrb[0].mxu0
  %v673 = vadd.f32 0.0, %v672
  %v674 = vpop.f32.mrb[0].mxu0
  %v675 = vpop.f32.mrb[0].mxu0
  %v676 = vadd.f32 0.0, %v675
  %v677 = vpop.f32.mrb[0].mxu0
  %678 = vdwg.mxu0
  %v679 = vpack.c.bf16 %v595, %v592
  %v680 = vpack.c.bf16 %v603, %v600
  %v681 = vpack.c.bf16 %v668, %v665
  %v682 = vpack.c.bf16 %v676, %v673
  %v685 = vunpack.c.l.b16 %v113
  %v686 = vunpack.c.l.b16 %v114
  %v687 = vpack.c.b16 %v686, %v685
  %v689 = vsel %vm550, %v687, 0
  %691 = vmatprep.subr.bf16.mxu0 0
  %692 = vmatpush1.bf16.msra.mxu0 %v679
  %693 = vmatprep.subr.bf16.mxu0 0
  %694 = vmatpush1.bf16.msra.mxu0 %v680
  %695 = vmatprep.subr.bf16.mxu0 0
  %696 = vmatpush1.bf16.msra.mxu0 %v681
  %697 = vmatprep.subr.bf16.mxu0 0
  %698 = vmatpush1.bf16.msra.mxu0 %v682
  %699 = vmatprep.subr.bf16.mxu0 0
  %700 = vmatpush1.bf16.msra.mxu0 0
  %701 = vmatprep.subr.bf16.mxu0 0
  %702 = vmatpush1.bf16.msra.mxu0 0
  %703 = vmatprep.subr.bf16.mxu0 0
  %704 = vmatpush1.bf16.msra.mxu0 0
  %705 = vmatprep.subr.bf16.mxu0 0
  %706 = vmatpush1.bf16.msra.mxu0 0
  %707 = vmatprep.subr.bf16.mxu0 0
  %708 = vmatpush1.bf16.msra.mxu0 0
  %709 = vmatprep.subr.bf16.mxu0 0
  %710 = vmatpush1.bf16.msra.mxu0 0
  %711 = vmatprep.subr.bf16.mxu0 0
  %712 = vmatpush1.bf16.msra.mxu0 0
  %713 = vmatprep.subr.bf16.mxu0 0
  %714 = vmatpush1.bf16.msra.mxu0 0
  %715 = vmatprep.subr.bf16.mxu0 0
  %716 = vmatpush1.bf16.msra.mxu0 0
  %717 = vmatprep.subr.bf16.mxu0 0
  %718 = vmatpush1.bf16.msra.mxu0 0
  %719 = vmatprep.subr.bf16.mxu0 0
  %720 = vmatpush1.bf16.msra.mxu0 0
  %721 = vmatprep.subr.bf16.mxu0 0
  %722 = vmatpush1.bf16.msra.mxu0 0
  %723 = vmatprep.mubr.bf16.mxu0 0
  %724 = vmatmul.mubr.bf16.gmra.mrb[0].mxu0 %v689
  %v725 = vpop.f32.mrb[0].mxu0
  %v726 = vadd.f32 0.0, %v725
  %v727 = vpop.f32.mrb[0].mxu0
  %v728 = vpop.f32.mrb[0].mxu0
  %v729 = vadd.f32 0.0, %v728
  %v730 = vpop.f32.mrb[0].mxu0
  %731 = vdwg.mxu0
  %v734 = vunpack.c.l.b16 %v95
  %v735 = vunpack.c.l.b16 %v96
  %v736 = vpack.c.b16 %v735, %v734
  %v738 = vsel %vm550, %v736, 0
  %740 = vmatprep.subr.bf16.mxu0 0
  %741 = vmatpush1.bf16.msra.mxu0 %v403
  %742 = vmatprep.subr.bf16.mxu0 0
  %743 = vmatpush1.bf16.msra.mxu0 %v404
  %744 = vmatprep.subr.bf16.mxu0 0
  %745 = vmatpush1.bf16.msra.mxu0 %v405
  %746 = vmatprep.subr.bf16.mxu0 0
  %747 = vmatpush1.bf16.msra.mxu0 %v406
  %748 = vmatprep.subr.bf16.mxu0 0
  %749 = vmatpush1.bf16.msra.mxu0 0
  %750 = vmatprep.subr.bf16.mxu0 0
  %751 = vmatpush1.bf16.msra.mxu0 0
  %752 = vmatprep.subr.bf16.mxu0 0
  %753 = vmatpush1.bf16.msra.mxu0 0
  %754 = vmatprep.subr.bf16.mxu0 0
  %755 = vmatpush1.bf16.msra.mxu0 0
  %756 = vmatprep.subr.bf16.mxu0 0
  %757 = vmatpush1.bf16.msra.mxu0 0
  %758 = vmatprep.subr.bf16.mxu0 0
  %759 = vmatpush1.bf16.msra.mxu0 0
  %760 = vmatprep.subr.bf16.mxu0 0
  %761 = vmatpush1.bf16.msra.mxu0 0
  %762 = vmatprep.subr.bf16.mxu0 0
  %763 = vmatpush1.bf16.msra.mxu0 0
  %764 = vmatprep.subr.bf16.mxu0 0
  %765 = vmatpush1.bf16.msra.mxu0 0
  %766 = vmatprep.subr.bf16.mxu0 0
  %767 = vmatpush1.bf16.msra.mxu0 0
  %768 = vmatprep.subr.bf16.mxu0 0
  %769 = vmatpush1.bf16.msra.mxu0 0
  %770 = vmatprep.subr.bf16.mxu0 0
  %771 = vmatpush1.bf16.msra.mxu0 0
  %772 = vmatprep.mubr.bf16.mxu0 0
  %773 = vmatmul.mubr.bf16.gmra.mrb[0].mxu0 %v738
  %v774 = vpop.f32.mrb[0].mxu0
  %v775 = vadd.f32 %v726, %v774
  %v776 = vpop.f32.mrb[0].mxu0
  %v777 = vpop.f32.mrb[0].mxu0
  %v778 = vadd.f32 %v729, %v777
  %v779 = vpop.f32.mrb[0].mxu0
  %780 = vdwg.mxu0
  %v781 = vmul.f32 %v775, %v74
  %v782 = vmul.f32 %v778, %v79
  %v783 = vsel %vm248, %v781, 0.0
  %v784 = vsel %vm248, %v782, 0.0
  %v785 = vadd.f32 %v783, %v784
  %v786 = vrot.slane %v785, 4
  %v787 = vadd.f32 %v785, %v786
  %v788 = vrot.slane %v787, 2
  %v789 = vadd.f32 %v787, %v788
  %v790 = vrot.slane %v789, 1
  %v791 = vadd.f32 %v789, %v790
  %v792 = vrcp.pop 16.0
  %v793 = vmul.f32 %v791, %v792
  %v794 = vsub.f32 %v781, %v793
  %v795 = vsub.f32 %v782, %v793
  %v796 = vmul.f32 %v794, %v794
  %v797 = vmul.f32 %v795, %v795
  %v798 = vsel %vm248, %v796, 0.0
  %v799 = vsel %vm248, %v797, 0.0
  %v800 = vadd.f32 %v798, %v799
  %v801 = vrot.slane %v800, 4
  %v802 = vadd.f32 %v800, %v801
  %v803 = vrot.slane %v802, 2
  %v804 = vadd.f32 %v802, %v803
  %v805 = vrot.slane %v804, 1
  %v806 = vadd.f32 %v804, %v805
  %v807 = vmul.f32 %v806, %v792
  %v808 = vadd.f32 %v807, 1e-05
  %v809 = vrsqrt.pop %v808
  %v810 = vmul.f32 %v54, %v809
  %v812 = vlaneseq
  %v813 = vshrl.u32 %v812, 7
  %v814 = vsub.s32 0, %v813
  %v815 = vrot.slane %v810, %v814
  %v817 = vmul.f32 %v781, %v815
  %v818 = vmul.f32 %v782, %v815
  %v819 = vmul.f32 %v793, %v810
  %v820 = vsub.f32 %v55, %v819
  %v822 = vlaneseq
  %v823 = vshrl.u32 %v822, 7
  %v824 = vsub.s32 0, %v823
  %v825 = vrot.slane %v820, %v824
  %v827 = vadd.f32 %v817, %v825
  %v828 = vadd.f32 %v818, %v825
  %v830 = vsel %vm248, %v131, 0
  %v833 = vsel %vm248, %v132, 0
  %835 = vmatprep.subr.mxu0 0.0
  %836 = vmatpush1.msra.mxu0 %v60
  %837 = vmatprep.subr.mxu0 0.0
  %838 = vmatpush1.msra.mxu0 %v61
  %839 = vmatprep.subr.mxu0 0.0
  %840 = vmatpush1.msra.mxu0 %v62
  %841 = vmatprep.subr.mxu0 0.0
  %842 = vmatpush1.msra.mxu0 %v63
  %843 = vmatprep.subr.mxu0 0.0
  %844 = vmatpush1.msra.mxu0 0.0
  %845 = vmatprep.subr.mxu0 0.0
  %846 = vmatpush1.msra.mxu0 0.0
  %847 = vmatprep.subr.mxu0 0.0
  %848 = vmatpush1.msra.mxu0 0.0
  %849 = vmatprep.subr.mxu0 0.0
  %850 = vmatpush1.msra.mxu0 0.0
  %851 = vmatprep.subr.mxu0 0.0
  %852 = vmatpush1.msra.mxu0 0.0
  %853 = vmatprep.subr.mxu0 0.0
  %854 = vmatpush1.msra.mxu0 0.0
  %855 = vmatprep.subr.mxu0 0.0
  %856 = vmatpush1.msra.mxu0 0.0
  %857 = vmatprep.subr.mxu0 0.0
  %858 = vmatpush1.msra.mxu0 0.0
  %859 = vmatprep.subr.mxu0 0.0
  %860 = vmatpush1.msra.mxu0 0.0
  %861 = vmatprep.subr.mxu0 0.0
  %862 = vmatpush1.msra.mxu0 0.0
  %863 = vmatprep.subr.mxu0 0.0
  %864 = vmatpush1.msra.mxu0 0.0
  %865 = vmatprep.subr.mxu0 0.0
  %866 = vmatpush1.msra.mxu0 0.0
  %867 = vmatprep.subr.mxu0 0.0
  %868 = vmatpush1.msra.mxu0 0.0
  %869 = vmatprep.subr.mxu0 0.0
  %870 = vmatpush1.msra.mxu0 0.0
  %871 = vmatprep.subr.mxu0 0.0
  %872 = vmatpush1.msra.mxu0 0.0
  %873 = vmatprep.subr.mxu0 0.0
  %874 = vmatpush1.msra.mxu0 0.0
  %875 = vmatprep.subr.mxu0 0.0
  %876 = vmatpush1.msra.mxu0 0.0
  %877 = vmatprep.subr.mxu0 0.0
  %878 = vmatpush1.msra.mxu0 0.0
  %879 = vmatprep.subr.mxu0 0.0
  %880 = vmatpush1.msra.mxu0 0.0
  %881 = vmatprep.subr.mxu0 0.0
  %882 = vmatpush1.msra.mxu0 0.0
  %883 = vmatprep.subr.mxu0 0.0
  %884 = vmatpush1.msra.mxu0 0.0
  %885 = vmatprep.subr.mxu0 0.0
  %886 = vmatpush1.msra.mxu0 0.0
  %887 = vmatprep.subr.mxu0 0.0
  %888 = vmatpush1.msra.mxu0 0.0
  %889 = vmatprep.subr.mxu0 0.0
  %890 = vmatpush1.msra.mxu0 0.0
  %891 = vmatprep.subr.mxu0 0.0
  %892 = vmatpush1.msra.mxu0 0.0
  %893 = vmatprep.subr.mxu0 0.0
  %894 = vmatpush1.msra.mxu0 0.0
  %895 = vmatprep.subr.mxu0 0.0
  %896 = vmatpush1.msra.mxu0 0.0
  %897 = vmatprep.subr.mxu0 0.0
  %898 = vmatpush1.msra.mxu0 0.0
  %899 = vmatprep.mubr.f32.mxu0 0.0
  %900 = vmatmul.mubr.f32.gmra.mrb[0].mxu0 %v830
  %v901 = vpop.f32.mrb[0].mxu0
  %v902 = vadd.f32 0.0, %v901
  %v903 = vpop.f32.mrb[0].mxu0
  %904 = vmatprep.mubr.f32.mxu0 0.0
  %905 = vmatmul.mubr.f32.gmra.mrb[0].mxu0 %v833
  %v906 = vpop.f32.mrb[0].mxu0
  %v907 = vadd.f32 0.0, %v906
  %v908 = vpop.f32.mrb[0].mxu0
  %909 = vdwg.mxu0
  %v911 = vsel %vm248, %v827, 0
  %v914 = vsel %vm248, %v828, 0
  %916 = vmatprep.subr.mxu0 0.0
  %917 = vmatpush1.msra.mxu0 %v56
  %918 = vmatprep.subr.mxu0 0.0
  %919 = vmatpush1.msra.mxu0 %v57
  %920 = vmatprep.subr.mxu0 0.0
  %921 = vmatpush1.msra.mxu0 %v58
  %922 = vmatprep.subr.mxu0 0.0
  %923 = vmatpush1.msra.mxu0 %v59
  %924 = vmatprep.subr.mxu0 0.0
  %925 = vmatpush1.msra.mxu0 0.0
  %926 = vmatprep.subr.mxu0 0.0
  %927 = vmatpush1.msra.mxu0 0.0
  %928 = vmatprep.subr.mxu0 0.0
  %929 = vmatpush1.msra.mxu0 0.0
  %930 = vmatprep.subr.mxu0 0.0
  %931 = vmatpush1.msra.mxu0 0.0
  %932 = vmatprep.subr.mxu0 0.0
  %933 = vmatpush1.msra.mxu0 0.0
  %934 = vmatprep.subr.mxu0 0.0
  %935 = vmatpush1.msra.mxu0 0.0
  %936 = vmatprep.subr.mxu0 0.0
  %937 = vmatpush1.msra.mxu0 0.0
  %938 = vmatprep.subr.mxu0 0.0
  %939 = vmatpush1.msra.mxu0 0.0
  %940 = vmatprep.subr.mxu0 0.0
  %941 = vmatpush1.msra.mxu0 0.0
  %942 = vmatprep.subr.mxu0 0.0
  %943 = vmatpush1.msra.mxu0 0.0
  %944 = vmatprep.subr.mxu0 0.0
  %945 = vmatpush1.msra.mxu0 0.0
  %946 = vmatprep.subr.mxu0 0.0
  %947 = vmatpush1.msra.mxu0 0.0
  %948 = vmatprep.subr.mxu0 0.0
  %949 = vmatpush1.msra.mxu0 0.0
  %950 = vmatprep.subr.mxu0 0.0
  %951 = vmatpush1.msra.mxu0 0.0
  %952 = vmatprep.subr.mxu0 0.0
  %953 = vmatpush1.msra.mxu0 0.0
  %954 = vmatprep.subr.mxu0 0.0
  %955 = vmatpush1.msra.mxu0 0.0
  %956 = vmatprep.subr.mxu0 0.0
  %957 = vmatpush1.msra.mxu0 0.0
  %958 = vmatprep.subr.mxu0 0.0
  %959 = vmatpush1.msra.mxu0 0.0
  %960 = vmatprep.subr.mxu0 0.0
  %961 = vmatpush1.msra.mxu0 0.0
  %962 = vmatprep.subr.mxu0 0.0
  %963 = vmatpush1.msra.mxu0 0.0
  %964 = vmatprep.subr.mxu0 0.0
  %965 = vmatpush1.msra.mxu0 0.0
  %966 = vmatprep.subr.mxu0 0.0
  %967 = vmatpush1.msra.mxu0 0.0
  %968 = vmatprep.subr.mxu0 0.0
  %969 = vmatpush1.msra.mxu0 0.0
  %970 = vmatprep.subr.mxu0 0.0
  %971 = vmatpush1.msra.mxu0 0.0
  %972 = vmatprep.subr.mxu0 0.0
  %973 = vmatpush1.msra.mxu0 0.0
  %974 = vmatprep.subr.mxu0 0.0
  %975 = vmatpush1.msra.mxu0 0.0
  %976 = vmatprep.subr.mxu0 0.0
  %977 = vmatpush1.msra.mxu0 0.0
  %978 = vmatprep.subr.mxu0 0.0
  %979 = vmatpush1.msra.mxu0 0.0
  %980 = vmatprep.mubr.f32.mxu0 0.0
  %981 = vmatmul.mubr.f32.gmra.mrb[0].mxu0 %v911
  %v982 = vpop.f32.mrb[0].mxu0
  %v983 = vadd.f32 %v902, %v982
  %v984 = vpop.f32.mrb[0].mxu0
  %985 = vmatprep.mubr.f32.mxu0 0.0
  %986 = vmatmul.mubr.f32.gmra.mrb[0].mxu0 %v914
  %v987 = vpop.f32.mrb[0].mxu0
  %v988 = vadd.f32 %v907, %v987
  %v989 = vpop.f32.mrb[0].mxu0
  %990 = vdwg.mxu0
  %v991 = vadd.f32 %v983, %v85
  %v992 = vadd.f32 %v988, %v85
  %v993 = vxor.u32 %v991, 2147483648
  %v994 = vxor.u32 %v992, 2147483648
  %v995 = vmul.f32 %v993, 1.442695
  %v996 = vpow.pop %v995
  %v997 = vmul.f32 %v994, 1.442695
  %v998 = vpow.pop %v997
  %v999 = vadd.f32 %v996, 1.0
  %v1000 = vadd.f32 %v998, 1.0
  %v1001 = vrcp.pop %v999
  %v1002 = vmul.f32 1.0, %v1001
  %v1003 = vrcp.pop %v1000
  %v1004 = vmul.f32 1.0, %v1003
  %v1005 = vtanh.pop %v991
  %v1006 = vtanh.pop %v992
  %v1007 = vmul.f32 %v1002, 0.0
  %v1008 = vmul.f32 %v1004, 0.0
  %1011 = vrot.lane.b32.xlu0 %v1005, 64
  %v1012 = vpop.permute.xlu0 %1011
  %1013 = vrot.lane.b32.xlu0 %v1006, 64
  %v1014 = vpop.permute.xlu0 %1013
  %v1017 = vmul.f32 %v1002, %v1012
  %v1018 = vmul.f32 %v1004, %v1014
  %1021 = vrot.lane.b32.xlu0 %v1017, 32
  %v1022 = vpop.permute.xlu0 %1021
  %1023 = vrot.lane.b32.xlu0 %v1018, 32
  %v1024 = vpop.permute.xlu0 %1023
  %v1027 = vadd.f32 %v1007, %v1022
  %v1028 = vadd.f32 %v1008, %v1024
  %v1029 = vtanh.pop %v1027
  %v1030 = vtanh.pop %v1028
  %1033 = vrot.lane.b32.xlu0 %v1029, 64
  %v1034 = vpop.permute.xlu0 %1033
  %1035 = vrot.lane.b32.xlu0 %v1030, 64
  %v1036 = vpop.permute.xlu0 %1035
  %v1039 = vmul.f32 %v1002, %v1034
  %v1040 = vmul.f32 %v1004, %v1036
  %v1041 = vpack.c.bf16 %v1040, %v1039
  %1043 = vrot.lane.b32.xlu0 %v1041, 32
  %v1044 = vpop.permute.xlu0 %1043
  %1046 = vmatprep.subr.bf16.mxu0 0
  %1047 = vmatpush1.bf16.msra.mxu0 %v1044
  %1048 = vmatprep.subr.bf16.mxu0 0
  %1049 = vmatpush1.bf16.msra.mxu0 0
  %1050 = vmatprep.subr.bf16.mxu0 0
  %1051 = vmatpush1.bf16.msra.mxu0 0
  %1052 = vmatprep.subr.bf16.mxu0 0
  %1053 = vmatpush1.bf16.msra.mxu0 0
  %1054 = vmatprep.subr.bf16.mxu0 0
  %1055 = vmatpush1.bf16.msra.mxu0 0
  %1056 = vmatprep.subr.bf16.mxu0 0
  %1057 = vmatpush1.bf16.msra.mxu0 0
  %1058 = vmatprep.subr.bf16.mxu0 0
  %1059 = vmatpush1.bf16.msra.mxu0 0
  %1060 = vmatprep.subr.bf16.mxu0 0
  %1061 = vmatpush1.bf16.msra.mxu0 0
  %1062 = vmatprep.subr.bf16.mxu0 0
  %1063 = vmatpush1.bf16.msra.mxu0 0
  %1064 = vmatprep.subr.bf16.mxu0 0
  %1065 = vmatpush1.bf16.msra.mxu0 0
  %1066 = vmatprep.subr.bf16.mxu0 0
  %1067 = vmatpush1.bf16.msra.mxu0 0
  %1068 = vmatprep.subr.bf16.mxu0 0
  %1069 = vmatpush1.bf16.msra.mxu0 0
  %1070 = vmatprep.subr.bf16.mxu0 0
  %1071 = vmatpush1.bf16.msra.mxu0 0
  %1072 = vmatprep.subr.bf16.mxu0 0
  %1073 = vmatpush1.bf16.msra.mxu0 0
  %1074 = vmatprep.subr.bf16.mxu0 0
  %1075 = vmatpush1.bf16.msra.mxu0 0
  %1076 = vmatprep.subr.bf16.mxu0 0
  %1077 = vmatpush1.bf16.msra.mxu0 0
  %1078 = vmatprep.mubr.bf16.mxu0 0
  %1079 = vmatmul.mubr.bf16.gmra.mrb[0].mxu0 %v156
  %v1080 = vpop.f32.mrb[0].mxu0
  %v1081 = vadd.f32 0.0, %v1080
  %v1082 = vpop.f32.mrb[0].mxu0
  %v1083 = vpop.f32.mrb[0].mxu0
  %v1084 = vadd.f32 0.0, %v1083
  %v1085 = vpop.f32.mrb[0].mxu0
  %1086 = vmatprep.mubr.bf16.mxu0 0
  %1087 = vmatmul.mubr.bf16.gmra.mrb[0].mxu0 %v159
  %v1088 = vpop.f32.mrb[0].mxu0
  %v1089 = vadd.f32 0.0, %v1088
  %v1090 = vpop.f32.mrb[0].mxu0
  %v1091 = vpop.f32.mrb[0].mxu0
  %v1092 = vadd.f32 0.0, %v1091
  %v1093 = vpop.f32.mrb[0].mxu0
  %1094 = vmatprep.mubr.bf16.mxu0 0
  %1095 = vmatmul.mubr.bf16.gmra.mrb[0].mxu0 %v162
  %v1096 = vpop.f32.mrb[0].mxu0
  %v1097 = vadd.f32 0.0, %v1096
  %v1098 = vpop.f32.mrb[0].mxu0
  %v1099 = vpop.f32.mrb[0].mxu0
  %v1100 = vadd.f32 0.0, %v1099
  %v1101 = vpop.f32.mrb[0].mxu0
  %1102 = vmatprep.mubr.bf16.mxu0 0
  %1103 = vmatmul.mubr.bf16.gmra.mrb[0].mxu0 %v165
  %v1104 = vpop.f32.mrb[0].mxu0
  %v1105 = vadd.f32 0.0, %v1104
  %v1106 = vpop.f32.mrb[0].mxu0
  %v1107 = vpop.f32.mrb[0].mxu0
  %v1108 = vadd.f32 0.0, %v1107
  %v1109 = vpop.f32.mrb[0].mxu0
  %1110 = vdwg.mxu0
  %v1111 = vpack.c.bf16 %v1084, %v1081
  %v1112 = vpack.c.bf16 %v1092, %v1089
  %v1113 = vpack.c.bf16 %v1100, %v1097
  %v1114 = vpack.c.bf16 %v1108, %v1105
  %v1116 = vsel %vm248, %v1113, 0
  %v1119 = vsel %vm248, %v1114, 0
  %v1122 = vsel %vm248, %v1111, 0
  %v1125 = vsel %vm248, %v1112, 0
  %1127 = vmatprep.subr.bf16.mxu0 0
  %1128 = vmatpush1.bf16.msra.mxu0 %v244
  %1129 = vmatprep.subr.bf16.mxu0 0
  %1130 = vmatpush1.bf16.msra.mxu0 %v245
  %1131 = vmatprep.subr.bf16.mxu0 0
  %1132 = vmatpush1.bf16.msra.mxu0 0
  %1133 = vmatprep.subr.bf16.mxu0 0
  %1134 = vmatpush1.bf16.msra.mxu0 0
  %1135 = vmatprep.subr.bf16.mxu0 0
  %1136 = vmatpush1.bf16.msra.mxu0 0
  %1137 = vmatprep.subr.bf16.mxu0 0
  %1138 = vmatpush1.bf16.msra.mxu0 0
  %1139 = vmatprep.subr.bf16.mxu0 0
  %1140 = vmatpush1.bf16.msra.mxu0 0
  %1141 = vmatprep.subr.bf16.mxu0 0
  %1142 = vmatpush1.bf16.msra.mxu0 0
  %1143 = vmatprep.subr.bf16.mxu0 0
  %1144 = vmatpush1.bf16.msra.mxu0 0
  %1145 = vmatprep.subr.bf16.mxu0 0
  %1146 = vmatpush1.bf16.msra.mxu0 0
  %1147 = vmatprep.subr.bf16.mxu0 0
  %1148 = vmatpush1.bf16.msra.mxu0 0
  %1149 = vmatprep.subr.bf16.mxu0 0
  %1150 = vmatpush1.bf16.msra.mxu0 0
  %1151 = vmatprep.subr.bf16.mxu0 0
  %1152 = vmatpush1.bf16.msra.mxu0 0
  %1153 = vmatprep.subr.bf16.mxu0 0
  %1154 = vmatpush1.bf16.msra.mxu0 0
  %1155 = vmatprep.subr.bf16.mxu0 0
  %1156 = vmatpush1.bf16.msra.mxu0 0
  %1157 = vmatprep.subr.bf16.mxu0 0
  %1158 = vmatpush1.bf16.msra.mxu0 0
  %1159 = vmatprep.mubr.bf16.mxu0 0
  %1160 = vmatmul.mubr.bf16.gmra.mrb[0].mxu0 %v1116
  %v1161 = vpop.f32.mrb[0].mxu0
  %v1162 = vadd.f32 0.0, %v1161
  %v1163 = vpop.f32.mrb[0].mxu0
  %v1164 = vpop.f32.mrb[0].mxu0
  %v1165 = vadd.f32 0.0, %v1164
  %v1166 = vpop.f32.mrb[0].mxu0
  %1167 = vmatprep.mubr.bf16.mxu0 0
  %1168 = vmatmul.mubr.bf16.gmra.mrb[0].mxu0 %v1119
  %v1169 = vpop.f32.mrb[0].mxu0
  %v1170 = vadd.f32 0.0, %v1169
  %v1171 = vpop.f32.mrb[0].mxu0
  %v1172 = vpop.f32.mrb[0].mxu0
  %v1173 = vadd.f32 0.0, %v1172
  %v1174 = vpop.f32.mrb[0].mxu0
  %1175 = vmatprep.mubr.bf16.mxu0 0
  %1176 = vmatmul.mubr.bf16.gmra.mrb[0].mxu0 %v1122
  %v1177 = vpop.f32.mrb[0].mxu0
  %v1178 = vadd.f32 0.0, %v1177
  %v1179 = vpop.f32.mrb[0].mxu0
  %v1180 = vpop.f32.mrb[0].mxu0
  %v1181 = vadd.f32 0.0, %v1180
  %v1182 = vpop.f32.mrb[0].mxu0
  %1183 = vmatprep.mubr.bf16.mxu0 0
  %1184 = vmatmul.mubr.bf16.gmra.mrb[0].mxu0 %v1125
  %v1185 = vpop.f32.mrb[0].mxu0
  %v1186 = vadd.f32 0.0, %v1185
  %v1187 = vpop.f32.mrb[0].mxu0
  %v1188 = vpop.f32.mrb[0].mxu0
  %v1189 = vadd.f32 0.0, %v1188
  %v1190 = vpop.f32.mrb[0].mxu0
  %1191 = vdwg.mxu0
  %1192 = vmatprep.subr.bf16.mxu0 0
  %1193 = vmatpush1.bf16.msra.mxu0 %v334
  %1194 = vmatprep.subr.bf16.mxu0 0
  %1195 = vmatpush1.bf16.msra.mxu0 %v335
  %1196 = vmatprep.subr.bf16.mxu0 0
  %1197 = vmatpush1.bf16.msra.mxu0 0
  %1198 = vmatprep.subr.bf16.mxu0 0
  %1199 = vmatpush1.bf16.msra.mxu0 0
  %1200 = vmatprep.subr.bf16.mxu0 0
  %1201 = vmatpush1.bf16.msra.mxu0 0
  %1202 = vmatprep.subr.bf16.mxu0 0
  %1203 = vmatpush1.bf16.msra.mxu0 0
  %1204 = vmatprep.subr.bf16.mxu0 0
  %1205 = vmatpush1.bf16.msra.mxu0 0
  %1206 = vmatprep.subr.bf16.mxu0 0
  %1207 = vmatpush1.bf16.msra.mxu0 0
  %1208 = vmatprep.subr.bf16.mxu0 0
  %1209 = vmatpush1.bf16.msra.mxu0 0
  %1210 = vmatprep.subr.bf16.mxu0 0
  %1211 = vmatpush1.bf16.msra.mxu0 0
  %1212 = vmatprep.subr.bf16.mxu0 0
  %1213 = vmatpush1.bf16.msra.mxu0 0
  %1214 = vmatprep.subr.bf16.mxu0 0
  %1215 = vmatpush1.bf16.msra.mxu0 0
  %1216 = vmatprep.subr.bf16.mxu0 0
  %1217 = vmatpush1.bf16.msra.mxu0 0
  %1218 = vmatprep.subr.bf16.mxu0 0
  %1219 = vmatpush1.bf16.msra.mxu0 0
  %1220 = vmatprep.subr.bf16.mxu0 0
  %1221 = vmatpush1.bf16.msra.mxu0 0
  %1222 = vmatprep.subr.bf16.mxu0 0
  %1223 = vmatpush1.bf16.msra.mxu0 0
  %1224 = vmatprep.mubr.bf16.mxu0 0
  %1225 = vmatmul.mubr.bf16.gmra.mrb[0].mxu0 %v1122
  %v1226 = vpop.f32.mrb[0].mxu0
  %v1227 = vadd.f32 %v1162, %v1226
  %v1228 = vpop.f32.mrb[0].mxu0
  %v1229 = vpop.f32.mrb[0].mxu0
  %v1230 = vadd.f32 %v1165, %v1229
  %v1231 = vpop.f32.mrb[0].mxu0
  %1232 = vmatprep.mubr.bf16.mxu0 0
  %1233 = vmatmul.mubr.bf16.gmra.mrb[0].mxu0 %v1125
  %v1234 = vpop.f32.mrb[0].mxu0
  %v1235 = vadd.f32 %v1170, %v1234
  %v1236 = vpop.f32.mrb[0].mxu0
  %v1237 = vpop.f32.mrb[0].mxu0
  %v1238 = vadd.f32 %v1173, %v1237
  %v1239 = vpop.f32.mrb[0].mxu0
  %1240 = vmatprep.mubr.bf16.mxu0 0
  %1241 = vmatmul.mubr.bf16.gmra.mrb[0].mxu0 %v1116
  %v1242 = vpop.f32.mrb[0].mxu0
  %v1243 = vadd.f32 %v1178, %v1242
  %v1244 = vpop.f32.mrb[0].mxu0
  %v1245 = vpop.f32.mrb[0].mxu0
  %v1246 = vadd.f32 %v1181, %v1245
  %v1247 = vpop.f32.mrb[0].mxu0
  %1248 = vmatprep.mubr.bf16.mxu0 0
  %1249 = vmatmul.mubr.bf16.gmra.mrb[0].mxu0 %v1119
  %v1250 = vpop.f32.mrb[0].mxu0
  %v1251 = vadd.f32 %v1186, %v1250
  %v1252 = vpop.f32.mrb[0].mxu0
  %v1253 = vpop.f32.mrb[0].mxu0
  %v1254 = vadd.f32 %v1189, %v1253
  %v1255 = vpop.f32.mrb[0].mxu0
  %1256 = vdwg.mxu0
  %v1257 = vpack.c.bf16 %v1230, %v1227
  %v1258 = vpack.c.bf16 %v1238, %v1235
  %v1259 = vpack.c.bf16 %v1246, %v1243
  %v1260 = vpack.c.bf16 %v1254, %v1251
  %1261 = vmatprep.subr.bf16.mxu0 0
  %1262 = vmatpush1.bf16.msra.mxu0 %v1044
  %1263 = vmatprep.subr.bf16.mxu0 0
  %1264 = vmatpush1.bf16.msra.mxu0 0
  %1265 = vmatprep.subr.bf16.mxu0 0
  %1266 = vmatpush1.bf16.msra.mxu0 0
  %1267 = vmatprep.subr.bf16.mxu0 0
  %1268 = vmatpush1.bf16.msra.mxu0 0
  %1269 = vmatprep.subr.bf16.mxu0 0
  %1270 = vmatpush1.bf16.msra.mxu0 0
  %1271 = vmatprep.subr.bf16.mxu0 0
  %1272 = vmatpush1.bf16.msra.mxu0 0
  %1273 = vmatprep.subr.bf16.mxu0 0
  %1274 = vmatpush1.bf16.msra.mxu0 0
  %1275 = vmatprep.subr.bf16.mxu0 0
  %1276 = vmatpush1.bf16.msra.mxu0 0
  %1277 = vmatprep.subr.bf16.mxu0 0
  %1278 = vmatpush1.bf16.msra.mxu0 0
  %1279 = vmatprep.subr.bf16.mxu0 0
  %1280 = vmatpush1.bf16.msra.mxu0 0
  %1281 = vmatprep.subr.bf16.mxu0 0
  %1282 = vmatpush1.bf16.msra.mxu0 0
  %1283 = vmatprep.subr.bf16.mxu0 0
  %1284 = vmatpush1.bf16.msra.mxu0 0
  %1285 = vmatprep.subr.bf16.mxu0 0
  %1286 = vmatpush1.bf16.msra.mxu0 0
  %1287 = vmatprep.subr.bf16.mxu0 0
  %1288 = vmatpush1.bf16.msra.mxu0 0
  %1289 = vmatprep.subr.bf16.mxu0 0
  %1290 = vmatpush1.bf16.msra.mxu0 0
  %1291 = vmatprep.subr.bf16.mxu0 0
  %1292 = vmatpush1.bf16.msra.mxu0 0
  %1293 = vmatprep.mubr.bf16.mxu0 0
  %1294 = vmatmul.mubr.bf16.gmra.mrb[0].mxu0 %v428
  %v1295 = vpop.f32.mrb[0].mxu0
  %v1296 = vadd.f32 0.0, %v1295
  %v1297 = vpop.f32.mrb[0].mxu0
  %v1298 = vpop.f32.mrb[0].mxu0
  %v1299 = vadd.f32 0.0, %v1298
  %v1300 = vpop.f32.mrb[0].mxu0
  %1301 = vmatprep.mubr.bf16.mxu0 0
  %1302 = vmatmul.mubr.bf16.gmra.mrb[0].mxu0 %v431
  %v1303 = vpop.f32.mrb[0].mxu0
  %v1304 = vadd.f32 0.0, %v1303
  %v1305 = vpop.f32.mrb[0].mxu0
  %v1306 = vpop.f32.mrb[0].mxu0
  %v1307 = vadd.f32 0.0, %v1306
  %v1308 = vpop.f32.mrb[0].mxu0
  %1309 = vmatprep.mubr.bf16.mxu0 0
  %1310 = vmatmul.mubr.bf16.gmra.mrb[0].mxu0 %v434
  %v1311 = vpop.f32.mrb[0].mxu0
  %v1312 = vadd.f32 0.0, %v1311
  %v1313 = vpop.f32.mrb[0].mxu0
  %v1314 = vpop.f32.mrb[0].mxu0
  %v1315 = vadd.f32 0.0, %v1314
  %v1316 = vpop.f32.mrb[0].mxu0
  %1317 = vmatprep.mubr.bf16.mxu0 0
  %1318 = vmatmul.mubr.bf16.gmra.mrb[0].mxu0 %v437
  %v1319 = vpop.f32.mrb[0].mxu0
  %v1320 = vadd.f32 0.0, %v1319
  %v1321 = vpop.f32.mrb[0].mxu0
  %v1322 = vpop.f32.mrb[0].mxu0
  %v1323 = vadd.f32 0.0, %v1322
  %v1324 = vpop.f32.mrb[0].mxu0
  %1325 = vdwg.mxu0
  %1330 = vrot.lane.b32.xlu0 %v1312, 32
  %v1331 = vpop.permute.xlu0 %1330
  %1332 = vrot.lane.b32.xlu0 %v1315, 32
  %v1333 = vpop.permute.xlu0 %1332
  %1334 = vrot.lane.b32.xlu0 %v1320, 32
  %v1335 = vpop.permute.xlu0 %1334
  %1336 = vrot.lane.b32.xlu0 %v1323, 32
  %v1337 = vpop.permute.xlu0 %1336
  %v1342 = vsel %vm248, %v1296, %v1331
  %v1343 = vsel %vm248, %v1299, %v1333
  %v1344 = vsel %vm248, %v1304, %v1335
  %v1345 = vsel %vm248, %v1307, %v1337
  %v1346 = vpack.c.bf16 %v1343, %v1342
  %v1347 = vpack.c.bf16 %v1345, %v1344
  %v1349 = vsel %vm550, %v1346, 0
  %v1352 = vsel %vm550, %v1347, 0
  %1354 = vmatprep.subr.bf16.mxu0 0
  %1355 = vmatpush1.bf16.msra.mxu0 %v542
  %1356 = vmatprep.subr.bf16.mxu0 0
  %1357 = vmatpush1.bf16.msra.mxu0 %v543
  %1358 = vmatprep.subr.bf16.mxu0 0
  %1359 = vmatpush1.bf16.msra.mxu0 %v544
  %1360 = vmatprep.subr.bf16.mxu0 0
  %1361 = vmatpush1.bf16.msra.mxu0 %v545
  %1362 = vmatprep.subr.bf16.mxu0 0
  %1363 = vmatpush1.bf16.msra.mxu0 0
  %1364 = vmatprep.subr.bf16.mxu0 0
  %1365 = vmatpush1.bf16.msra.mxu0 0
  %1366 = vmatprep.subr.bf16.mxu0 0
  %1367 = vmatpush1.bf16.msra.mxu0 0
  %1368 = vmatprep.subr.bf16.mxu0 0
  %1369 = vmatpush1.bf16.msra.mxu0 0
  %1370 = vmatprep.subr.bf16.mxu0 0
  %1371 = vmatpush1.bf16.msra.mxu0 0
  %1372 = vmatprep.subr.bf16.mxu0 0
  %1373 = vmatpush1.bf16.msra.mxu0 0
  %1374 = vmatprep.subr.bf16.mxu0 0
  %1375 = vmatpush1.bf16.msra.mxu0 0
  %1376 = vmatprep.subr.bf16.mxu0 0
  %1377 = vmatpush1.bf16.msra.mxu0 0
  %1378 = vmatprep.subr.bf16.mxu0 0
  %1379 = vmatpush1.bf16.msra.mxu0 0
  %1380 = vmatprep.subr.bf16.mxu0 0
  %1381 = vmatpush1.bf16.msra.mxu0 0
  %1382 = vmatprep.subr.bf16.mxu0 0
  %1383 = vmatpush1.bf16.msra.mxu0 0
  %1384 = vmatprep.subr.bf16.mxu0 0
  %1385 = vmatpush1.bf16.msra.mxu0 0
  %1386 = vmatprep.mubr.bf16.mxu0 0
  %1387 = vmatmul.mubr.bf16.gmra.mrb[0].mxu0 %v1349
  %v1388 = vpop.f32.mrb[0].mxu0
  %v1389 = vadd.f32 0.0, %v1388
  %v1390 = vpop.f32.mrb[0].mxu0
  %v1391 = vpop.f32.mrb[0].mxu0
  %v1392 = vadd.f32 0.0, %v1391
  %v1393 = vpop.f32.mrb[0].mxu0
  %1394 = vmatprep.mubr.bf16.mxu0 0
  %1395 = vmatmul.mubr.bf16.gmra.mrb[0].mxu0 %v1352
  %v1396 = vpop.f32.mrb[0].mxu0
  %v1397 = vadd.f32 0.0, %v1396
  %v1398 = vpop.f32.mrb[0].mxu0
  %v1399 = vpop.f32.mrb[0].mxu0
  %v1400 = vadd.f32 0.0, %v1399
  %v1401 = vpop.f32.mrb[0].mxu0
  %1402 = vdwg.mxu0
  %1403 = vmatprep.subr.bf16.mxu0 0
  %1404 = vmatpush1.bf16.msra.mxu0 %v622
  %1405 = vmatprep.subr.bf16.mxu0 0
  %1406 = vmatpush1.bf16.msra.mxu0 %v623
  %1407 = vmatprep.subr.bf16.mxu0 0
  %1408 = vmatpush1.bf16.msra.mxu0 %v624
  %1409 = vmatprep.subr.bf16.mxu0 0
  %1410 = vmatpush1.bf16.msra.mxu0 %v625
  %1411 = vmatprep.subr.bf16.mxu0 0
  %1412 = vmatpush1.bf16.msra.mxu0 0
  %1413 = vmatprep.subr.bf16.mxu0 0
  %1414 = vmatpush1.bf16.msra.mxu0 0
  %1415 = vmatprep.subr.bf16.mxu0 0
  %1416 = vmatpush1.bf16.msra.mxu0 0
  %1417 = vmatprep.subr.bf16.mxu0 0
  %1418 = vmatpush1.bf16.msra.mxu0 0
  %1419 = vmatprep.subr.bf16.mxu0 0
  %1420 = vmatpush1.bf16.msra.mxu0 0
  %1421 = vmatprep.subr.bf16.mxu0 0
  %1422 = vmatpush1.bf16.msra.mxu0 0
  %1423 = vmatprep.subr.bf16.mxu0 0
  %1424 = vmatpush1.bf16.msra.mxu0 0
  %1425 = vmatprep.subr.bf16.mxu0 0
  %1426 = vmatpush1.bf16.msra.mxu0 0
  %1427 = vmatprep.subr.bf16.mxu0 0
  %1428 = vmatpush1.bf16.msra.mxu0 0
  %1429 = vmatprep.subr.bf16.mxu0 0
  %1430 = vmatpush1.bf16.msra.mxu0 0
  %1431 = vmatprep.subr.bf16.mxu0 0
  %1432 = vmatpush1.bf16.msra.mxu0 0
  %1433 = vmatprep.subr.bf16.mxu0 0
  %1434 = vmatpush1.bf16.msra.mxu0 0
  %1435 = vmatprep.mubr.bf16.mxu0 0
  %1436 = vmatmul.mubr.bf16.gmra.mrb[0].mxu0 %v1349
  %v1437 = vpop.f32.mrb[0].mxu0
  %v1438 = vadd.f32 0.0, %v1437
  %v1439 = vpop.f32.mrb[0].mxu0
  %v1440 = vpop.f32.mrb[0].mxu0
  %v1441 = vadd.f32 0.0, %v1440
  %v1442 = vpop.f32.mrb[0].mxu0
  %1443 = vmatprep.mubr.bf16.mxu0 0
  %1444 = vmatmul.mubr.bf16.gmra.mrb[0].mxu0 %v1352
  %v1445 = vpop.f32.mrb[0].mxu0
  %v1446 = vadd.f32 0.0, %v1445
  %v1447 = vpop.f32.mrb[0].mxu0
  %v1448 = vpop.f32.mrb[0].mxu0
  %v1449 = vadd.f32 0.0, %v1448
  %v1450 = vpop.f32.mrb[0].mxu0
  %1451 = vdwg.mxu0
  %v1452 = vpack.c.bf16 %v1392, %v1389
  %v1453 = vpack.c.bf16 %v1400, %v1397
  %v1454 = vpack.c.bf16 %v1441, %v1438
  %v1455 = vpack.c.bf16 %v1449, %v1446
  %1456 = vmatprep.subr.bf16.mxu0 0
  %1457 = vmatpush1.bf16.msra.mxu0 %v1452
  %1458 = vmatprep.subr.bf16.mxu0 0
  %1459 = vmatpush1.bf16.msra.mxu0 %v1453
  %1460 = vmatprep.subr.bf16.mxu0 0
  %1461 = vmatpush1.bf16.msra.mxu0 %v1454
  %1462 = vmatprep.subr.bf16.mxu0 0
  %1463 = vmatpush1.bf16.msra.mxu0 %v1455
  %1464 = vmatprep.subr.bf16.mxu0 0
  %1465 = vmatpush1.bf16.msra.mxu0 0
  %1466 = vmatprep.subr.bf16.mxu0 0
  %1467 = vmatpush1.bf16.msra.mxu0 0
  %1468 = vmatprep.subr.bf16.mxu0 0
  %1469 = vmatpush1.bf16.msra.mxu0 0
  %1470 = vmatprep.subr.bf16.mxu0 0
  %1471 = vmatpush1.bf16.msra.mxu0 0
  %1472 = vmatprep.subr.bf16.mxu0 0
  %1473 = vmatpush1.bf16.msra.mxu0 0
  %1474 = vmatprep.subr.bf16.mxu0 0
  %1475 = vmatpush1.bf16.msra.mxu0 0
  %1476 = vmatprep.subr.bf16.mxu0 0
  %1477 = vmatpush1.bf16.msra.mxu0 0
  %1478 = vmatprep.subr.bf16.mxu0 0
  %1479 = vmatpush1.bf16.msra.mxu0 0
  %1480 = vmatprep.subr.bf16.mxu0 0
  %1481 = vmatpush1.bf16.msra.mxu0 0
  %1482 = vmatprep.subr.bf16.mxu0 0
  %1483 = vmatpush1.bf16.msra.mxu0 0
  %1484 = vmatprep.subr.bf16.mxu0 0
  %1485 = vmatpush1.bf16.msra.mxu0 0
  %1486 = vmatprep.subr.bf16.mxu0 0
  %1487 = vmatpush1.bf16.msra.mxu0 0
  %1488 = vmatprep.mubr.bf16.mxu0 0
  %1489 = vmatmul.mubr.bf16.gmra.mrb[0].mxu0 %v689
  %v1490 = vpop.f32.mrb[0].mxu0
  %v1491 = vadd.f32 0.0, %v1490
  %v1492 = vpop.f32.mrb[0].mxu0
  %v1493 = vpop.f32.mrb[0].mxu0
  %v1494 = vadd.f32 0.0, %v1493
  %v1495 = vpop.f32.mrb[0].mxu0
  %1496 = vdwg.mxu0
  %1497 = vmatprep.subr.bf16.mxu0 0
  %1498 = vmatpush1.bf16.msra.mxu0 %v1257
  %1499 = vmatprep.subr.bf16.mxu0 0
  %1500 = vmatpush1.bf16.msra.mxu0 %v1258
  %1501 = vmatprep.subr.bf16.mxu0 0
  %1502 = vmatpush1.bf16.msra.mxu0 %v1259
  %1503 = vmatprep.subr.bf16.mxu0 0
  %1504 = vmatpush1.bf16.msra.mxu0 %v1260
  %1505 = vmatprep.subr.bf16.mxu0 0
  %1506 = vmatpush1.bf16.msra.mxu0 0
  %1507 = vmatprep.subr.bf16.mxu0 0
  %1508 = vmatpush1.bf16.msra.mxu0 0
  %1509 = vmatprep.subr.bf16.mxu0 0
  %1510 = vmatpush1.bf16.msra.mxu0 0
  %1511 = vmatprep.subr.bf16.mxu0 0
  %1512 = vmatpush1.bf16.msra.mxu0 0
  %1513 = vmatprep.subr.bf16.mxu0 0
  %1514 = vmatpush1.bf16.msra.mxu0 0
  %1515 = vmatprep.subr.bf16.mxu0 0
  %1516 = vmatpush1.bf16.msra.mxu0 0
  %1517 = vmatprep.subr.bf16.mxu0 0
  %1518 = vmatpush1.bf16.msra.mxu0 0
  %1519 = vmatprep.subr.bf16.mxu0 0
  %1520 = vmatpush1.bf16.msra.mxu0 0
  %1521 = vmatprep.subr.bf16.mxu0 0
  %1522 = vmatpush1.bf16.msra.mxu0 0
  %1523 = vmatprep.subr.bf16.mxu0 0
  %1524 = vmatpush1.bf16.msra.mxu0 0
  %1525 = vmatprep.subr.bf16.mxu0 0
  %1526 = vmatpush1.bf16.msra.mxu0 0
  %1527 = vmatprep.subr.bf16.mxu0 0
  %1528 = vmatpush1.bf16.msra.mxu0 0
  %1529 = vmatprep.mubr.bf16.mxu0 0
  %1530 = vmatmul.mubr.bf16.gmra.mrb[0].mxu0 %v738
  %v1531 = vpop.f32.mrb[0].mxu0
  %v1532 = vadd.f32 %v1491, %v1531
  %v1533 = vpop.f32.mrb[0].mxu0
  %v1534 = vpop.f32.mrb[0].mxu0
  %v1535 = vadd.f32 %v1494, %v1534
  %v1536 = vpop.f32.mrb[0].mxu0
  %1537 = vdwg.mxu0
  %v1538 = vmul.f32 %v1532, %v74
  %v1539 = vmul.f32 %v1535, %v79
  %v1540 = vsel %vm248, %v1538, 0.0
  %v1541 = vsel %vm248, %v1539, 0.0
  %v1542 = vadd.f32 %v1540, %v1541
  %v1543 = vrot.slane %v1542, 4
  %v1544 = vadd.f32 %v1542, %v1543
  %v1545 = vrot.slane %v1544, 2
  %v1546 = vadd.f32 %v1544, %v1545
  %v1547 = vrot.slane %v1546, 1
  %v1548 = vadd.f32 %v1546, %v1547
  %v1549 = vmul.f32 %v1548, %v792
  %v1550 = vsub.f32 %v1538, %v1549
  %v1551 = vsub.f32 %v1539, %v1549
  %v1552 = vmul.f32 %v1550, %v1550
  %v1553 = vmul.f32 %v1551, %v1551
  %v1554 = vsel %vm248, %v1552, 0.0
  %v1555 = vsel %vm248, %v1553, 0.0
  %v1556 = vadd.f32 %v1554, %v1555
  %v1557 = vrot.slane %v1556, 4
  %v1558 = vadd.f32 %v1556, %v1557
  %v1559 = vrot.slane %v1558, 2
  %v1560 = vadd.f32 %v1558, %v1559
  %v1561 = vrot.slane %v1560, 1
  %v1562 = vadd.f32 %v1560, %v1561
  %v1563 = vmul.f32 %v1562, %v792
  %v1564 = vadd.f32 %v1563, 1e-05
  %v1565 = vrsqrt.pop %v1564
  %v1566 = vmul.f32 %v54, %v1565
  %v1568 = vlaneseq
  %v1569 = vshrl.u32 %v1568, 7
  %v1570 = vsub.s32 0, %v1569
  %v1571 = vrot.slane %v1566, %v1570
  %v1573 = vmul.f32 %v1538, %v1571
  %v1574 = vmul.f32 %v1539, %v1571
  %v1575 = vmul.f32 %v1549, %v1566
  %v1576 = vsub.f32 %v55, %v1575
  %v1578 = vlaneseq
  %v1579 = vshrl.u32 %v1578, 7
  %v1580 = vsub.s32 0, %v1579
  %v1581 = vrot.slane %v1576, %v1580
  %v1583 = vadd.f32 %v1573, %v1581
  %v1584 = vadd.f32 %v1574, %v1581
  %1587 = vrot.lane.b32.xlu0 %v1039, 32
  %v1588 = vpop.permute.xlu0 %1587
  %1589 = vrot.lane.b32.xlu0 %v1040, 32
  %v1590 = vpop.permute.xlu0 %1589
  %v1591 = vsel %vm248, %v1588, 0
  %v1593 = vsel %vm248, %v1590, 0
  %1595 = vmatprep.subr.mxu0 0.0
  %1596 = vmatpush1.msra.mxu0 %v60
  %1597 = vmatprep.subr.mxu0 0.0
  %1598 = vmatpush1.msra.mxu0 %v61
  %1599 = vmatprep.subr.mxu0 0.0
  %1600 = vmatpush1.msra.mxu0 %v62
  %1601 = vmatprep.subr.mxu0 0.0
  %1602 = vmatpush1.msra.mxu0 %v63
  %1603 = vmatprep.subr.mxu0 0.0
  %1604 = vmatpush1.msra.mxu0 0.0
  %1605 = vmatprep.subr.mxu0 0.0
  %1606 = vmatpush1.msra.mxu0 0.0
  %1607 = vmatprep.subr.mxu0 0.0
  %1608 = vmatpush1.msra.mxu0 0.0
  %1609 = vmatprep.subr.mxu0 0.0
  %1610 = vmatpush1.msra.mxu0 0.0
  %1611 = vmatprep.subr.mxu0 0.0
  %1612 = vmatpush1.msra.mxu0 0.0
  %1613 = vmatprep.subr.mxu0 0.0
  %1614 = vmatpush1.msra.mxu0 0.0
  %1615 = vmatprep.subr.mxu0 0.0
  %1616 = vmatpush1.msra.mxu0 0.0
  %1617 = vmatprep.subr.mxu0 0.0
  %1618 = vmatpush1.msra.mxu0 0.0
  %1619 = vmatprep.subr.mxu0 0.0
  %1620 = vmatpush1.msra.mxu0 0.0
  %1621 = vmatprep.subr.mxu0 0.0
  %1622 = vmatpush1.msra.mxu0 0.0
  %1623 = vmatprep.subr.mxu0 0.0
  %1624 = vmatpush1.msra.mxu0 0.0
  %1625 = vmatprep.subr.mxu0 0.0
  %1626 = vmatpush1.msra.mxu0 0.0
  %1627 = vmatprep.subr.mxu0 0.0
  %1628 = vmatpush1.msra.mxu0 0.0
  %1629 = vmatprep.subr.mxu0 0.0
  %1630 = vmatpush1.msra.mxu0 0.0
  %1631 = vmatprep.subr.mxu0 0.0
  %1632 = vmatpush1.msra.mxu0 0.0
  %1633 = vmatprep.subr.mxu0 0.0
  %1634 = vmatpush1.msra.mxu0 0.0
  %1635 = vmatprep.subr.mxu0 0.0
  %1636 = vmatpush1.msra.mxu0 0.0
  %1637 = vmatprep.subr.mxu0 0.0
  %1638 = vmatpush1.msra.mxu0 0.0
  %1639 = vmatprep.subr.mxu0 0.0
  %1640 = vmatpush1.msra.mxu0 0.0
  %1641 = vmatprep.subr.mxu0 0.0
  %1642 = vmatpush1.msra.mxu0 0.0
  %1643 = vmatprep.subr.mxu0 0.0
  %1644 = vmatpush1.msra.mxu0 0.0
  %1645 = vmatprep.subr.mxu0 0.0
  %1646 = vmatpush1.msra.mxu0 0.0
  %1647 = vmatprep.subr.mxu0 0.0
  %1648 = vmatpush1.msra.mxu0 0.0
  %1649 = vmatprep.subr.mxu0 0.0
  %1650 = vmatpush1.msra.mxu0 0.0
  %1651 = vmatprep.subr.mxu0 0.0
  %1652 = vmatpush1.msra.mxu0 0.0
  %1653 = vmatprep.subr.mxu0 0.0
  %1654 = vmatpush1.msra.mxu0 0.0
  %1655 = vmatprep.subr.mxu0 0.0
  %1656 = vmatpush1.msra.mxu0 0.0
  %1657 = vmatprep.subr.mxu0 0.0
  %1658 = vmatpush1.msra.mxu0 0.0
  %1659 = vmatprep.mubr.f32.mxu0 0.0
  %1660 = vmatmul.mubr.f32.gmra.mrb[0].mxu0 %v1591
  %v1661 = vpop.f32.mrb[0].mxu0
  %v1662 = vadd.f32 0.0, %v1661
  %v1663 = vpop.f32.mrb[0].mxu0
  %1664 = vmatprep.mubr.f32.mxu0 0.0
  %1665 = vmatmul.mubr.f32.gmra.mrb[0].mxu0 %v1593
  %v1666 = vpop.f32.mrb[0].mxu0
  %v1667 = vadd.f32 0.0, %v1666
  %v1668 = vpop.f32.mrb[0].mxu0
  %1669 = vdwg.mxu0
  %v1671 = vsel %vm248, %v1583, 0
  %v1674 = vsel %vm248, %v1584, 0
  %1676 = vmatprep.subr.mxu0 0.0
  %1677 = vmatpush1.msra.mxu0 %v56
  %1678 = vmatprep.subr.mxu0 0.0
  %1679 = vmatpush1.msra.mxu0 %v57
  %1680 = vmatprep.subr.mxu0 0.0
  %1681 = vmatpush1.msra.mxu0 %v58
  %1682 = vmatprep.subr.mxu0 0.0
  %1683 = vmatpush1.msra.mxu0 %v59
  %1684 = vmatprep.subr.mxu0 0.0
  %1685 = vmatpush1.msra.mxu0 0.0
  %1686 = vmatprep.subr.mxu0 0.0
  %1687 = vmatpush1.msra.mxu0 0.0
  %1688 = vmatprep.subr.mxu0 0.0
  %1689 = vmatpush1.msra.mxu0 0.0
  %1690 = vmatprep.subr.mxu0 0.0
  %1691 = vmatpush1.msra.mxu0 0.0
  %1692 = vmatprep.subr.mxu0 0.0
  %1693 = vmatpush1.msra.mxu0 0.0
  %1694 = vmatprep.subr.mxu0 0.0
  %1695 = vmatpush1.msra.mxu0 0.0
  %1696 = vmatprep.subr.mxu0 0.0
  %1697 = vmatpush1.msra.mxu0 0.0
  %1698 = vmatprep.subr.mxu0 0.0
  %1699 = vmatpush1.msra.mxu0 0.0
  %1700 = vmatprep.subr.mxu0 0.0
  %1701 = vmatpush1.msra.mxu0 0.0
  %1702 = vmatprep.subr.mxu0 0.0
  %1703 = vmatpush1.msra.mxu0 0.0
  %1704 = vmatprep.subr.mxu0 0.0
  %1705 = vmatpush1.msra.mxu0 0.0
  %1706 = vmatprep.subr.mxu0 0.0
  %1707 = vmatpush1.msra.mxu0 0.0
  %1708 = vmatprep.subr.mxu0 0.0
  %1709 = vmatpush1.msra.mxu0 0.0
  %1710 = vmatprep.subr.mxu0 0.0
  %1711 = vmatpush1.msra.mxu0 0.0
  %1712 = vmatprep.subr.mxu0 0.0
  %1713 = vmatpush1.msra.mxu0 0.0
  %1714 = vmatprep.subr.mxu0 0.0
  %1715 = vmatpush1.msra.mxu0 0.0
  %1716 = vmatprep.subr.mxu0 0.0
  %1717 = vmatpush1.msra.mxu0 0.0
  %1718 = vmatprep.subr.mxu0 0.0
  %1719 = vmatpush1.msra.mxu0 0.0
  %1720 = vmatprep.subr.mxu0 0.0
  %1721 = vmatpush1.msra.mxu0 0.0
  %1722 = vmatprep.subr.mxu0 0.0
  %1723 = vmatpush1.msra.mxu0 0.0
  %1724 = vmatprep.subr.mxu0 0.0
  %1725 = vmatpush1.msra.mxu0 0.0
  %1726 = vmatprep.subr.mxu0 0.0
  %1727 = vmatpush1.msra.mxu0 0.0
  %1728 = vmatprep.subr.mxu0 0.0
  %1729 = vmatpush1.msra.mxu0 0.0
  %1730 = vmatprep.subr.mxu0 0.0
  %1731 = vmatpush1.msra.mxu0 0.0
  %1732 = vmatprep.subr.mxu0 0.0
  %1733 = vmatpush1.msra.mxu0 0.0
  %1734 = vmatprep.subr.mxu0 0.0
  %1735 = vmatpush1.msra.mxu0 0.0
  %1736 = vmatprep.subr.mxu0 0.0
  %1737 = vmatpush1.msra.mxu0 0.0
  %1738 = vmatprep.subr.mxu0 0.0
  %1739 = vmatpush1.msra.mxu0 0.0
  %1740 = vmatprep.mubr.f32.mxu0 0.0
  %1741 = vmatmul.mubr.f32.gmra.mrb[0].mxu0 %v1671
  %v1742 = vpop.f32.mrb[0].mxu0
  %v1743 = vadd.f32 %v1662, %v1742
  %v1744 = vpop.f32.mrb[0].mxu0
  %1745 = vmatprep.mubr.f32.mxu0 0.0
  %1746 = vmatmul.mubr.f32.gmra.mrb[0].mxu0 %v1674
  %v1747 = vpop.f32.mrb[0].mxu0
  %v1748 = vadd.f32 %v1667, %v1747
  %v1749 = vpop.f32.mrb[0].mxu0
  %1750 = vdwg.mxu0
  %v1751 = vadd.f32 %v1743, %v85
  %v1752 = vadd.f32 %v1748, %v85
  %v1753 = vxor.u32 %v1751, 2147483648
  %v1754 = vxor.u32 %v1752, 2147483648
  %v1755 = vmul.f32 %v1753, 1.442695
  %v1756 = vpow.pop %v1755
  %v1757 = vmul.f32 %v1754, 1.442695
  %v1758 = vpow.pop %v1757
  %v1759 = vadd.f32 %v1756, 1.0
  %v1760 = vadd.f32 %v1758, 1.0
  %v1761 = vrcp.pop %v1759
  %v1762 = vmul.f32 1.0, %v1761
  %v1763 = vrcp.pop %v1760
  %v1764 = vmul.f32 1.0, %v1763
  %v1765 = vtanh.pop %v1751
  %v1766 = vtanh.pop %v1752
  %v1767 = vmul.f32 %v1762, %v1027
  %v1768 = vmul.f32 %v1764, %v1028
  %1771 = vrot.lane.b32.xlu0 %v1765, 64
  %v1772 = vpop.permute.xlu0 %1771
  %1773 = vrot.lane.b32.xlu0 %v1766, 64
  %v1774 = vpop.permute.xlu0 %1773
  %v1777 = vmul.f32 %v1762, %v1772
  %v1778 = vmul.f32 %v1764, %v1774
  %1781 = vrot.lane.b32.xlu0 %v1777, 32
  %v1782 = vpop.permute.xlu0 %1781
  %1783 = vrot.lane.b32.xlu0 %v1778, 32
  %v1784 = vpop.permute.xlu0 %1783
  %v1787 = vadd.f32 %v1767, %v1782
  %v1788 = vadd.f32 %v1768, %v1784
  %v1789 = vtanh.pop %v1787
  %v1790 = vtanh.pop %v1788
  %1793 = vrot.lane.b32.xlu0 %v1789, 64
  %v1794 = vpop.permute.xlu0 %1793
  %1795 = vrot.lane.b32.xlu0 %v1790, 64
  %v1796 = vpop.permute.xlu0 %1795
  %v1799 = vmul.f32 %v1762, %v1794
  %v1800 = vmul.f32 %v1764, %v1796
  %v1801 = vpack.c.bf16 %v1800, %v1799
  %1803 = vrot.lane.b32.xlu0 %v1801, 32
  %v1804 = vpop.permute.xlu0 %1803
  %1806 = vmatprep.subr.bf16.mxu0 0
  %1807 = vmatpush1.bf16.msra.mxu0 %v1804
  %1808 = vmatprep.subr.bf16.mxu0 0
  %1809 = vmatpush1.bf16.msra.mxu0 0
  %1810 = vmatprep.subr.bf16.mxu0 0
  %1811 = vmatpush1.bf16.msra.mxu0 0
  %1812 = vmatprep.subr.bf16.mxu0 0
  %1813 = vmatpush1.bf16.msra.mxu0 0
  %1814 = vmatprep.subr.bf16.mxu0 0
  %1815 = vmatpush1.bf16.msra.mxu0 0
  %1816 = vmatprep.subr.bf16.mxu0 0
  %1817 = vmatpush1.bf16.msra.mxu0 0
  %1818 = vmatprep.subr.bf16.mxu0 0
  %1819 = vmatpush1.bf16.msra.mxu0 0
  %1820 = vmatprep.subr.bf16.mxu0 0
  %1821 = vmatpush1.bf16.msra.mxu0 0
  %1822 = vmatprep.subr.bf16.mxu0 0
  %1823 = vmatpush1.bf16.msra.mxu0 0
  %1824 = vmatprep.subr.bf16.mxu0 0
  %1825 = vmatpush1.bf16.msra.mxu0 0
  %1826 = vmatprep.subr.bf16.mxu0 0
  %1827 = vmatpush1.bf16.msra.mxu0 0
  %1828 = vmatprep.subr.bf16.mxu0 0
  %1829 = vmatpush1.bf16.msra.mxu0 0
  %1830 = vmatprep.subr.bf16.mxu0 0
  %1831 = vmatpush1.bf16.msra.mxu0 0
  %1832 = vmatprep.subr.bf16.mxu0 0
  %1833 = vmatpush1.bf16.msra.mxu0 0
  %1834 = vmatprep.subr.bf16.mxu0 0
  %1835 = vmatpush1.bf16.msra.mxu0 0
  %1836 = vmatprep.subr.bf16.mxu0 0
  %1837 = vmatpush1.bf16.msra.mxu0 0
  %1838 = vmatprep.mubr.bf16.mxu0 0
  %1839 = vmatmul.mubr.bf16.gmra.mrb[0].mxu0 %v156
  %v1840 = vpop.f32.mrb[0].mxu0
  %v1841 = vadd.f32 0.0, %v1840
  %v1842 = vpop.f32.mrb[0].mxu0
  %v1843 = vpop.f32.mrb[0].mxu0
  %v1844 = vadd.f32 0.0, %v1843
  %v1845 = vpop.f32.mrb[0].mxu0
  %1846 = vmatprep.mubr.bf16.mxu0 0
  %1847 = vmatmul.mubr.bf16.gmra.mrb[0].mxu0 %v159
  %v1848 = vpop.f32.mrb[0].mxu0
  %v1849 = vadd.f32 0.0, %v1848
  %v1850 = vpop.f32.mrb[0].mxu0
  %v1851 = vpop.f32.mrb[0].mxu0
  %v1852 = vadd.f32 0.0, %v1851
  %v1853 = vpop.f32.mrb[0].mxu0
  %1854 = vmatprep.mubr.bf16.mxu0 0
  %1855 = vmatmul.mubr.bf16.gmra.mrb[0].mxu0 %v162
  %v1856 = vpop.f32.mrb[0].mxu0
  %v1857 = vadd.f32 0.0, %v1856
  %v1858 = vpop.f32.mrb[0].mxu0
  %v1859 = vpop.f32.mrb[0].mxu0
  %v1860 = vadd.f32 0.0, %v1859
  %v1861 = vpop.f32.mrb[0].mxu0
  %1862 = vmatprep.mubr.bf16.mxu0 0
  %1863 = vmatmul.mubr.bf16.gmra.mrb[0].mxu0 %v165
  %v1864 = vpop.f32.mrb[0].mxu0
  %v1865 = vadd.f32 0.0, %v1864
  %v1866 = vpop.f32.mrb[0].mxu0
  %v1867 = vpop.f32.mrb[0].mxu0
  %v1868 = vadd.f32 0.0, %v1867
  %v1869 = vpop.f32.mrb[0].mxu0
  %1870 = vdwg.mxu0
  %v1871 = vpack.c.bf16 %v1844, %v1841
  %v1872 = vpack.c.bf16 %v1852, %v1849
  %v1873 = vpack.c.bf16 %v1860, %v1857
  %v1874 = vpack.c.bf16 %v1868, %v1865
  %v1876 = vsel %vm248, %v1873, 0
  %v1879 = vsel %vm248, %v1874, 0
  %v1882 = vsel %vm248, %v1871, 0
  %v1885 = vsel %vm248, %v1872, 0
  %1887 = vmatprep.subr.bf16.mxu0 0
  %1888 = vmatpush1.bf16.msra.mxu0 %v244
  %1889 = vmatprep.subr.bf16.mxu0 0
  %1890 = vmatpush1.bf16.msra.mxu0 %v245
  %1891 = vmatprep.subr.bf16.mxu0 0
  %1892 = vmatpush1.bf16.msra.mxu0 0
  %1893 = vmatprep.subr.bf16.mxu0 0
  %1894 = vmatpush1.bf16.msra.mxu0 0
  %1895 = vmatprep.subr.bf16.mxu0 0
  %1896 = vmatpush1.bf16.msra.mxu0 0
  %1897 = vmatprep.subr.bf16.mxu0 0
  %1898 = vmatpush1.bf16.msra.mxu0 0
  %1899 = vmatprep.subr.bf16.mxu0 0
  %1900 = vmatpush1.bf16.msra.mxu0 0
  %1901 = vmatprep.subr.bf16.mxu0 0
  %1902 = vmatpush1.bf16.msra.mxu0 0
  %1903 = vmatprep.subr.bf16.mxu0 0
  %1904 = vmatpush1.bf16.msra.mxu0 0
  %1905 = vmatprep.subr.bf16.mxu0 0
  %1906 = vmatpush1.bf16.msra.mxu0 0
  %1907 = vmatprep.subr.bf16.mxu0 0
  %1908 = vmatpush1.bf16.msra.mxu0 0
  %1909 = vmatprep.subr.bf16.mxu0 0
  %1910 = vmatpush1.bf16.msra.mxu0 0
  %1911 = vmatprep.subr.bf16.mxu0 0
  %1912 = vmatpush1.bf16.msra.mxu0 0
  %1913 = vmatprep.subr.bf16.mxu0 0
  %1914 = vmatpush1.bf16.msra.mxu0 0
  %1915 = vmatprep.subr.bf16.mxu0 0
  %1916 = vmatpush1.bf16.msra.mxu0 0
  %1917 = vmatprep.subr.bf16.mxu0 0
  %1918 = vmatpush1.bf16.msra.mxu0 0
  %1919 = vmatprep.mubr.bf16.mxu0 0
  %1920 = vmatmul.mubr.bf16.gmra.mrb[0].mxu0 %v1876
  %v1921 = vpop.f32.mrb[0].mxu0
  %v1922 = vadd.f32 0.0, %v1921
  %v1923 = vpop.f32.mrb[0].mxu0
  %v1924 = vpop.f32.mrb[0].mxu0
  %v1925 = vadd.f32 0.0, %v1924
  %v1926 = vpop.f32.mrb[0].mxu0
  %1927 = vmatprep.mubr.bf16.mxu0 0
  %1928 = vmatmul.mubr.bf16.gmra.mrb[0].mxu0 %v1879
  %v1929 = vpop.f32.mrb[0].mxu0
  %v1930 = vadd.f32 0.0, %v1929
  %v1931 = vpop.f32.mrb[0].mxu0
  %v1932 = vpop.f32.mrb[0].mxu0
  %v1933 = vadd.f32 0.0, %v1932
  %v1934 = vpop.f32.mrb[0].mxu0
  %1935 = vmatprep.mubr.bf16.mxu0 0
  %1936 = vmatmul.mubr.bf16.gmra.mrb[0].mxu0 %v1882
  %v1937 = vpop.f32.mrb[0].mxu0
  %v1938 = vadd.f32 0.0, %v1937
  %v1939 = vpop.f32.mrb[0].mxu0
  %v1940 = vpop.f32.mrb[0].mxu0
  %v1941 = vadd.f32 0.0, %v1940
  %v1942 = vpop.f32.mrb[0].mxu0
  %1943 = vmatprep.mubr.bf16.mxu0 0
  %1944 = vmatmul.mubr.bf16.gmra.mrb[0].mxu0 %v1885
  %v1945 = vpop.f32.mrb[0].mxu0
  %v1946 = vadd.f32 0.0, %v1945
  %v1947 = vpop.f32.mrb[0].mxu0
  %v1948 = vpop.f32.mrb[0].mxu0
  %v1949 = vadd.f32 0.0, %v1948
  %v1950 = vpop.f32.mrb[0].mxu0
  %1951 = vdwg.mxu0
  %1952 = vmatprep.subr.bf16.mxu0 0
  %1953 = vmatpush1.bf16.msra.mxu0 %v334
  %1954 = vmatprep.subr.bf16.mxu0 0
  %1955 = vmatpush1.bf16.msra.mxu0 %v335
  %1956 = vmatprep.subr.bf16.mxu0 0
  %1957 = vmatpush1.bf16.msra.mxu0 0
  %1958 = vmatprep.subr.bf16.mxu0 0
  %1959 = vmatpush1.bf16.msra.mxu0 0
  %1960 = vmatprep.subr.bf16.mxu0 0
  %1961 = vmatpush1.bf16.msra.mxu0 0
  %1962 = vmatprep.subr.bf16.mxu0 0
  %1963 = vmatpush1.bf16.msra.mxu0 0
  %1964 = vmatprep.subr.bf16.mxu0 0
  %1965 = vmatpush1.bf16.msra.mxu0 0
  %1966 = vmatprep.subr.bf16.mxu0 0
  %1967 = vmatpush1.bf16.msra.mxu0 0
  %1968 = vmatprep.subr.bf16.mxu0 0
  %1969 = vmatpush1.bf16.msra.mxu0 0
  %1970 = vmatprep.subr.bf16.mxu0 0
  %1971 = vmatpush1.bf16.msra.mxu0 0
  %1972 = vmatprep.subr.bf16.mxu0 0
  %1973 = vmatpush1.bf16.msra.mxu0 0
  %1974 = vmatprep.subr.bf16.mxu0 0
  %1975 = vmatpush1.bf16.msra.mxu0 0
  %1976 = vmatprep.subr.bf16.mxu0 0
  %1977 = vmatpush1.bf16.msra.mxu0 0
  %1978 = vmatprep.subr.bf16.mxu0 0
  %1979 = vmatpush1.bf16.msra.mxu0 0
  %1980 = vmatprep.subr.bf16.mxu0 0
  %1981 = vmatpush1.bf16.msra.mxu0 0
  %1982 = vmatprep.subr.bf16.mxu0 0
  %1983 = vmatpush1.bf16.msra.mxu0 0
  %1984 = vmatprep.mubr.bf16.mxu0 0
  %1985 = vmatmul.mubr.bf16.gmra.mrb[0].mxu0 %v1882
  %v1986 = vpop.f32.mrb[0].mxu0
  %v1987 = vadd.f32 %v1922, %v1986
  %v1988 = vpop.f32.mrb[0].mxu0
  %v1989 = vpop.f32.mrb[0].mxu0
  %v1990 = vadd.f32 %v1925, %v1989
  %v1991 = vpop.f32.mrb[0].mxu0
  %1992 = vmatprep.mubr.bf16.mxu0 0
  %1993 = vmatmul.mubr.bf16.gmra.mrb[0].mxu0 %v1885
  %v1994 = vpop.f32.mrb[0].mxu0
  %v1995 = vadd.f32 %v1930, %v1994
  %v1996 = vpop.f32.mrb[0].mxu0
  %v1997 = vpop.f32.mrb[0].mxu0
  %v1998 = vadd.f32 %v1933, %v1997
  %v1999 = vpop.f32.mrb[0].mxu0
  %2000 = vmatprep.mubr.bf16.mxu0 0
  %2001 = vmatmul.mubr.bf16.gmra.mrb[0].mxu0 %v1876
  %v2002 = vpop.f32.mrb[0].mxu0
  %v2003 = vadd.f32 %v1938, %v2002
  %v2004 = vpop.f32.mrb[0].mxu0
  %v2005 = vpop.f32.mrb[0].mxu0
  %v2006 = vadd.f32 %v1941, %v2005
  %v2007 = vpop.f32.mrb[0].mxu0
  %2008 = vmatprep.mubr.bf16.mxu0 0
  %2009 = vmatmul.mubr.bf16.gmra.mrb[0].mxu0 %v1879
  %v2010 = vpop.f32.mrb[0].mxu0
  %v2011 = vadd.f32 %v1946, %v2010
  %v2012 = vpop.f32.mrb[0].mxu0
  %v2013 = vpop.f32.mrb[0].mxu0
  %v2014 = vadd.f32 %v1949, %v2013
  %v2015 = vpop.f32.mrb[0].mxu0
  %2016 = vdwg.mxu0
  %v2017 = vpack.c.bf16 %v1990, %v1987
  %v2018 = vpack.c.bf16 %v1998, %v1995
  %v2019 = vpack.c.bf16 %v2006, %v2003
  %v2020 = vpack.c.bf16 %v2014, %v2011
  %2021 = vmatprep.subr.bf16.mxu0 0
  %2022 = vmatpush1.bf16.msra.mxu0 %v1804
  %2023 = vmatprep.subr.bf16.mxu0 0
  %2024 = vmatpush1.bf16.msra.mxu0 0
  %2025 = vmatprep.subr.bf16.mxu0 0
  %2026 = vmatpush1.bf16.msra.mxu0 0
  %2027 = vmatprep.subr.bf16.mxu0 0
  %2028 = vmatpush1.bf16.msra.mxu0 0
  %2029 = vmatprep.subr.bf16.mxu0 0
  %2030 = vmatpush1.bf16.msra.mxu0 0
  %2031 = vmatprep.subr.bf16.mxu0 0
  %2032 = vmatpush1.bf16.msra.mxu0 0
  %2033 = vmatprep.subr.bf16.mxu0 0
  %2034 = vmatpush1.bf16.msra.mxu0 0
  %2035 = vmatprep.subr.bf16.mxu0 0
  %2036 = vmatpush1.bf16.msra.mxu0 0
  %2037 = vmatprep.subr.bf16.mxu0 0
  %2038 = vmatpush1.bf16.msra.mxu0 0
  %2039 = vmatprep.subr.bf16.mxu0 0
  %2040 = vmatpush1.bf16.msra.mxu0 0
  %2041 = vmatprep.subr.bf16.mxu0 0
  %2042 = vmatpush1.bf16.msra.mxu0 0
  %2043 = vmatprep.subr.bf16.mxu0 0
  %2044 = vmatpush1.bf16.msra.mxu0 0
  %2045 = vmatprep.subr.bf16.mxu0 0
  %2046 = vmatpush1.bf16.msra.mxu0 0
  %2047 = vmatprep.subr.bf16.mxu0 0
  %2048 = vmatpush1.bf16.msra.mxu0 0
  %2049 = vmatprep.subr.bf16.mxu0 0
  %2050 = vmatpush1.bf16.msra.mxu0 0
  %2051 = vmatprep.subr.bf16.mxu0 0
  %2052 = vmatpush1.bf16.msra.mxu0 0
  %2053 = vmatprep.mubr.bf16.mxu0 0
  %2054 = vmatmul.mubr.bf16.gmra.mrb[0].mxu0 %v428
  %v2055 = vpop.f32.mrb[0].mxu0
  %v2056 = vadd.f32 0.0, %v2055
  %v2057 = vpop.f32.mrb[0].mxu0
  %v2058 = vpop.f32.mrb[0].mxu0
  %v2059 = vadd.f32 0.0, %v2058
  %v2060 = vpop.f32.mrb[0].mxu0
  %2061 = vmatprep.mubr.bf16.mxu0 0
  %2062 = vmatmul.mubr.bf16.gmra.mrb[0].mxu0 %v431
  %v2063 = vpop.f32.mrb[0].mxu0
  %v2064 = vadd.f32 0.0, %v2063
  %v2065 = vpop.f32.mrb[0].mxu0
  %v2066 = vpop.f32.mrb[0].mxu0
  %v2067 = vadd.f32 0.0, %v2066
  %v2068 = vpop.f32.mrb[0].mxu0
  %2069 = vmatprep.mubr.bf16.mxu0 0
  %2070 = vmatmul.mubr.bf16.gmra.mrb[0].mxu0 %v434
  %v2071 = vpop.f32.mrb[0].mxu0
  %v2072 = vadd.f32 0.0, %v2071
  %v2073 = vpop.f32.mrb[0].mxu0
  %v2074 = vpop.f32.mrb[0].mxu0
  %v2075 = vadd.f32 0.0, %v2074
  %v2076 = vpop.f32.mrb[0].mxu0
  %2077 = vmatprep.mubr.bf16.mxu0 0
  %2078 = vmatmul.mubr.bf16.gmra.mrb[0].mxu0 %v437
  %v2079 = vpop.f32.mrb[0].mxu0
  %v2080 = vadd.f32 0.0, %v2079
  %v2081 = vpop.f32.mrb[0].mxu0
  %v2082 = vpop.f32.mrb[0].mxu0
  %v2083 = vadd.f32 0.0, %v2082
  %v2084 = vpop.f32.mrb[0].mxu0
  %2085 = vdwg.mxu0
  %2090 = vrot.lane.b32.xlu0 %v2072, 32
  %v2091 = vpop.permute.xlu0 %2090
  %2092 = vrot.lane.b32.xlu0 %v2075, 32
  %v2093 = vpop.permute.xlu0 %2092
  %2094 = vrot.lane.b32.xlu0 %v2080, 32
  %v2095 = vpop.permute.xlu0 %2094
  %2096 = vrot.lane.b32.xlu0 %v2083, 32
  %v2097 = vpop.permute.xlu0 %2096
  %v2102 = vsel %vm248, %v2056, %v2091
  %v2103 = vsel %vm248, %v2059, %v2093
  %v2104 = vsel %vm248, %v2064, %v2095
  %v2105 = vsel %vm248, %v2067, %v2097
  %v2106 = vpack.c.bf16 %v2103, %v2102
  %v2107 = vpack.c.bf16 %v2105, %v2104
  %v2109 = vsel %vm550, %v2106, 0
  %v2112 = vsel %vm550, %v2107, 0
  %2114 = vmatprep.subr.bf16.mxu0 0
  %2115 = vmatpush1.bf16.msra.mxu0 %v542
  %2116 = vmatprep.subr.bf16.mxu0 0
  %2117 = vmatpush1.bf16.msra.mxu0 %v543
  %2118 = vmatprep.subr.bf16.mxu0 0
  %2119 = vmatpush1.bf16.msra.mxu0 %v544
  %2120 = vmatprep.subr.bf16.mxu0 0
  %2121 = vmatpush1.bf16.msra.mxu0 %v545
  %2122 = vmatprep.subr.bf16.mxu0 0
  %2123 = vmatpush1.bf16.msra.mxu0 0
  %2124 = vmatprep.subr.bf16.mxu0 0
  %2125 = vmatpush1.bf16.msra.mxu0 0
  %2126 = vmatprep.subr.bf16.mxu0 0
  %2127 = vmatpush1.bf16.msra.mxu0 0
  %2128 = vmatprep.subr.bf16.mxu0 0
  %2129 = vmatpush1.bf16.msra.mxu0 0
  %2130 = vmatprep.subr.bf16.mxu0 0
  %2131 = vmatpush1.bf16.msra.mxu0 0
  %2132 = vmatprep.subr.bf16.mxu0 0
  %2133 = vmatpush1.bf16.msra.mxu0 0
  %2134 = vmatprep.subr.bf16.mxu0 0
  %2135 = vmatpush1.bf16.msra.mxu0 0
  %2136 = vmatprep.subr.bf16.mxu0 0
  %2137 = vmatpush1.bf16.msra.mxu0 0
  %2138 = vmatprep.subr.bf16.mxu0 0
  %2139 = vmatpush1.bf16.msra.mxu0 0
  %2140 = vmatprep.subr.bf16.mxu0 0
  %2141 = vmatpush1.bf16.msra.mxu0 0
  %2142 = vmatprep.subr.bf16.mxu0 0
  %2143 = vmatpush1.bf16.msra.mxu0 0
  %2144 = vmatprep.subr.bf16.mxu0 0
  %2145 = vmatpush1.bf16.msra.mxu0 0
  %2146 = vmatprep.mubr.bf16.mxu0 0
  %2147 = vmatmul.mubr.bf16.gmra.mrb[0].mxu0 %v2109
  %v2148 = vpop.f32.mrb[0].mxu0
  %v2149 = vadd.f32 0.0, %v2148
  %v2150 = vpop.f32.mrb[0].mxu0
  %v2151 = vpop.f32.mrb[0].mxu0
  %v2152 = vadd.f32 0.0, %v2151
  %v2153 = vpop.f32.mrb[0].mxu0
  %2154 = vmatprep.mubr.bf16.mxu0 0
  %2155 = vmatmul.mubr.bf16.gmra.mrb[0].mxu0 %v2112
  %v2156 = vpop.f32.mrb[0].mxu0
  %v2157 = vadd.f32 0.0, %v2156
  %v2158 = vpop.f32.mrb[0].mxu0
  %v2159 = vpop.f32.mrb[0].mxu0
  %v2160 = vadd.f32 0.0, %v2159
  %v2161 = vpop.f32.mrb[0].mxu0
  %2162 = vdwg.mxu0
  %2163 = vmatprep.subr.bf16.mxu0 0
  %2164 = vmatpush1.bf16.msra.mxu0 %v622
  %2165 = vmatprep.subr.bf16.mxu0 0
  %2166 = vmatpush1.bf16.msra.mxu0 %v623
  %2167 = vmatprep.subr.bf16.mxu0 0
  %2168 = vmatpush1.bf16.msra.mxu0 %v624
  %2169 = vmatprep.subr.bf16.mxu0 0
  %2170 = vmatpush1.bf16.msra.mxu0 %v625
  %2171 = vmatprep.subr.bf16.mxu0 0
  %2172 = vmatpush1.bf16.msra.mxu0 0
  %2173 = vmatprep.subr.bf16.mxu0 0
  %2174 = vmatpush1.bf16.msra.mxu0 0
  %2175 = vmatprep.subr.bf16.mxu0 0
  %2176 = vmatpush1.bf16.msra.mxu0 0
  %2177 = vmatprep.subr.bf16.mxu0 0
  %2178 = vmatpush1.bf16.msra.mxu0 0
  %2179 = vmatprep.subr.bf16.mxu0 0
  %2180 = vmatpush1.bf16.msra.mxu0 0
  %2181 = vmatprep.subr.bf16.mxu0 0
  %2182 = vmatpush1.bf16.msra.mxu0 0
  %2183 = vmatprep.subr.bf16.mxu0 0
  %2184 = vmatpush1.bf16.msra.mxu0 0
  %2185 = vmatprep.subr.bf16.mxu0 0
  %2186 = vmatpush1.bf16.msra.mxu0 0
  %2187 = vmatprep.subr.bf16.mxu0 0
  %2188 = vmatpush1.bf16.msra.mxu0 0
  %2189 = vmatprep.subr.bf16.mxu0 0
  %2190 = vmatpush1.bf16.msra.mxu0 0
  %2191 = vmatprep.subr.bf16.mxu0 0
  %2192 = vmatpush1.bf16.msra.mxu0 0
  %2193 = vmatprep.subr.bf16.mxu0 0
  %2194 = vmatpush1.bf16.msra.mxu0 0
  %2195 = vmatprep.mubr.bf16.mxu0 0
  %2196 = vmatmul.mubr.bf16.gmra.mrb[0].mxu0 %v2109
  %v2197 = vpop.f32.mrb[0].mxu0
  %v2198 = vadd.f32 0.0, %v2197
  %v2199 = vpop.f32.mrb[0].mxu0
  %v2200 = vpop.f32.mrb[0].mxu0
  %v2201 = vadd.f32 0.0, %v2200
  %v2202 = vpop.f32.mrb[0].mxu0
  %2203 = vmatprep.mubr.bf16.mxu0 0
  %2204 = vmatmul.mubr.bf16.gmra.mrb[0].mxu0 %v2112
  %v2205 = vpop.f32.mrb[0].mxu0
  %v2206 = vadd.f32 0.0, %v2205
  %v2207 = vpop.f32.mrb[0].mxu0
  %v2208 = vpop.f32.mrb[0].mxu0
  %v2209 = vadd.f32 0.0, %v2208
  %v2210 = vpop.f32.mrb[0].mxu0
  %2211 = vdwg.mxu0
  %v2212 = vpack.c.bf16 %v2152, %v2149
  %v2213 = vpack.c.bf16 %v2160, %v2157
  %v2214 = vpack.c.bf16 %v2201, %v2198
  %v2215 = vpack.c.bf16 %v2209, %v2206
  %2216 = vmatprep.subr.bf16.mxu0 0
  %2217 = vmatpush1.bf16.msra.mxu0 %v2212
  %2218 = vmatprep.subr.bf16.mxu0 0
  %2219 = vmatpush1.bf16.msra.mxu0 %v2213
  %2220 = vmatprep.subr.bf16.mxu0 0
  %2221 = vmatpush1.bf16.msra.mxu0 %v2214
  %2222 = vmatprep.subr.bf16.mxu0 0
  %2223 = vmatpush1.bf16.msra.mxu0 %v2215
  %2224 = vmatprep.subr.bf16.mxu0 0
  %2225 = vmatpush1.bf16.msra.mxu0 0
  %2226 = vmatprep.subr.bf16.mxu0 0
  %2227 = vmatpush1.bf16.msra.mxu0 0
  %2228 = vmatprep.subr.bf16.mxu0 0
  %2229 = vmatpush1.bf16.msra.mxu0 0
  %2230 = vmatprep.subr.bf16.mxu0 0
  %2231 = vmatpush1.bf16.msra.mxu0 0
  %2232 = vmatprep.subr.bf16.mxu0 0
  %2233 = vmatpush1.bf16.msra.mxu0 0
  %2234 = vmatprep.subr.bf16.mxu0 0
  %2235 = vmatpush1.bf16.msra.mxu0 0
  %2236 = vmatprep.subr.bf16.mxu0 0
  %2237 = vmatpush1.bf16.msra.mxu0 0
  %2238 = vmatprep.subr.bf16.mxu0 0
  %2239 = vmatpush1.bf16.msra.mxu0 0
  %2240 = vmatprep.subr.bf16.mxu0 0
  %2241 = vmatpush1.bf16.msra.mxu0 0
  %2242 = vmatprep.subr.bf16.mxu0 0
  %2243 = vmatpush1.bf16.msra.mxu0 0
  %2244 = vmatprep.subr.bf16.mxu0 0
  %2245 = vmatpush1.bf16.msra.mxu0 0
  %2246 = vmatprep.subr.bf16.mxu0 0
  %2247 = vmatpush1.bf16.msra.mxu0 0
  %2248 = vmatprep.mubr.bf16.mxu0 0
  %2249 = vmatmul.mubr.bf16.gmra.mrb[0].mxu0 %v689
  %v2250 = vpop.f32.mrb[0].mxu0
  %v2251 = vadd.f32 0.0, %v2250
  %v2252 = vpop.f32.mrb[0].mxu0
  %v2253 = vpop.f32.mrb[0].mxu0
  %v2254 = vadd.f32 0.0, %v2253
  %v2255 = vpop.f32.mrb[0].mxu0
  %2256 = vdwg.mxu0
  %2257 = vmatprep.subr.bf16.mxu0 0
  %2258 = vmatpush1.bf16.msra.mxu0 %v2017
  %2259 = vmatprep.subr.bf16.mxu0 0
  %2260 = vmatpush1.bf16.msra.mxu0 %v2018
  %2261 = vmatprep.subr.bf16.mxu0 0
  %2262 = vmatpush1.bf16.msra.mxu0 %v2019
  %2263 = vmatprep.subr.bf16.mxu0 0
  %2264 = vmatpush1.bf16.msra.mxu0 %v2020
  %2265 = vmatprep.subr.bf16.mxu0 0
  %2266 = vmatpush1.bf16.msra.mxu0 0
  %2267 = vmatprep.subr.bf16.mxu0 0
  %2268 = vmatpush1.bf16.msra.mxu0 0
  %2269 = vmatprep.subr.bf16.mxu0 0
  %2270 = vmatpush1.bf16.msra.mxu0 0
  %2271 = vmatprep.subr.bf16.mxu0 0
  %2272 = vmatpush1.bf16.msra.mxu0 0
  %2273 = vmatprep.subr.bf16.mxu0 0
  %2274 = vmatpush1.bf16.msra.mxu0 0
  %2275 = vmatprep.subr.bf16.mxu0 0
  %2276 = vmatpush1.bf16.msra.mxu0 0
  %2277 = vmatprep.subr.bf16.mxu0 0
  %2278 = vmatpush1.bf16.msra.mxu0 0
  %2279 = vmatprep.subr.bf16.mxu0 0
  %2280 = vmatpush1.bf16.msra.mxu0 0
  %2281 = vmatprep.subr.bf16.mxu0 0
  %2282 = vmatpush1.bf16.msra.mxu0 0
  %2283 = vmatprep.subr.bf16.mxu0 0
  %2284 = vmatpush1.bf16.msra.mxu0 0
  %2285 = vmatprep.subr.bf16.mxu0 0
  %2286 = vmatpush1.bf16.msra.mxu0 0
  %2287 = vmatprep.subr.bf16.mxu0 0
  %2288 = vmatpush1.bf16.msra.mxu0 0
  %2289 = vmatprep.mubr.bf16.mxu0 0
  %2290 = vmatmul.mubr.bf16.gmra.mrb[0].mxu0 %v738
  %v2291 = vpop.f32.mrb[0].mxu0
  %v2292 = vadd.f32 %v2251, %v2291
  %v2293 = vpop.f32.mrb[0].mxu0
  %v2294 = vpop.f32.mrb[0].mxu0
  %v2295 = vadd.f32 %v2254, %v2294
  %v2296 = vpop.f32.mrb[0].mxu0
  %2297 = vdwg.mxu0
  %v2298 = vmul.f32 %v2292, %v74
  %v2299 = vmul.f32 %v2295, %v79
  %v2300 = vsel %vm248, %v2298, 0.0
  %v2301 = vsel %vm248, %v2299, 0.0
  %v2302 = vadd.f32 %v2300, %v2301
  %v2303 = vrot.slane %v2302, 4
  %v2304 = vadd.f32 %v2302, %v2303
  %v2305 = vrot.slane %v2304, 2
  %v2306 = vadd.f32 %v2304, %v2305
  %v2307 = vrot.slane %v2306, 1
  %v2308 = vadd.f32 %v2306, %v2307
  %v2309 = vmul.f32 %v2308, %v792
  %v2310 = vsub.f32 %v2298, %v2309
  %v2311 = vsub.f32 %v2299, %v2309
  %v2312 = vmul.f32 %v2310, %v2310
  %v2313 = vmul.f32 %v2311, %v2311
  %v2314 = vsel %vm248, %v2312, 0.0
  %v2315 = vsel %vm248, %v2313, 0.0
  %v2316 = vadd.f32 %v2314, %v2315
  %v2317 = vrot.slane %v2316, 4
  %v2318 = vadd.f32 %v2316, %v2317
  %v2319 = vrot.slane %v2318, 2
  %v2320 = vadd.f32 %v2318, %v2319
  %v2321 = vrot.slane %v2320, 1
  %v2322 = vadd.f32 %v2320, %v2321
  %v2323 = vmul.f32 %v2322, %v792
  %v2324 = vadd.f32 %v2323, 1e-05
  %v2325 = vrsqrt.pop %v2324
  %v2326 = vmul.f32 %v54, %v2325
  %v2328 = vlaneseq
  %v2329 = vshrl.u32 %v2328, 7
  %v2330 = vsub.s32 0, %v2329
  %v2331 = vrot.slane %v2326, %v2330
  %v2333 = vmul.f32 %v2298, %v2331
  %v2334 = vmul.f32 %v2299, %v2331
  %v2335 = vmul.f32 %v2309, %v2326
  %v2336 = vsub.f32 %v55, %v2335
  %v2338 = vlaneseq
  %v2339 = vshrl.u32 %v2338, 7
  %v2340 = vsub.s32 0, %v2339
  %v2341 = vrot.slane %v2336, %v2340
  %v2343 = vadd.f32 %v2333, %v2341
  %v2344 = vadd.f32 %v2334, %v2341
  %2347 = vrot.lane.b32.xlu0 %v1799, 32
  %v2348 = vpop.permute.xlu0 %2347
  %2349 = vrot.lane.b32.xlu0 %v1800, 32
  %v2350 = vpop.permute.xlu0 %2349
  %v2351 = vsel %vm248, %v2348, 0
  %v2353 = vsel %vm248, %v2350, 0
  %2355 = vmatprep.subr.mxu0 0.0
  %2356 = vmatpush1.msra.mxu0 %v60
  %2357 = vmatprep.subr.mxu0 0.0
  %2358 = vmatpush1.msra.mxu0 %v61
  %2359 = vmatprep.subr.mxu0 0.0
  %2360 = vmatpush1.msra.mxu0 %v62
  %2361 = vmatprep.subr.mxu0 0.0
  %2362 = vmatpush1.msra.mxu0 %v63
  %2363 = vmatprep.subr.mxu0 0.0
  %2364 = vmatpush1.msra.mxu0 0.0
  %2365 = vmatprep.subr.mxu0 0.0
  %2366 = vmatpush1.msra.mxu0 0.0
  %2367 = vmatprep.subr.mxu0 0.0
  %2368 = vmatpush1.msra.mxu0 0.0
  %2369 = vmatprep.subr.mxu0 0.0
  %2370 = vmatpush1.msra.mxu0 0.0
  %2371 = vmatprep.subr.mxu0 0.0
  %2372 = vmatpush1.msra.mxu0 0.0
  %2373 = vmatprep.subr.mxu0 0.0
  %2374 = vmatpush1.msra.mxu0 0.0
  %2375 = vmatprep.subr.mxu0 0.0
  %2376 = vmatpush1.msra.mxu0 0.0
  %2377 = vmatprep.subr.mxu0 0.0
  %2378 = vmatpush1.msra.mxu0 0.0
  %2379 = vmatprep.subr.mxu0 0.0
  %2380 = vmatpush1.msra.mxu0 0.0
  %2381 = vmatprep.subr.mxu0 0.0
  %2382 = vmatpush1.msra.mxu0 0.0
  %2383 = vmatprep.subr.mxu0 0.0
  %2384 = vmatpush1.msra.mxu0 0.0
  %2385 = vmatprep.subr.mxu0 0.0
  %2386 = vmatpush1.msra.mxu0 0.0
  %2387 = vmatprep.subr.mxu0 0.0
  %2388 = vmatpush1.msra.mxu0 0.0
  %2389 = vmatprep.subr.mxu0 0.0
  %2390 = vmatpush1.msra.mxu0 0.0
  %2391 = vmatprep.subr.mxu0 0.0
  %2392 = vmatpush1.msra.mxu0 0.0
  %2393 = vmatprep.subr.mxu0 0.0
  %2394 = vmatpush1.msra.mxu0 0.0
  %2395 = vmatprep.subr.mxu0 0.0
  %2396 = vmatpush1.msra.mxu0 0.0
  %2397 = vmatprep.subr.mxu0 0.0
  %2398 = vmatpush1.msra.mxu0 0.0
  %2399 = vmatprep.subr.mxu0 0.0
  %2400 = vmatpush1.msra.mxu0 0.0
  %2401 = vmatprep.subr.mxu0 0.0
  %2402 = vmatpush1.msra.mxu0 0.0
  %2403 = vmatprep.subr.mxu0 0.0
  %2404 = vmatpush1.msra.mxu0 0.0
  %2405 = vmatprep.subr.mxu0 0.0
  %2406 = vmatpush1.msra.mxu0 0.0
  %2407 = vmatprep.subr.mxu0 0.0
  %2408 = vmatpush1.msra.mxu0 0.0
  %2409 = vmatprep.subr.mxu0 0.0
  %2410 = vmatpush1.msra.mxu0 0.0
  %2411 = vmatprep.subr.mxu0 0.0
  %2412 = vmatpush1.msra.mxu0 0.0
  %2413 = vmatprep.subr.mxu0 0.0
  %2414 = vmatpush1.msra.mxu0 0.0
  %2415 = vmatprep.subr.mxu0 0.0
  %2416 = vmatpush1.msra.mxu0 0.0
  %2417 = vmatprep.subr.mxu0 0.0
  %2418 = vmatpush1.msra.mxu0 0.0
  %2419 = vmatprep.mubr.f32.mxu0 0.0
  %2420 = vmatmul.mubr.f32.gmra.mrb[0].mxu0 %v2351
  %v2421 = vpop.f32.mrb[0].mxu0
  %v2422 = vadd.f32 0.0, %v2421
  %v2423 = vpop.f32.mrb[0].mxu0
  %2424 = vmatprep.mubr.f32.mxu0 0.0
  %2425 = vmatmul.mubr.f32.gmra.mrb[0].mxu0 %v2353
  %v2426 = vpop.f32.mrb[0].mxu0
  %v2427 = vadd.f32 0.0, %v2426
  %v2428 = vpop.f32.mrb[0].mxu0
  %2429 = vdwg.mxu0
  %v2431 = vsel %vm248, %v2343, 0
  %v2434 = vsel %vm248, %v2344, 0
  %2436 = vmatprep.subr.mxu0 0.0
  %2437 = vmatpush1.msra.mxu0 %v56
  %2438 = vmatprep.subr.mxu0 0.0
  %2439 = vmatpush1.msra.mxu0 %v57
  %2440 = vmatprep.subr.mxu0 0.0
  %2441 = vmatpush1.msra.mxu0 %v58
  %2442 = vmatprep.subr.mxu0 0.0
  %2443 = vmatpush1.msra.mxu0 %v59
  %2444 = vmatprep.subr.mxu0 0.0
  %2445 = vmatpush1.msra.mxu0 0.0
  %2446 = vmatprep.subr.mxu0 0.0
  %2447 = vmatpush1.msra.mxu0 0.0
  %2448 = vmatprep.subr.mxu0 0.0
  %2449 = vmatpush1.msra.mxu0 0.0
  %2450 = vmatprep.subr.mxu0 0.0
  %2451 = vmatpush1.msra.mxu0 0.0
  %2452 = vmatprep.subr.mxu0 0.0
  %2453 = vmatpush1.msra.mxu0 0.0
  %2454 = vmatprep.subr.mxu0 0.0
  %2455 = vmatpush1.msra.mxu0 0.0
  %2456 = vmatprep.subr.mxu0 0.0
  %2457 = vmatpush1.msra.mxu0 0.0
  %2458 = vmatprep.subr.mxu0 0.0
  %2459 = vmatpush1.msra.mxu0 0.0
  %2460 = vmatprep.subr.mxu0 0.0
  %2461 = vmatpush1.msra.mxu0 0.0
  %2462 = vmatprep.subr.mxu0 0.0
  %2463 = vmatpush1.msra.mxu0 0.0
  %2464 = vmatprep.subr.mxu0 0.0
  %2465 = vmatpush1.msra.mxu0 0.0
  %2466 = vmatprep.subr.mxu0 0.0
  %2467 = vmatpush1.msra.mxu0 0.0
  %2468 = vmatprep.subr.mxu0 0.0
  %2469 = vmatpush1.msra.mxu0 0.0
  %2470 = vmatprep.subr.mxu0 0.0
  %2471 = vmatpush1.msra.mxu0 0.0
  %2472 = vmatprep.subr.mxu0 0.0
  %2473 = vmatpush1.msra.mxu0 0.0
  %2474 = vmatprep.subr.mxu0 0.0
  %2475 = vmatpush1.msra.mxu0 0.0
  %2476 = vmatprep.subr.mxu0 0.0
  %2477 = vmatpush1.msra.mxu0 0.0
  %2478 = vmatprep.subr.mxu0 0.0
  %2479 = vmatpush1.msra.mxu0 0.0
  %2480 = vmatprep.subr.mxu0 0.0
  %2481 = vmatpush1.msra.mxu0 0.0
  %2482 = vmatprep.subr.mxu0 0.0
  %2483 = vmatpush1.msra.mxu0 0.0
  %2484 = vmatprep.subr.mxu0 0.0
  %2485 = vmatpush1.msra.mxu0 0.0
  %2486 = vmatprep.subr.mxu0 0.0
  %2487 = vmatpush1.msra.mxu0 0.0
  %2488 = vmatprep.subr.mxu0 0.0
  %2489 = vmatpush1.msra.mxu0 0.0
  %2490 = vmatprep.subr.mxu0 0.0
  %2491 = vmatpush1.msra.mxu0 0.0
  %2492 = vmatprep.subr.mxu0 0.0
  %2493 = vmatpush1.msra.mxu0 0.0
  %2494 = vmatprep.subr.mxu0 0.0
  %2495 = vmatpush1.msra.mxu0 0.0
  %2496 = vmatprep.subr.mxu0 0.0
  %2497 = vmatpush1.msra.mxu0 0.0
  %2498 = vmatprep.subr.mxu0 0.0
  %2499 = vmatpush1.msra.mxu0 0.0
  %2500 = vmatprep.mubr.f32.mxu0 0.0
  %2501 = vmatmul.mubr.f32.gmra.mrb[0].mxu0 %v2431
  %v2502 = vpop.f32.mrb[0].mxu0
  %v2503 = vadd.f32 %v2422, %v2502
  %v2504 = vpop.f32.mrb[0].mxu0
  %2505 = vmatprep.mubr.f32.mxu0 0.0
  %2506 = vmatmul.mubr.f32.gmra.mrb[0].mxu0 %v2434
  %v2507 = vpop.f32.mrb[0].mxu0
  %v2508 = vadd.f32 %v2427, %v2507
  %v2509 = vpop.f32.mrb[0].mxu0
  %2510 = vdwg.mxu0
  %v2511 = vadd.f32 %v2503, %v85
  %v2512 = vadd.f32 %v2508, %v85
  %v2513 = vxor.u32 %v2511, 2147483648
  %v2514 = vxor.u32 %v2512, 2147483648
  %v2515 = vmul.f32 %v2513, 1.442695
  %v2516 = vpow.pop %v2515
  %v2517 = vmul.f32 %v2514, 1.442695
  %v2518 = vpow.pop %v2517
  %v2519 = vadd.f32 %v2516, 1.0
  %v2520 = vadd.f32 %v2518, 1.0
  %v2521 = vrcp.pop %v2519
  %v2522 = vmul.f32 1.0, %v2521
  %v2523 = vrcp.pop %v2520
  %v2524 = vmul.f32 1.0, %v2523
  %v2525 = vtanh.pop %v2511
  %v2526 = vtanh.pop %v2512
  %v2527 = vmul.f32 %v2522, %v1787
  %v2528 = vmul.f32 %v2524, %v1788
  %2531 = vrot.lane.b32.xlu0 %v2525, 64
  %v2532 = vpop.permute.xlu0 %2531
  %2533 = vrot.lane.b32.xlu0 %v2526, 64
  %v2534 = vpop.permute.xlu0 %2533
  %v2537 = vmul.f32 %v2522, %v2532
  %v2538 = vmul.f32 %v2524, %v2534
  %2541 = vrot.lane.b32.xlu0 %v2537, 32
  %v2542 = vpop.permute.xlu0 %2541
  %2543 = vrot.lane.b32.xlu0 %v2538, 32
  %v2544 = vpop.permute.xlu0 %2543
  %v2547 = vadd.f32 %v2527, %v2542
  %v2548 = vadd.f32 %v2528, %v2544
  %v2549 = vtanh.pop %v2547
  %v2550 = vtanh.pop %v2548
  %2553 = vrot.lane.b32.xlu0 %v2549, 64
  %v2554 = vpop.permute.xlu0 %2553
  %2555 = vrot.lane.b32.xlu0 %v2550, 64
  %v2556 = vpop.permute.xlu0 %2555
  %v2559 = vmul.f32 %v2522, %v2554
  %v2560 = vmul.f32 %v2524, %v2556
  %v2561 = vpack.c.bf16 %v2560, %v2559
  %2563 = vrot.lane.b32.xlu0 %v2561, 32
  %v2564 = vpop.permute.xlu0 %2563
  %2566 = vmatprep.subr.bf16.mxu0 0
  %2567 = vmatpush1.bf16.msra.mxu0 %v2564
  %2568 = vmatprep.subr.bf16.mxu0 0
  %2569 = vmatpush1.bf16.msra.mxu0 0
  %2570 = vmatprep.subr.bf16.mxu0 0
  %2571 = vmatpush1.bf16.msra.mxu0 0
  %2572 = vmatprep.subr.bf16.mxu0 0
  %2573 = vmatpush1.bf16.msra.mxu0 0
  %2574 = vmatprep.subr.bf16.mxu0 0
  %2575 = vmatpush1.bf16.msra.mxu0 0
  %2576 = vmatprep.subr.bf16.mxu0 0
  %2577 = vmatpush1.bf16.msra.mxu0 0
  %2578 = vmatprep.subr.bf16.mxu0 0
  %2579 = vmatpush1.bf16.msra.mxu0 0
  %2580 = vmatprep.subr.bf16.mxu0 0
  %2581 = vmatpush1.bf16.msra.mxu0 0
  %2582 = vmatprep.subr.bf16.mxu0 0
  %2583 = vmatpush1.bf16.msra.mxu0 0
  %2584 = vmatprep.subr.bf16.mxu0 0
  %2585 = vmatpush1.bf16.msra.mxu0 0
  %2586 = vmatprep.subr.bf16.mxu0 0
  %2587 = vmatpush1.bf16.msra.mxu0 0
  %2588 = vmatprep.subr.bf16.mxu0 0
  %2589 = vmatpush1.bf16.msra.mxu0 0
  %2590 = vmatprep.subr.bf16.mxu0 0
  %2591 = vmatpush1.bf16.msra.mxu0 0
  %2592 = vmatprep.subr.bf16.mxu0 0
  %2593 = vmatpush1.bf16.msra.mxu0 0
  %2594 = vmatprep.subr.bf16.mxu0 0
  %2595 = vmatpush1.bf16.msra.mxu0 0
  %2596 = vmatprep.subr.bf16.mxu0 0
  %2597 = vmatpush1.bf16.msra.mxu0 0
  %2598 = vmatprep.mubr.bf16.mxu0 0
  %2599 = vmatmul.mubr.bf16.gmra.mrb[0].mxu0 %v156
  %v2600 = vpop.f32.mrb[0].mxu0
  %v2601 = vadd.f32 0.0, %v2600
  %v2602 = vpop.f32.mrb[0].mxu0
  %v2603 = vpop.f32.mrb[0].mxu0
  %v2604 = vadd.f32 0.0, %v2603
  %v2605 = vpop.f32.mrb[0].mxu0
  %2606 = vmatprep.mubr.bf16.mxu0 0
  %2607 = vmatmul.mubr.bf16.gmra.mrb[0].mxu0 %v159
  %v2608 = vpop.f32.mrb[0].mxu0
  %v2609 = vadd.f32 0.0, %v2608
  %v2610 = vpop.f32.mrb[0].mxu0
  %v2611 = vpop.f32.mrb[0].mxu0
  %v2612 = vadd.f32 0.0, %v2611
  %v2613 = vpop.f32.mrb[0].mxu0
  %2614 = vmatprep.mubr.bf16.mxu0 0
  %2615 = vmatmul.mubr.bf16.gmra.mrb[0].mxu0 %v162
  %v2616 = vpop.f32.mrb[0].mxu0
  %v2617 = vadd.f32 0.0, %v2616
  %v2618 = vpop.f32.mrb[0].mxu0
  %v2619 = vpop.f32.mrb[0].mxu0
  %v2620 = vadd.f32 0.0, %v2619
  %v2621 = vpop.f32.mrb[0].mxu0
  %2622 = vmatprep.mubr.bf16.mxu0 0
  %2623 = vmatmul.mubr.bf16.gmra.mrb[0].mxu0 %v165
  %v2624 = vpop.f32.mrb[0].mxu0
  %v2625 = vadd.f32 0.0, %v2624
  %v2626 = vpop.f32.mrb[0].mxu0
  %v2627 = vpop.f32.mrb[0].mxu0
  %v2628 = vadd.f32 0.0, %v2627
  %v2629 = vpop.f32.mrb[0].mxu0
  %2630 = vdwg.mxu0
  %v2631 = vpack.c.bf16 %v2604, %v2601
  %v2632 = vpack.c.bf16 %v2612, %v2609
  %v2633 = vpack.c.bf16 %v2620, %v2617
  %v2634 = vpack.c.bf16 %v2628, %v2625
  %v2636 = vsel %vm248, %v2633, 0
  %v2639 = vsel %vm248, %v2634, 0
  %v2642 = vsel %vm248, %v2631, 0
  %v2645 = vsel %vm248, %v2632, 0
  %2647 = vmatprep.subr.bf16.mxu0 0
  %2648 = vmatpush1.bf16.msra.mxu0 %v244
  %2649 = vmatprep.subr.bf16.mxu0 0
  %2650 = vmatpush1.bf16.msra.mxu0 %v245
  %2651 = vmatprep.subr.bf16.mxu0 0
  %2652 = vmatpush1.bf16.msra.mxu0 0
  %2653 = vmatprep.subr.bf16.mxu0 0
  %2654 = vmatpush1.bf16.msra.mxu0 0
  %2655 = vmatprep.subr.bf16.mxu0 0
  %2656 = vmatpush1.bf16.msra.mxu0 0
  %2657 = vmatprep.subr.bf16.mxu0 0
  %2658 = vmatpush1.bf16.msra.mxu0 0
  %2659 = vmatprep.subr.bf16.mxu0 0
  %2660 = vmatpush1.bf16.msra.mxu0 0
  %2661 = vmatprep.subr.bf16.mxu0 0
  %2662 = vmatpush1.bf16.msra.mxu0 0
  %2663 = vmatprep.subr.bf16.mxu0 0
  %2664 = vmatpush1.bf16.msra.mxu0 0
  %2665 = vmatprep.subr.bf16.mxu0 0
  %2666 = vmatpush1.bf16.msra.mxu0 0
  %2667 = vmatprep.subr.bf16.mxu0 0
  %2668 = vmatpush1.bf16.msra.mxu0 0
  %2669 = vmatprep.subr.bf16.mxu0 0
  %2670 = vmatpush1.bf16.msra.mxu0 0
  %2671 = vmatprep.subr.bf16.mxu0 0
  %2672 = vmatpush1.bf16.msra.mxu0 0
  %2673 = vmatprep.subr.bf16.mxu0 0
  %2674 = vmatpush1.bf16.msra.mxu0 0
  %2675 = vmatprep.subr.bf16.mxu0 0
  %2676 = vmatpush1.bf16.msra.mxu0 0
  %2677 = vmatprep.subr.bf16.mxu0 0
  %2678 = vmatpush1.bf16.msra.mxu0 0
  %2679 = vmatprep.mubr.bf16.mxu0 0
  %2680 = vmatmul.mubr.bf16.gmra.mrb[0].mxu0 %v2636
  %v2681 = vpop.f32.mrb[0].mxu0
  %v2682 = vadd.f32 0.0, %v2681
  %v2683 = vpop.f32.mrb[0].mxu0
  %v2684 = vpop.f32.mrb[0].mxu0
  %v2685 = vadd.f32 0.0, %v2684
  %v2686 = vpop.f32.mrb[0].mxu0
  %2687 = vmatprep.mubr.bf16.mxu0 0
  %2688 = vmatmul.mubr.bf16.gmra.mrb[0].mxu0 %v2639
  %v2689 = vpop.f32.mrb[0].mxu0
  %v2690 = vadd.f32 0.0, %v2689
  %v2691 = vpop.f32.mrb[0].mxu0
  %v2692 = vpop.f32.mrb[0].mxu0
  %v2693 = vadd.f32 0.0, %v2692
  %v2694 = vpop.f32.mrb[0].mxu0
  %2695 = vmatprep.mubr.bf16.mxu0 0
  %2696 = vmatmul.mubr.bf16.gmra.mrb[0].mxu0 %v2642
  %v2697 = vpop.f32.mrb[0].mxu0
  %v2698 = vadd.f32 0.0, %v2697
  %v2699 = vpop.f32.mrb[0].mxu0
  %v2700 = vpop.f32.mrb[0].mxu0
  %v2701 = vadd.f32 0.0, %v2700
  %v2702 = vpop.f32.mrb[0].mxu0
  %2703 = vmatprep.mubr.bf16.mxu0 0
  %2704 = vmatmul.mubr.bf16.gmra.mrb[0].mxu0 %v2645
  %v2705 = vpop.f32.mrb[0].mxu0
  %v2706 = vadd.f32 0.0, %v2705
  %v2707 = vpop.f32.mrb[0].mxu0
  %v2708 = vpop.f32.mrb[0].mxu0
  %v2709 = vadd.f32 0.0, %v2708
  %v2710 = vpop.f32.mrb[0].mxu0
  %2711 = vdwg.mxu0
  %2712 = vmatprep.subr.bf16.mxu0 0
  %2713 = vmatpush1.bf16.msra.mxu0 %v334
  %2714 = vmatprep.subr.bf16.mxu0 0
  %2715 = vmatpush1.bf16.msra.mxu0 %v335
  %2716 = vmatprep.subr.bf16.mxu0 0
  %2717 = vmatpush1.bf16.msra.mxu0 0
  %2718 = vmatprep.subr.bf16.mxu0 0
  %2719 = vmatpush1.bf16.msra.mxu0 0
  %2720 = vmatprep.subr.bf16.mxu0 0
  %2721 = vmatpush1.bf16.msra.mxu0 0
  %2722 = vmatprep.subr.bf16.mxu0 0
  %2723 = vmatpush1.bf16.msra.mxu0 0
  %2724 = vmatprep.subr.bf16.mxu0 0
  %2725 = vmatpush1.bf16.msra.mxu0 0
  %2726 = vmatprep.subr.bf16.mxu0 0
  %2727 = vmatpush1.bf16.msra.mxu0 0
  %2728 = vmatprep.subr.bf16.mxu0 0
  %2729 = vmatpush1.bf16.msra.mxu0 0
  %2730 = vmatprep.subr.bf16.mxu0 0
  %2731 = vmatpush1.bf16.msra.mxu0 0
  %2732 = vmatprep.subr.bf16.mxu0 0
  %2733 = vmatpush1.bf16.msra.mxu0 0
  %2734 = vmatprep.subr.bf16.mxu0 0
  %2735 = vmatpush1.bf16.msra.mxu0 0
  %2736 = vmatprep.subr.bf16.mxu0 0
  %2737 = vmatpush1.bf16.msra.mxu0 0
  %2738 = vmatprep.subr.bf16.mxu0 0
  %2739 = vmatpush1.bf16.msra.mxu0 0
  %2740 = vmatprep.subr.bf16.mxu0 0
  %2741 = vmatpush1.bf16.msra.mxu0 0
  %2742 = vmatprep.subr.bf16.mxu0 0
  %2743 = vmatpush1.bf16.msra.mxu0 0
  %2744 = vmatprep.mubr.bf16.mxu0 0
  %2745 = vmatmul.mubr.bf16.gmra.mrb[0].mxu0 %v2642
  %v2746 = vpop.f32.mrb[0].mxu0
  %v2747 = vadd.f32 %v2682, %v2746
  %v2748 = vpop.f32.mrb[0].mxu0
  %v2749 = vpop.f32.mrb[0].mxu0
  %v2750 = vadd.f32 %v2685, %v2749
  %v2751 = vpop.f32.mrb[0].mxu0
  %2752 = vmatprep.mubr.bf16.mxu0 0
  %2753 = vmatmul.mubr.bf16.gmra.mrb[0].mxu0 %v2645
  %v2754 = vpop.f32.mrb[0].mxu0
  %v2755 = vadd.f32 %v2690, %v2754
  %v2756 = vpop.f32.mrb[0].mxu0
  %v2757 = vpop.f32.mrb[0].mxu0
  %v2758 = vadd.f32 %v2693, %v2757
  %v2759 = vpop.f32.mrb[0].mxu0
  %2760 = vmatprep.mubr.bf16.mxu0 0
  %2761 = vmatmul.mubr.bf16.gmra.mrb[0].mxu0 %v2636
  %v2762 = vpop.f32.mrb[0].mxu0
  %v2763 = vadd.f32 %v2698, %v2762
  %v2764 = vpop.f32.mrb[0].mxu0
  %v2765 = vpop.f32.mrb[0].mxu0
  %v2766 = vadd.f32 %v2701, %v2765
  %v2767 = vpop.f32.mrb[0].mxu0
  %2768 = vmatprep.mubr.bf16.mxu0 0
  %2769 = vmatmul.mubr.bf16.gmra.mrb[0].mxu0 %v2639
  %v2770 = vpop.f32.mrb[0].mxu0
  %v2771 = vadd.f32 %v2706, %v2770
  %v2772 = vpop.f32.mrb[0].mxu0
  %v2773 = vpop.f32.mrb[0].mxu0
  %v2774 = vadd.f32 %v2709, %v2773
  %v2775 = vpop.f32.mrb[0].mxu0
  %2776 = vdwg.mxu0
  %v2777 = vpack.c.bf16 %v2750, %v2747
  %v2778 = vpack.c.bf16 %v2758, %v2755
  %v2779 = vpack.c.bf16 %v2766, %v2763
  %v2780 = vpack.c.bf16 %v2774, %v2771
  %2781 = vmatprep.subr.bf16.mxu0 0
  %2782 = vmatpush1.bf16.msra.mxu0 %v2564
  %2783 = vmatprep.subr.bf16.mxu0 0
  %2784 = vmatpush1.bf16.msra.mxu0 0
  %2785 = vmatprep.subr.bf16.mxu0 0
  %2786 = vmatpush1.bf16.msra.mxu0 0
  %2787 = vmatprep.subr.bf16.mxu0 0
  %2788 = vmatpush1.bf16.msra.mxu0 0
  %2789 = vmatprep.subr.bf16.mxu0 0
  %2790 = vmatpush1.bf16.msra.mxu0 0
  %2791 = vmatprep.subr.bf16.mxu0 0
  %2792 = vmatpush1.bf16.msra.mxu0 0
  %2793 = vmatprep.subr.bf16.mxu0 0
  %2794 = vmatpush1.bf16.msra.mxu0 0
  %2795 = vmatprep.subr.bf16.mxu0 0
  %2796 = vmatpush1.bf16.msra.mxu0 0
  %2797 = vmatprep.subr.bf16.mxu0 0
  %2798 = vmatpush1.bf16.msra.mxu0 0
  %2799 = vmatprep.subr.bf16.mxu0 0
  %2800 = vmatpush1.bf16.msra.mxu0 0
  %2801 = vmatprep.subr.bf16.mxu0 0
  %2802 = vmatpush1.bf16.msra.mxu0 0
  %2803 = vmatprep.subr.bf16.mxu0 0
  %2804 = vmatpush1.bf16.msra.mxu0 0
  %2805 = vmatprep.subr.bf16.mxu0 0
  %2806 = vmatpush1.bf16.msra.mxu0 0
  %2807 = vmatprep.subr.bf16.mxu0 0
  %2808 = vmatpush1.bf16.msra.mxu0 0
  %2809 = vmatprep.subr.bf16.mxu0 0
  %2810 = vmatpush1.bf16.msra.mxu0 0
  %2811 = vmatprep.subr.bf16.mxu0 0
  %2812 = vmatpush1.bf16.msra.mxu0 0
  %2813 = vmatprep.mubr.bf16.mxu0 0
  %2814 = vmatmul.mubr.bf16.gmra.mrb[0].mxu0 %v428
  %v2815 = vpop.f32.mrb[0].mxu0
  %v2816 = vadd.f32 0.0, %v2815
  %v2817 = vpop.f32.mrb[0].mxu0
  %v2818 = vpop.f32.mrb[0].mxu0
  %v2819 = vadd.f32 0.0, %v2818
  %v2820 = vpop.f32.mrb[0].mxu0
  %2821 = vmatprep.mubr.bf16.mxu0 0
  %2822 = vmatmul.mubr.bf16.gmra.mrb[0].mxu0 %v431
  %v2823 = vpop.f32.mrb[0].mxu0
  %v2824 = vadd.f32 0.0, %v2823
  %v2825 = vpop.f32.mrb[0].mxu0
  %v2826 = vpop.f32.mrb[0].mxu0
  %v2827 = vadd.f32 0.0, %v2826
  %v2828 = vpop.f32.mrb[0].mxu0
  %2829 = vmatprep.mubr.bf16.mxu0 0
  %2830 = vmatmul.mubr.bf16.gmra.mrb[0].mxu0 %v434
  %v2831 = vpop.f32.mrb[0].mxu0
  %v2832 = vadd.f32 0.0, %v2831
  %v2833 = vpop.f32.mrb[0].mxu0
  %v2834 = vpop.f32.mrb[0].mxu0
  %v2835 = vadd.f32 0.0, %v2834
  %v2836 = vpop.f32.mrb[0].mxu0
  %2837 = vmatprep.mubr.bf16.mxu0 0
  %2838 = vmatmul.mubr.bf16.gmra.mrb[0].mxu0 %v437
  %v2839 = vpop.f32.mrb[0].mxu0
  %v2840 = vadd.f32 0.0, %v2839
  %v2841 = vpop.f32.mrb[0].mxu0
  %v2842 = vpop.f32.mrb[0].mxu0
  %v2843 = vadd.f32 0.0, %v2842
  %v2844 = vpop.f32.mrb[0].mxu0
  %2845 = vdwg.mxu0
  %2850 = vrot.lane.b32.xlu0 %v2832, 32
  %v2851 = vpop.permute.xlu0 %2850
  %2852 = vrot.lane.b32.xlu0 %v2835, 32
  %v2853 = vpop.permute.xlu0 %2852
  %2854 = vrot.lane.b32.xlu0 %v2840, 32
  %v2855 = vpop.permute.xlu0 %2854
  %2856 = vrot.lane.b32.xlu0 %v2843, 32
  %v2857 = vpop.permute.xlu0 %2856
  %v2862 = vsel %vm248, %v2816, %v2851
  %v2863 = vsel %vm248, %v2819, %v2853
  %v2864 = vsel %vm248, %v2824, %v2855
  %v2865 = vsel %vm248, %v2827, %v2857
  %v2866 = vpack.c.bf16 %v2863, %v2862
  %v2867 = vpack.c.bf16 %v2865, %v2864
  %v2869 = vsel %vm550, %v2866, 0
  %v2872 = vsel %vm550, %v2867, 0
  %2874 = vmatprep.subr.bf16.mxu0 0
  %2875 = vmatpush1.bf16.msra.mxu0 %v542
  %2876 = vmatprep.subr.bf16.mxu0 0
  %2877 = vmatpush1.bf16.msra.mxu0 %v543
  %2878 = vmatprep.subr.bf16.mxu0 0
  %2879 = vmatpush1.bf16.msra.mxu0 %v544
  %2880 = vmatprep.subr.bf16.mxu0 0
  %2881 = vmatpush1.bf16.msra.mxu0 %v545
  %2882 = vmatprep.subr.bf16.mxu0 0
  %2883 = vmatpush1.bf16.msra.mxu0 0
  %2884 = vmatprep.subr.bf16.mxu0 0
  %2885 = vmatpush1.bf16.msra.mxu0 0
  %2886 = vmatprep.subr.bf16.mxu0 0
  %2887 = vmatpush1.bf16.msra.mxu0 0
  %2888 = vmatprep.subr.bf16.mxu0 0
  %2889 = vmatpush1.bf16.msra.mxu0 0
  %2890 = vmatprep.subr.bf16.mxu0 0
  %2891 = vmatpush1.bf16.msra.mxu0 0
  %2892 = vmatprep.subr.bf16.mxu0 0
  %2893 = vmatpush1.bf16.msra.mxu0 0
  %2894 = vmatprep.subr.bf16.mxu0 0
  %2895 = vmatpush1.bf16.msra.mxu0 0
  %2896 = vmatprep.subr.bf16.mxu0 0
  %2897 = vmatpush1.bf16.msra.mxu0 0
  %2898 = vmatprep.subr.bf16.mxu0 0
  %2899 = vmatpush1.bf16.msra.mxu0 0
  %2900 = vmatprep.subr.bf16.mxu0 0
  %2901 = vmatpush1.bf16.msra.mxu0 0
  %2902 = vmatprep.subr.bf16.mxu0 0
  %2903 = vmatpush1.bf16.msra.mxu0 0
  %2904 = vmatprep.subr.bf16.mxu0 0
  %2905 = vmatpush1.bf16.msra.mxu0 0
  %2906 = vmatprep.mubr.bf16.mxu0 0
  %2907 = vmatmul.mubr.bf16.gmra.mrb[0].mxu0 %v2869
  %v2908 = vpop.f32.mrb[0].mxu0
  %v2909 = vadd.f32 0.0, %v2908
  %v2910 = vpop.f32.mrb[0].mxu0
  %v2911 = vpop.f32.mrb[0].mxu0
  %v2912 = vadd.f32 0.0, %v2911
  %v2913 = vpop.f32.mrb[0].mxu0
  %2914 = vmatprep.mubr.bf16.mxu0 0
  %2915 = vmatmul.mubr.bf16.gmra.mrb[0].mxu0 %v2872
  %v2916 = vpop.f32.mrb[0].mxu0
  %v2917 = vadd.f32 0.0, %v2916
  %v2918 = vpop.f32.mrb[0].mxu0
  %v2919 = vpop.f32.mrb[0].mxu0
  %v2920 = vadd.f32 0.0, %v2919
  %v2921 = vpop.f32.mrb[0].mxu0
  %2922 = vdwg.mxu0
  %2923 = vmatprep.subr.bf16.mxu0 0
  %2924 = vmatpush1.bf16.msra.mxu0 %v622
  %2925 = vmatprep.subr.bf16.mxu0 0
  %2926 = vmatpush1.bf16.msra.mxu0 %v623
  %2927 = vmatprep.subr.bf16.mxu0 0
  %2928 = vmatpush1.bf16.msra.mxu0 %v624
  %2929 = vmatprep.subr.bf16.mxu0 0
  %2930 = vmatpush1.bf16.msra.mxu0 %v625
  %2931 = vmatprep.subr.bf16.mxu0 0
  %2932 = vmatpush1.bf16.msra.mxu0 0
  %2933 = vmatprep.subr.bf16.mxu0 0
  %2934 = vmatpush1.bf16.msra.mxu0 0
  %2935 = vmatprep.subr.bf16.mxu0 0
  %2936 = vmatpush1.bf16.msra.mxu0 0
  %2937 = vmatprep.subr.bf16.mxu0 0
  %2938 = vmatpush1.bf16.msra.mxu0 0
  %2939 = vmatprep.subr.bf16.mxu0 0
  %2940 = vmatpush1.bf16.msra.mxu0 0
  %2941 = vmatprep.subr.bf16.mxu0 0
  %2942 = vmatpush1.bf16.msra.mxu0 0
  %2943 = vmatprep.subr.bf16.mxu0 0
  %2944 = vmatpush1.bf16.msra.mxu0 0
  %2945 = vmatprep.subr.bf16.mxu0 0
  %2946 = vmatpush1.bf16.msra.mxu0 0
  %2947 = vmatprep.subr.bf16.mxu0 0
  %2948 = vmatpush1.bf16.msra.mxu0 0
  %2949 = vmatprep.subr.bf16.mxu0 0
  %2950 = vmatpush1.bf16.msra.mxu0 0
  %2951 = vmatprep.subr.bf16.mxu0 0
  %2952 = vmatpush1.bf16.msra.mxu0 0
  %2953 = vmatprep.subr.bf16.mxu0 0
  %2954 = vmatpush1.bf16.msra.mxu0 0
  %2955 = vmatprep.mubr.bf16.mxu0 0
  %2956 = vmatmul.mubr.bf16.gmra.mrb[0].mxu0 %v2869
  %v2957 = vpop.f32.mrb[0].mxu0
  %v2958 = vadd.f32 0.0, %v2957
  %v2959 = vpop.f32.mrb[0].mxu0
  %v2960 = vpop.f32.mrb[0].mxu0
  %v2961 = vadd.f32 0.0, %v2960
  %v2962 = vpop.f32.mrb[0].mxu0
  %2963 = vmatprep.mubr.bf16.mxu0 0
  %2964 = vmatmul.mubr.bf16.gmra.mrb[0].mxu0 %v2872
  %v2965 = vpop.f32.mrb[0].mxu0
  %v2966 = vadd.f32 0.0, %v2965
  %v2967 = vpop.f32.mrb[0].mxu0
  %v2968 = vpop.f32.mrb[0].mxu0
  %v2969 = vadd.f32 0.0, %v2968
  %v2970 = vpop.f32.mrb[0].mxu0
  %2971 = vdwg.mxu0
  %v2972 = vpack.c.bf16 %v2912, %v2909
  %v2973 = vpack.c.bf16 %v2920, %v2917
  %v2974 = vpack.c.bf16 %v2961, %v2958
  %v2975 = vpack.c.bf16 %v2969, %v2966
  %2976 = vmatprep.subr.bf16.mxu0 0
  %2977 = vmatpush1.bf16.msra.mxu0 %v2972
  %2978 = vmatprep.subr.bf16.mxu0 0
  %2979 = vmatpush1.bf16.msra.mxu0 %v2973
  %2980 = vmatprep.subr.bf16.mxu0 0
  %2981 = vmatpush1.bf16.msra.mxu0 %v2974
  %2982 = vmatprep.subr.bf16.mxu0 0
  %2983 = vmatpush1.bf16.msra.mxu0 %v2975
  %2984 = vmatprep.subr.bf16.mxu0 0
  %2985 = vmatpush1.bf16.msra.mxu0 0
  %2986 = vmatprep.subr.bf16.mxu0 0
  %2987 = vmatpush1.bf16.msra.mxu0 0
  %2988 = vmatprep.subr.bf16.mxu0 0
  %2989 = vmatpush1.bf16.msra.mxu0 0
  %2990 = vmatprep.subr.bf16.mxu0 0
  %2991 = vmatpush1.bf16.msra.mxu0 0
  %2992 = vmatprep.subr.bf16.mxu0 0
  %2993 = vmatpush1.bf16.msra.mxu0 0
  %2994 = vmatprep.subr.bf16.mxu0 0
  %2995 = vmatpush1.bf16.msra.mxu0 0
  %2996 = vmatprep.subr.bf16.mxu0 0
  %2997 = vmatpush1.bf16.msra.mxu0 0
  %2998 = vmatprep.subr.bf16.mxu0 0
  %2999 = vmatpush1.bf16.msra.mxu0 0
  %3000 = vmatprep.subr.bf16.mxu0 0
  %3001 = vmatpush1.bf16.msra.mxu0 0
  %3002 = vmatprep.subr.bf16.mxu0 0
  %3003 = vmatpush1.bf16.msra.mxu0 0
  %3004 = vmatprep.subr.bf16.mxu0 0
  %3005 = vmatpush1.bf16.msra.mxu0 0
  %3006 = vmatprep.subr.bf16.mxu0 0
  %3007 = vmatpush1.bf16.msra.mxu0 0
  %3008 = vmatprep.mubr.bf16.mxu0 0
  %3009 = vmatmul.mubr.bf16.gmra.mrb[0].mxu0 %v689
  %v3010 = vpop.f32.mrb[0].mxu0
  %v3011 = vadd.f32 0.0, %v3010
  %v3012 = vpop.f32.mrb[0].mxu0
  %v3013 = vpop.f32.mrb[0].mxu0
  %v3014 = vadd.f32 0.0, %v3013
  %v3015 = vpop.f32.mrb[0].mxu0
  %3016 = vdwg.mxu0
  %3017 = vmatprep.subr.bf16.mxu0 0
  %3018 = vmatpush1.bf16.msra.mxu0 %v2777
  %3019 = vmatprep.subr.bf16.mxu0 0
  %3020 = vmatpush1.bf16.msra.mxu0 %v2778
  %3021 = vmatprep.subr.bf16.mxu0 0
  %3022 = vmatpush1.bf16.msra.mxu0 %v2779
  %3023 = vmatprep.subr.bf16.mxu0 0
  %3024 = vmatpush1.bf16.msra.mxu0 %v2780
  %3025 = vmatprep.subr.bf16.mxu0 0
  %3026 = vmatpush1.bf16.msra.mxu0 0
  %3027 = vmatprep.subr.bf16.mxu0 0
  %3028 = vmatpush1.bf16.msra.mxu0 0
  %3029 = vmatprep.subr.bf16.mxu0 0
  %3030 = vmatpush1.bf16.msra.mxu0 0
  %3031 = vmatprep.subr.bf16.mxu0 0
  %3032 = vmatpush1.bf16.msra.mxu0 0
  %3033 = vmatprep.subr.bf16.mxu0 0
  %3034 = vmatpush1.bf16.msra.mxu0 0
  %3035 = vmatprep.subr.bf16.mxu0 0
  %3036 = vmatpush1.bf16.msra.mxu0 0
  %3037 = vmatprep.subr.bf16.mxu0 0
  %3038 = vmatpush1.bf16.msra.mxu0 0
  %3039 = vmatprep.subr.bf16.mxu0 0
  %3040 = vmatpush1.bf16.msra.mxu0 0
  %3041 = vmatprep.subr.bf16.mxu0 0
  %3042 = vmatpush1.bf16.msra.mxu0 0
  %3043 = vmatprep.subr.bf16.mxu0 0
  %3044 = vmatpush1.bf16.msra.mxu0 0
  %3045 = vmatprep.subr.bf16.mxu0 0
  %3046 = vmatpush1.bf16.msra.mxu0 0
  %3047 = vmatprep.subr.bf16.mxu0 0
  %3048 = vmatpush1.bf16.msra.mxu0 0
  %3049 = vmatprep.mubr.bf16.mxu0 0
  %3050 = vmatmul.mubr.bf16.gmra.mrb[0].mxu0 %v738
  %v3051 = vpop.f32.mrb[0].mxu0
  %v3052 = vadd.f32 %v3011, %v3051
  %v3053 = vpop.f32.mrb[0].mxu0
  %v3054 = vpop.f32.mrb[0].mxu0
  %v3055 = vadd.f32 %v3014, %v3054
  %v3056 = vpop.f32.mrb[0].mxu0
  %3057 = vdwg.mxu0
  %v3058 = vmul.f32 %v3052, %v74
  %v3059 = vmul.f32 %v3055, %v79
  %v3060 = vsel %vm248, %v3058, 0.0
  %v3061 = vsel %vm248, %v3059, 0.0
  %v3062 = vadd.f32 %v3060, %v3061
  %v3063 = vrot.slane %v3062, 4
  %v3064 = vadd.f32 %v3062, %v3063
  %v3065 = vrot.slane %v3064, 2
  %v3066 = vadd.f32 %v3064, %v3065
  %v3067 = vrot.slane %v3066, 1
  %v3068 = vadd.f32 %v3066, %v3067
  %v3069 = vmul.f32 %v3068, %v792
  %v3070 = vsub.f32 %v3058, %v3069
  %v3071 = vsub.f32 %v3059, %v3069
  %v3072 = vmul.f32 %v3070, %v3070
  %v3073 = vmul.f32 %v3071, %v3071
  %v3074 = vsel %vm248, %v3072, 0.0
  %v3075 = vsel %vm248, %v3073, 0.0
  %v3076 = vadd.f32 %v3074, %v3075
  %v3077 = vrot.slane %v3076, 4
  %v3078 = vadd.f32 %v3076, %v3077
  %v3079 = vrot.slane %v3078, 2
  %v3080 = vadd.f32 %v3078, %v3079
  %v3081 = vrot.slane %v3080, 1
  %v3082 = vadd.f32 %v3080, %v3081
  %v3083 = vmul.f32 %v3082, %v792
  %v3084 = vadd.f32 %v3083, 1e-05
  %v3085 = vrsqrt.pop %v3084
  %v3086 = vmul.f32 %v54, %v3085
  %v3088 = vlaneseq
  %v3089 = vshrl.u32 %v3088, 7
  %v3090 = vsub.s32 0, %v3089
  %v3091 = vrot.slane %v3086, %v3090
  %v3093 = vmul.f32 %v3058, %v3091
  %v3094 = vmul.f32 %v3059, %v3091
  %v3095 = vmul.f32 %v3069, %v3086
  %v3096 = vsub.f32 %v55, %v3095
  %v3098 = vlaneseq
  %v3099 = vshrl.u32 %v3098, 7
  %v3100 = vsub.s32 0, %v3099
  %v3101 = vrot.slane %v3096, %v3100
  %v3103 = vadd.f32 %v3093, %v3101
  %v3104 = vadd.f32 %v3094, %v3101
  %3107 = vrot.lane.b32.xlu0 %v2559, 32
  %v3108 = vpop.permute.xlu0 %3107
  %3109 = vrot.lane.b32.xlu0 %v2560, 32
  %v3110 = vpop.permute.xlu0 %3109
  %v3111 = vsel %vm248, %v3108, 0
  %v3113 = vsel %vm248, %v3110, 0
  %3115 = vmatprep.subr.mxu0 0.0
  %3116 = vmatpush1.msra.mxu0 %v60
  %3117 = vmatprep.subr.mxu0 0.0
  %3118 = vmatpush1.msra.mxu0 %v61
  %3119 = vmatprep.subr.mxu0 0.0
  %3120 = vmatpush1.msra.mxu0 %v62
  %3121 = vmatprep.subr.mxu0 0.0
  %3122 = vmatpush1.msra.mxu0 %v63
  %3123 = vmatprep.subr.mxu0 0.0
  %3124 = vmatpush1.msra.mxu0 0.0
  %3125 = vmatprep.subr.mxu0 0.0
  %3126 = vmatpush1.msra.mxu0 0.0
  %3127 = vmatprep.subr.mxu0 0.0
  %3128 = vmatpush1.msra.mxu0 0.0
  %3129 = vmatprep.subr.mxu0 0.0
  %3130 = vmatpush1.msra.mxu0 0.0
  %3131 = vmatprep.subr.mxu0 0.0
  %3132 = vmatpush1.msra.mxu0 0.0
  %3133 = vmatprep.subr.mxu0 0.0
  %3134 = vmatpush1.msra.mxu0 0.0
  %3135 = vmatprep.subr.mxu0 0.0
  %3136 = vmatpush1.msra.mxu0 0.0
  %3137 = vmatprep.subr.mxu0 0.0
  %3138 = vmatpush1.msra.mxu0 0.0
  %3139 = vmatprep.subr.mxu0 0.0
  %3140 = vmatpush1.msra.mxu0 0.0
  %3141 = vmatprep.subr.mxu0 0.0
  %3142 = vmatpush1.msra.mxu0 0.0
  %3143 = vmatprep.subr.mxu0 0.0
  %3144 = vmatpush1.msra.mxu0 0.0
  %3145 = vmatprep.subr.mxu0 0.0
  %3146 = vmatpush1.msra.mxu0 0.0
  %3147 = vmatprep.subr.mxu0 0.0
  %3148 = vmatpush1.msra.mxu0 0.0
  %3149 = vmatprep.subr.mxu0 0.0
  %3150 = vmatpush1.msra.mxu0 0.0
  %3151 = vmatprep.subr.mxu0 0.0
  %3152 = vmatpush1.msra.mxu0 0.0
  %3153 = vmatprep.subr.mxu0 0.0
  %3154 = vmatpush1.msra.mxu0 0.0
  %3155 = vmatprep.subr.mxu0 0.0
  %3156 = vmatpush1.msra.mxu0 0.0
  %3157 = vmatprep.subr.mxu0 0.0
  %3158 = vmatpush1.msra.mxu0 0.0
  %3159 = vmatprep.subr.mxu0 0.0
  %3160 = vmatpush1.msra.mxu0 0.0
  %3161 = vmatprep.subr.mxu0 0.0
  %3162 = vmatpush1.msra.mxu0 0.0
  %3163 = vmatprep.subr.mxu0 0.0
  %3164 = vmatpush1.msra.mxu0 0.0
  %3165 = vmatprep.subr.mxu0 0.0
  %3166 = vmatpush1.msra.mxu0 0.0
  %3167 = vmatprep.subr.mxu0 0.0
  %3168 = vmatpush1.msra.mxu0 0.0
  %3169 = vmatprep.subr.mxu0 0.0
  %3170 = vmatpush1.msra.mxu0 0.0
  %3171 = vmatprep.subr.mxu0 0.0
  %3172 = vmatpush1.msra.mxu0 0.0
  %3173 = vmatprep.subr.mxu0 0.0
  %3174 = vmatpush1.msra.mxu0 0.0
  %3175 = vmatprep.subr.mxu0 0.0
  %3176 = vmatpush1.msra.mxu0 0.0
  %3177 = vmatprep.subr.mxu0 0.0
  %3178 = vmatpush1.msra.mxu0 0.0
  %3179 = vmatprep.mubr.f32.mxu0 0.0
  %3180 = vmatmul.mubr.f32.gmra.mrb[0].mxu0 %v3111
  %v3181 = vpop.f32.mrb[0].mxu0
  %v3182 = vadd.f32 0.0, %v3181
  %v3183 = vpop.f32.mrb[0].mxu0
  %3184 = vmatprep.mubr.f32.mxu0 0.0
  %3185 = vmatmul.mubr.f32.gmra.mrb[0].mxu0 %v3113
  %v3186 = vpop.f32.mrb[0].mxu0
  %v3187 = vadd.f32 0.0, %v3186
  %v3188 = vpop.f32.mrb[0].mxu0
  %3189 = vdwg.mxu0
  %v3191 = vsel %vm248, %v3103, 0
  %v3194 = vsel %vm248, %v3104, 0
  %3196 = vmatprep.subr.mxu0 0.0
  %3197 = vmatpush1.msra.mxu0 %v56
  %3198 = vmatprep.subr.mxu0 0.0
  %3199 = vmatpush1.msra.mxu0 %v57
  %3200 = vmatprep.subr.mxu0 0.0
  %3201 = vmatpush1.msra.mxu0 %v58
  %3202 = vmatprep.subr.mxu0 0.0
  %3203 = vmatpush1.msra.mxu0 %v59
  %3204 = vmatprep.subr.mxu0 0.0
  %3205 = vmatpush1.msra.mxu0 0.0
  %3206 = vmatprep.subr.mxu0 0.0
  %3207 = vmatpush1.msra.mxu0 0.0
  %3208 = vmatprep.subr.mxu0 0.0
  %3209 = vmatpush1.msra.mxu0 0.0
  %3210 = vmatprep.subr.mxu0 0.0
  %3211 = vmatpush1.msra.mxu0 0.0
  %3212 = vmatprep.subr.mxu0 0.0
  %3213 = vmatpush1.msra.mxu0 0.0
  %3214 = vmatprep.subr.mxu0 0.0
  %3215 = vmatpush1.msra.mxu0 0.0
  %3216 = vmatprep.subr.mxu0 0.0
  %3217 = vmatpush1.msra.mxu0 0.0
  %3218 = vmatprep.subr.mxu0 0.0
  %3219 = vmatpush1.msra.mxu0 0.0
  %3220 = vmatprep.subr.mxu0 0.0
  %3221 = vmatpush1.msra.mxu0 0.0
  %3222 = vmatprep.subr.mxu0 0.0
  %3223 = vmatpush1.msra.mxu0 0.0
  %3224 = vmatprep.subr.mxu0 0.0
  %3225 = vmatpush1.msra.mxu0 0.0
  %3226 = vmatprep.subr.mxu0 0.0
  %3227 = vmatpush1.msra.mxu0 0.0
  %3228 = vmatprep.subr.mxu0 0.0
  %3229 = vmatpush1.msra.mxu0 0.0
  %3230 = vmatprep.subr.mxu0 0.0
  %3231 = vmatpush1.msra.mxu0 0.0
  %3232 = vmatprep.subr.mxu0 0.0
  %3233 = vmatpush1.msra.mxu0 0.0
  %3234 = vmatprep.subr.mxu0 0.0
  %3235 = vmatpush1.msra.mxu0 0.0
  %3236 = vmatprep.subr.mxu0 0.0
  %3237 = vmatpush1.msra.mxu0 0.0
  %3238 = vmatprep.subr.mxu0 0.0
  %3239 = vmatpush1.msra.mxu0 0.0
  %3240 = vmatprep.subr.mxu0 0.0
  %3241 = vmatpush1.msra.mxu0 0.0
  %3242 = vmatprep.subr.mxu0 0.0
  %3243 = vmatpush1.msra.mxu0 0.0
  %3244 = vmatprep.subr.mxu0 0.0
  %3245 = vmatpush1.msra.mxu0 0.0
  %3246 = vmatprep.subr.mxu0 0.0
  %3247 = vmatpush1.msra.mxu0 0.0
  %3248 = vmatprep.subr.mxu0 0.0
  %3249 = vmatpush1.msra.mxu0 0.0
  %3250 = vmatprep.subr.mxu0 0.0
  %3251 = vmatpush1.msra.mxu0 0.0
  %3252 = vmatprep.subr.mxu0 0.0
  %3253 = vmatpush1.msra.mxu0 0.0
  %3254 = vmatprep.subr.mxu0 0.0
  %3255 = vmatpush1.msra.mxu0 0.0
  %3256 = vmatprep.subr.mxu0 0.0
  %3257 = vmatpush1.msra.mxu0 0.0
  %3258 = vmatprep.subr.mxu0 0.0
  %3259 = vmatpush1.msra.mxu0 0.0
  %3260 = vmatprep.mubr.f32.mxu0 0.0
  %3261 = vmatmul.mubr.f32.gmra.mrb[0].mxu0 %v3191
  %v3262 = vpop.f32.mrb[0].mxu0
  %v3263 = vadd.f32 %v3182, %v3262
  %v3264 = vpop.f32.mrb[0].mxu0
  %3265 = vmatprep.mubr.f32.mxu0 0.0
  %3266 = vmatmul.mubr.f32.gmra.mrb[0].mxu0 %v3194
  %v3267 = vpop.f32.mrb[0].mxu0
  %v3268 = vadd.f32 %v3187, %v3267
  %v3269 = vpop.f32.mrb[0].mxu0
  %3270 = vdwg.mxu0
  %v3271 = vadd.f32 %v3263, %v85
  %v3272 = vadd.f32 %v3268, %v85
  %v3273 = vxor.u32 %v3271, 2147483648
  %v3274 = vxor.u32 %v3272, 2147483648
  %v3275 = vmul.f32 %v3273, 1.442695
  %v3276 = vpow.pop %v3275
  %v3277 = vmul.f32 %v3274, 1.442695
  %v3278 = vpow.pop %v3277
  %v3279 = vadd.f32 %v3276, 1.0
  %v3280 = vadd.f32 %v3278, 1.0
  %v3281 = vrcp.pop %v3279
  %v3282 = vmul.f32 1.0, %v3281
  %v3283 = vrcp.pop %v3280
  %v3284 = vmul.f32 1.0, %v3283
  %v3285 = vtanh.pop %v3271
  %v3286 = vtanh.pop %v3272
  %v3287 = vmul.f32 %v3282, %v2547
  %v3288 = vmul.f32 %v3284, %v2548
  %3291 = vrot.lane.b32.xlu0 %v3285, 64
  %v3292 = vpop.permute.xlu0 %3291
  %3293 = vrot.lane.b32.xlu0 %v3286, 64
  %v3294 = vpop.permute.xlu0 %3293
  %v3297 = vmul.f32 %v3282, %v3292
  %v3298 = vmul.f32 %v3284, %v3294
  %3301 = vrot.lane.b32.xlu0 %v3297, 32
  %v3302 = vpop.permute.xlu0 %3301
  %3303 = vrot.lane.b32.xlu0 %v3298, 32
  %v3304 = vpop.permute.xlu0 %3303
  %v3307 = vadd.f32 %v3287, %v3302
  %v3308 = vadd.f32 %v3288, %v3304
  %v3309 = vtanh.pop %v3307
  %v3310 = vtanh.pop %v3308
  %3313 = vrot.lane.b32.xlu0 %v3309, 64
  %v3314 = vpop.permute.xlu0 %3313
  %3315 = vrot.lane.b32.xlu0 %v3310, 64
  %v3316 = vpop.permute.xlu0 %3315
  %v3319 = vmul.f32 %v3282, %v3314
  %v3320 = vmul.f32 %v3284, %v3316
  %3323 = vrot.lane.b32.xlu0 %v3319, 32
  %v3324 = vpop.permute.xlu0 %3323
  %3325 = vrot.lane.b32.xlu0 %v3320, 32
  %v3326 = vpop.permute.xlu0 %3325
  %v3327 = vsel %vm248, %v3324, 0
  %v3329 = vsel %vm248, %v3326, 0
  %3331 = vmatprep.subr.mxu0 0.0
  %3332 = vmatpush1.msra.mxu0 %v65
  %3333 = vmatprep.subr.mxu0 0.0
  %3334 = vmatpush1.msra.mxu0 %v66
  %3335 = vmatprep.subr.mxu0 0.0
  %3336 = vmatpush1.msra.mxu0 %v67
  %3337 = vmatprep.subr.mxu0 0.0
  %3338 = vmatpush1.msra.mxu0 %v68
  %3339 = vmatprep.subr.mxu0 0.0
  %3340 = vmatpush1.msra.mxu0 0.0
  %3341 = vmatprep.subr.mxu0 0.0
  %3342 = vmatpush1.msra.mxu0 0.0
  %3343 = vmatprep.subr.mxu0 0.0
  %3344 = vmatpush1.msra.mxu0 0.0
  %3345 = vmatprep.subr.mxu0 0.0
  %3346 = vmatpush1.msra.mxu0 0.0
  %3347 = vmatprep.subr.mxu0 0.0
  %3348 = vmatpush1.msra.mxu0 0.0
  %3349 = vmatprep.subr.mxu0 0.0
  %3350 = vmatpush1.msra.mxu0 0.0
  %3351 = vmatprep.subr.mxu0 0.0
  %3352 = vmatpush1.msra.mxu0 0.0
  %3353 = vmatprep.subr.mxu0 0.0
  %3354 = vmatpush1.msra.mxu0 0.0
  %3355 = vmatprep.subr.mxu0 0.0
  %3356 = vmatpush1.msra.mxu0 0.0
  %3357 = vmatprep.subr.mxu0 0.0
  %3358 = vmatpush1.msra.mxu0 0.0
  %3359 = vmatprep.subr.mxu0 0.0
  %3360 = vmatpush1.msra.mxu0 0.0
  %3361 = vmatprep.subr.mxu0 0.0
  %3362 = vmatpush1.msra.mxu0 0.0
  %3363 = vmatprep.subr.mxu0 0.0
  %3364 = vmatpush1.msra.mxu0 0.0
  %3365 = vmatprep.subr.mxu0 0.0
  %3366 = vmatpush1.msra.mxu0 0.0
  %3367 = vmatprep.subr.mxu0 0.0
  %3368 = vmatpush1.msra.mxu0 0.0
  %3369 = vmatprep.subr.mxu0 0.0
  %3370 = vmatpush1.msra.mxu0 0.0
  %3371 = vmatprep.subr.mxu0 0.0
  %3372 = vmatpush1.msra.mxu0 0.0
  %3373 = vmatprep.subr.mxu0 0.0
  %3374 = vmatpush1.msra.mxu0 0.0
  %3375 = vmatprep.subr.mxu0 0.0
  %3376 = vmatpush1.msra.mxu0 0.0
  %3377 = vmatprep.subr.mxu0 0.0
  %3378 = vmatpush1.msra.mxu0 0.0
  %3379 = vmatprep.subr.mxu0 0.0
  %3380 = vmatpush1.msra.mxu0 0.0
  %3381 = vmatprep.subr.mxu0 0.0
  %3382 = vmatpush1.msra.mxu0 0.0
  %3383 = vmatprep.subr.mxu0 0.0
  %3384 = vmatpush1.msra.mxu0 0.0
  %3385 = vmatprep.subr.mxu0 0.0
  %3386 = vmatpush1.msra.mxu0 0.0
  %3387 = vmatprep.subr.mxu0 0.0
  %3388 = vmatpush1.msra.mxu0 0.0
  %3389 = vmatprep.subr.mxu0 0.0
  %3390 = vmatpush1.msra.mxu0 0.0
  %3391 = vmatprep.subr.mxu0 0.0
  %3392 = vmatpush1.msra.mxu0 0.0
  %3393 = vmatprep.subr.mxu0 0.0
  %3394 = vmatpush1.msra.mxu0 0.0
  %3395 = vmatprep.mubr.f32.mxu0 0.0
  %3396 = vmatmul.mubr.f32.gmra.mrb[0].mxu0 %v3327
  %v3397 = vpop.f32.mrb[0].mxu0
  %v3398 = vadd.f32 0.0, %v3397
  %v3399 = vpop.f32.mrb[0].mxu0
  %3400 = vmatprep.mubr.f32.mxu0 0.0
  %3401 = vmatmul.mubr.f32.gmra.mrb[0].mxu0 %v3329
  %v3402 = vpop.f32.mrb[0].mxu0
  %v3403 = vadd.f32 0.0, %v3402
  %v3404 = vpop.f32.mrb[0].mxu0
  %3405 = vdwg.mxu0
  %v3406 = vxor.u32 %v3398, 2147483648
  %v3407 = vxor.u32 %v3403, 2147483648
  %v3408 = vmul.f32 %v3406, 1.442695
  %v3409 = vpow.pop %v3408
  %v3410 = vmul.f32 %v3407, 1.442695
  %v3411 = vpow.pop %v3410
  %v3412 = vadd.f32 %v3409, 1.0
  %v3413 = vadd.f32 %v3411, 1.0
  %v3414 = vrcp.pop %v3412
  %v3415 = vmul.f32 1.0, %v3414
  %v3416 = vrcp.pop %v3413
  %v3417 = vmul.f32 1.0, %v3416
  %vm3418 = vcmask 7168
  %3419 = vst.msk [vmem:[%s16] sm:$0xff] %vm3418, %v3415
  %3420 = vst.msk [vmem:[%s16 + $0x8] sm:$0xff] %vm3418, %v3417
  // Predicated region
  $region66: #{tpu_custom_call.1} parent=0 // pred_check
    _
  $region67: #{tpu_custom_call.1} parent=0 // pred_check_branch
    %3422 = sbr.rel (0) target = $region69
  $region68: #{tpu_custom_call.1} parent=0 // pred_region
    _
  $region69: #{tpu_custom_call.1} parent=0 // pred_fallthru
    _
  // Predicated region
  $region70: #{tpu_custom_call.1} parent=0 // pred_check
    _
  $region71: #{tpu_custom_call.1} parent=0 // pred_check_branch
    %3424 = sbr.rel (0) target = $region73
  $region72: #{tpu_custom_call.1} parent=0 // pred_region
    _
  $region73: #{tpu_custom_call.1} parent=0 // pred_fallthru
    _

</llo_original>
